<compile_context>
chip_gen: v7x
topology: tpu7x:2x2x1
jax: 0.10.0
libtpu: 0.0.40
codegen_flags: <defaults>
</compile_context>

<pallas_src>
import math
from functools import partial

import jax
import jax.numpy as jnp
from jax.experimental import pallas as pl
from jax.experimental.pallas import tpu as pltpu


# ----------------------------------------------------------------- in-kernel helpers

def _layer_norm(v, g, b, eps=1e-5):
    mu = jnp.mean(v, axis=-1, keepdims=True)
    var = jnp.mean((v - mu) ** 2, axis=-1, keepdims=True)
    return (v - mu) * jax.lax.rsqrt(var + eps) * g + b


def _erf(x):
    # Abramowitz & Stegun 7.1.26 rational approximation (|err| < 1.5e-7), uses only
    # exp/mul/add/abs/where so it lowers cleanly in Mosaic (PyTorch nn.GELU is exact erf).
    a1, a2, a3, a4, a5 = 0.254829592, -0.284496736, 1.421413741, -1.453152027, 1.061405429
    p = 0.3275911
    sign = jnp.where(x < 0.0, -1.0, 1.0)
    ax = jnp.abs(x)
    t = 1.0 / (1.0 + p * ax)
    poly = ((((a5 * t + a4) * t + a3) * t + a2) * t + a1) * t
    return sign * (1.0 - poly * jnp.exp(-ax * ax))


def _gelu_exact(x):
    return 0.5 * x * (1.0 + _erf(x * (1.0 / math.sqrt(2.0))))


# ----------------------------------------------------------------------- fused kernel

def _fused_classify_kernel(nhead, seq_len, seq_pad, block_b,
                           patches_ref, convw_ref, convb_ref, pe_ref,
                           ln1g_ref, ln1b_ref, wqkv_ref, bqkv_ref, wo_ref, bo_ref, a1_ref,
                           ln2g_ref, ln2b_ref, w1_ref, b1_ref, w2_ref, b2_ref, a2_ref,
                           headw_ref, headb_ref,
                           out_ref, x_sc):
    """Grid = (batch_blocks ["parallel"], num_layers ["arbitrary"]).

    Layer step 0 runs tokenizer + PE into the persistent activation scratch, every step
    applies one encoder layer (its weights streamed via per-layer BlockSpecs), the last
    step mean-pools and applies the classification head.
    """
    S, Sp, BB = seq_len, seq_pad, block_b
    D = convw_ref.shape[1]
    hd = D // nhead
    scale = 1.0 / math.sqrt(hd)
    f32, bf16 = jnp.float32, jnp.bfloat16
    li = pl.program_id(1)

    # ---- first layer step: tokenizer Conv1d (im2col matmul) + positional encoding ----
    @pl.when(li == 0)
    def _():
        patches = patches_ref[...].reshape(BB * Sp, patches_ref.shape[2]).astype(bf16)
        tok = jnp.dot(patches, convw_ref[...], preferred_element_type=f32) + convb_ref[...]
        # PE broadcast over the batch block (padded PE rows are zero).
        x_sc[...] = tok.reshape(BB, Sp, D) + pe_ref[...]

    # ------------------- one pre-LN encoder layer (weights of layer li) -------------------
    x = x_sc[...].reshape(BB * Sp, D)                       # f32 activations

    # multi-head self-attention sublayer
    h = _layer_norm(x, ln1g_ref[0], ln1b_ref[0])
    qkv = jnp.dot(h.astype(bf16), wqkv_ref[0], preferred_element_type=f32) + bqkv_ref[0]
    q = (qkv[:, 0:D] * scale).reshape(BB, Sp, D).astype(bf16)   # 1/sqrt(hd) folded into q
    k = qkv[:, D:2 * D].reshape(BB, Sp, D).astype(bf16)
    v = qkv[:, 2 * D:3 * D].reshape(BB, Sp, D).astype(bf16)

    # padded key positions (>= S) must not participate in the softmax
    kmask = jax.lax.broadcasted_iota(jnp.int32, (BB, Sp, Sp), 2) < S

    ctx_heads = []
    for hh in range(nhead):                                  # static unroll over heads only
        c0 = hh * hd
        qh, kh, vh = q[..., c0:c0 + hd], k[..., c0:c0 + hd], v[..., c0:c0 + hd]
        s = jnp.einsum('bqd,bkd->bqk', qh, kh, preferred_element_type=f32)
        s = jnp.where(kmask, s, -1e30)
        s = s - jnp.max(s, axis=-1, keepdims=True)
        p = jnp.exp(s)
        p = p * pl.reciprocal(jnp.sum(p, axis=-1, keepdims=True), approx=True)
        ctx_heads.append(jnp.einsum('bqk,bkd->bqd', p.astype(bf16), vh,
                                    preferred_element_type=f32))
    # lane-dense context (no hd-wide masked stripe stores), one out-proj matmul
    ctx = jnp.concatenate(ctx_heads, axis=-1).reshape(BB * Sp, D)

    attn = jnp.dot(ctx.astype(bf16), wo_ref[0], preferred_element_type=f32) + bo_ref[0]
    x = x + a1_ref[0] * attn                                 # learnable res-param scalar

    # position-wise feed-forward sublayer
    h2 = _layer_norm(x, ln2g_ref[0], ln2b_ref[0])
    f = jnp.dot(h2.astype(bf16), w1_ref[0], preferred_element_type=f32) + b1_ref[0]
    f = _gelu_exact(f)
    f = jnp.dot(f.astype(bf16), w2_ref[0], preferred_element_type=f32) + b2_ref[0]
    x = x + a2_ref[0] * f

    x_sc[...] = x.reshape(BB, Sp, D)

    # ---- last layer step: masked mean-pool over valid positions + classification head ----
    @pl.when(li == pl.num_programs(1) - 1)
    def _():
        xf = x.reshape(BB, Sp, D)
        rmask = (jax.lax.broadcasted_iota(jnp.int32, (BB, Sp, 1), 1) < S).astype(f32)
        pooled = jnp.sum(xf * rmask, axis=1) * (1.0 / S)                       # (BB, D)
        logits = jnp.dot(pooled.astype(bf16), headw_ref[...],
                         preferred_element_type=f32) + headb_ref[...]          # (BB, C)
        out_ref[...] = logits.reshape(1, BB, logits.shape[-1]).astype(out_ref.dtype)


# ----------------------------------------------------------------------------- wrapper

def timemae_classification_forward(params, x, kernel_size, stride, nhead, *, block_b=None):
    """Forward of TimeMAEClassificationForFinetune (finetune_mode='fine_all', inference)."""
    B, L, F = x.shape
    assert F == 1, "TimeMAE FeatureExtractor tokenizes a univariate series (num_features=1)"
    K = kernel_size
    S = (L - K) // stride + 1
    Sp = ((S + 7) // 8) * 8                                  # pad seq to a sublane multiple
    D = params['conv_w'].shape[1]
    NL = params['wqkv'].shape[0]
    FF = params['w1'].shape[2]
    C = params['head_w'].shape[1]
    if block_b is None:
        block_b = min(B, 8)
    assert B % block_b == 0, "batch must divide into batch blocks"
    nb = B // block_b
    f32, bf16 = jnp.float32, jnp.bfloat16

    # ---- plain-JAX glue: im2col patch gather (seq padded), PE padding, bf16 weight casts ----
    idx = jnp.arange(S)[:, None] * stride + jnp.arange(K)[None, :]          # (S, K)
    patches = x[:, :, 0][:, idx]                                            # (B, S, K)
    patches = jnp.pad(patches, ((0, 0), (0, Sp - S), (0, 0)))               # (B, Sp, K)
    pe = jnp.pad(params['pe'], ((0, Sp - S), (0, 0)))                       # (Sp, D)

    conv_w = params['conv_w'].astype(bf16)
    wqkv, wo = params['wqkv'].astype(bf16), params['wo'].astype(bf16)
    w1, w2 = params['w1'].astype(bf16), params['w2'].astype(bf16)
    head_w = params['head_w'].astype(bf16)

    def const_spec(shape):
        return pl.BlockSpec(shape, lambda bi, li, _nd=len(shape): (0,) * _nd)

    def per_layer(shape):                                    # streams one layer's weights
        return pl.BlockSpec((1,) + shape, lambda bi, li: (li, 0, 0))

    # advisory cost estimate for XLA scheduling around the fused kernel
    flops = int(2 * B * S * K * D
                + NL * B * S * (6 * D * D + 2 * D * D + 4 * D * FF)
                + NL * B * 4 * S * S * D
                + 2 * B * D * C)
    transc = int(NL * B * (nhead * S * S + S * FF))
    weight_bytes = int(NL * 2 * (3 * D * D + D * D + 2 * D * FF)
                       + NL * 4 * (3 * D + 6 * D + FF + 2)
                       + K * D * 2 + D * 4 + D * C * 2 + C * 4)
    bytes_acc = int(patches.size * 4 + pe.size * 4 + weight_bytes + B * C * 4)

    # resident-VMEM estimate: ~2 layers of weights double-buffered + activations, with headroom
    layer_w_bytes = 2 * (3 * D * D + D * D + 2 * D * FF) + 4 * (3 * D + 6 * D + FF + 2)
    act_bytes = 4 * block_b * Sp * (K + 10 * D + 2 * FF)
    vmem_limit = int(min(64 << 20, max(16 << 20, 2 * (2 * layer_w_bytes + act_bytes) + (4 << 20))))

    out = pl.pallas_call(
        partial(_fused_classify_kernel, nhead, S, Sp, block_b),
        out_shape=jax.ShapeDtypeStruct((nb, block_b, C), f32),
        grid=(nb, NL),                                       # (batch blocks, encoder layers)
        in_specs=[
            pl.BlockSpec((block_b, Sp, K), lambda bi, li: (bi, 0, 0)),   # im2col patches
            const_spec((K, D)), const_spec((1, D)),                      # conv w / b
            const_spec((Sp, D)),                                         # positional encoding
            per_layer((1, D)), per_layer((1, D)),                        # ln1 gamma / beta
            per_layer((D, 3 * D)), per_layer((1, 3 * D)),                # packed Wqkv / bqkv
            per_layer((D, D)), per_layer((1, D)), per_layer((1, 1)),     # Wo / bo / res a1
            per_layer((1, D)), per_layer((1, D)),                        # ln2 gamma / beta
            per_layer((D, FF)), per_layer((1, FF)),                      # W1 / b1
            per_layer((FF, D)), per_layer((1, D)), per_layer((1, 1)),    # W2 / b2 / res a2
            const_spec((D, C)), const_spec((1, C)),                      # head W / b
        ],
        out_specs=pl.BlockSpec((1, block_b, C), lambda bi, li: (bi, 0, 0)),
        scratch_shapes=[pltpu.VMEM((block_b, Sp, D), f32)],              # persistent activation
        compiler_params=pltpu.CompilerParams(
            dimension_semantics=("parallel", "arbitrary"),
            vmem_limit_bytes=vmem_limit),
        cost_estimate=pl.CostEstimate(flops=flops, transcendentals=transc,
                                      bytes_accessed=bytes_acc),
    )(patches, conv_w, params['conv_b'], pe,
      params['ln1_g'], params['ln1_b'], wqkv, params['bqkv'], wo, params['bo'], params['a1'],
      params['ln2_g'], params['ln2_b'], w1, params['b1'], w2, params['b2'], params['a2'],
      head_w, params['head_b'])
    return out.reshape(B, C)


# ----------------------------------------------------------------------------- params

def _xavier_normal(key, shape):
    std = math.sqrt(2.0 / (shape[0] + shape[1]))
    return std * jax.random.normal(key, shape, jnp.float32)


def sinusoidal_pe(S, D):
    pos = jnp.arange(S, dtype=jnp.float32)[:, None]
    div = jnp.exp(jnp.arange(0, D, 2, dtype=jnp.float32) * (-math.log(10000.0) / D))
    pe = jnp.zeros((S, D), jnp.float32)
    pe = pe.at[:, 0::2].set(jnp.sin(pos * div))
    pe = pe.at[:, 1::2].set(jnp.cos(pos * div))
    return pe


def init_params(key, *, L, K, stride, D, nhead, ff, nlayers, num_classes):
    S = (L - K) // stride + 1
    keys = jax.random.split(key, 2 + nlayers)
    params = {}
    # Conv1d(1, D, K, stride): PyTorch weight (D, 1, K) -> stored as (K, D) matmul form.
    conv_w = 0.1 * jax.random.normal(keys[0], (D, 1, K), jnp.float32)
    params['conv_w'] = jnp.transpose(conv_w[:, 0, :], (1, 0))
    params['conv_b'] = jnp.full((1, D), 0.1, jnp.float32)
    params['pe'] = sinusoidal_pe(S, D)

    ln1_g, ln1_b, wqkv, bqkv, wo, bo, a1 = [], [], [], [], [], [], []
    ln2_g, ln2_b, w1, b1, w2, b2, a2 = [], [], [], [], [], [], []
    for li in range(nlayers):
        lk = jax.random.split(keys[1 + li], 6)
        ln1_g.append(jnp.ones((1, D), jnp.float32))
        ln1_b.append(jnp.zeros((1, D), jnp.float32))
        wqkv.append(jnp.concatenate([_xavier_normal(lk[0], (D, D)),
                                     _xavier_normal(lk[1], (D, D)),
                                     _xavier_normal(lk[2], (D, D))], axis=1))
        bqkv.append(jnp.full((1, 3 * D), 0.1, jnp.float32))
        wo.append(_xavier_normal(lk[3], (D, D)))
        bo.append(jnp.full((1, D), 0.1, jnp.float32))
        a1.append(jnp.ones((1, 1), jnp.float32))
        ln2_g.append(jnp.ones((1, D), jnp.float32))
        ln2_b.append(jnp.zeros((1, D), jnp.float32))
        w1.append(_xavier_normal(lk[4], (D, ff)))
        b1.append(jnp.full((1, ff), 0.1, jnp.float32))
        w2.append(_xavier_normal(lk[5], (ff, D)))
        b2.append(jnp.full((1, D), 0.1, jnp.float32))
        a2.append(jnp.ones((1, 1), jnp.float32))

    params['ln1_g'] = jnp.stack(ln1_g); params['ln1_b'] = jnp.stack(ln1_b)
    params['wqkv'] = jnp.stack(wqkv);   params['bqkv'] = jnp.stack(bqkv)
    params['wo'] = jnp.stack(wo);       params['bo'] = jnp.stack(bo)
    params['a1'] = jnp.stack(a1)
    params['ln2_g'] = jnp.stack(ln2_g); params['ln2_b'] = jnp.stack(ln2_b)
    params['w1'] = jnp.stack(w1);       params['b1'] = jnp.stack(b1)
    params['w2'] = jnp.stack(w2);       params['b2'] = jnp.stack(b2)
    params['a2'] = jnp.stack(a2)

    params['head_w'] = _xavier_normal(keys[1 + nlayers], (D, num_classes))
    params['head_b'] = jnp.full((1, num_classes), 0.1, jnp.float32)
    return params


# ----------------------------------------------------------------------------- main

if __name__ == "__main__":
    # Small shapes consistent with the module's classification forward.
    B, L, F = 4, 16, 1              # batch, origin_seq_len, num_features (tokenizer univariate)
    K, STRIDE = 4, 2                # kernel_size, stride -> seq_len = (16-4)/2 + 1 = 7 (pad->8)
    D, NHEAD, FFD = 32, 4, 64       # d_model, nhead, dim_feedforward
    NLAYERS, NUM_CLASSES = 2, 8     # num_layers, num_classes

    key = jax.random.PRNGKey(0)
    kx, kp = jax.random.split(key)
    x = jax.random.normal(kx, (B, L, F), jnp.float32)
    params = init_params(kp, L=L, K=K, stride=STRIDE, D=D, nhead=NHEAD,
                         ff=FFD, nlayers=NLAYERS, num_classes=NUM_CLASSES)

    # block_b=2 -> grid (2 batch blocks ["parallel"], 2 layers ["arbitrary"])
    y = timemae_classification_forward(params, x, K, STRIDE, NHEAD, block_b=2)
    y = jax.block_until_ready(y)
    assert y.shape == (B, NUM_CLASSES), y.shape
    assert bool(jnp.all(jnp.isfinite(y)))
    print("KERNEL_OK")
</pallas_src>

<mosaic_0001>
module attributes {stable_mosaic.version = 11 : i64} {
  func.func @_fused_classify_kernel(%arg0: i32, %arg1: i32, %arg2: memref<2x8x4xf32, #tpu.memory_space<vmem>>, %arg3: memref<4x32xbf16, #tpu.memory_space<vmem>>, %arg4: memref<1x32xf32, #tpu.memory_space<vmem>>, %arg5: memref<8x32xf32, #tpu.memory_space<vmem>>, %arg6: memref<1x1x32xf32, #tpu.memory_space<vmem>>, %arg7: memref<1x1x32xf32, #tpu.memory_space<vmem>>, %arg8: memref<1x32x96xbf16, #tpu.memory_space<vmem>>, %arg9: memref<1x1x96xf32, #tpu.memory_space<vmem>>, %arg10: memref<1x32x32xbf16, #tpu.memory_space<vmem>>, %arg11: memref<1x1x32xf32, #tpu.memory_space<vmem>>, %arg12: memref<1x1x1xf32, #tpu.memory_space<vmem>>, %arg13: memref<1x1x32xf32, #tpu.memory_space<vmem>>, %arg14: memref<1x1x32xf32, #tpu.memory_space<vmem>>, %arg15: memref<1x32x64xbf16, #tpu.memory_space<vmem>>, %arg16: memref<1x1x64xf32, #tpu.memory_space<vmem>>, %arg17: memref<1x64x32xbf16, #tpu.memory_space<vmem>>, %arg18: memref<1x1x32xf32, #tpu.memory_space<vmem>>, %arg19: memref<1x1x1xf32, #tpu.memory_space<vmem>>, %arg20: memref<32x8xbf16, #tpu.memory_space<vmem>>, %arg21: memref<1x8xf32, #tpu.memory_space<vmem>>, %arg22: memref<1x2x8xf32, #tpu.memory_space<vmem>>, %arg23: memref<2x8x32xf32, #tpu.memory_space<vmem>>) attributes {dimension_semantics = [#tpu.dimension_semantics<parallel>, #tpu.dimension_semantics<arbitrary>], iteration_bounds = array<i64: 2, 2>, scalar_prefetch = 0 : i64, scratch_operands = 1 : i64, tpu.core_type = #tpu.core_type<tc>, window_params = [{transform_indices = @transform_0, window_bounds = array<i64: 2, 8, 4>}, {pipeline_mode = #tpu.pipeline_mode<synchronous>, transform_indices = @transform_1, window_bounds = array<i64: 4, 32>}, {pipeline_mode = #tpu.pipeline_mode<synchronous>, transform_indices = @transform_2, window_bounds = array<i64: 1, 32>}, {pipeline_mode = #tpu.pipeline_mode<synchronous>, transform_indices = @transform_3, window_bounds = array<i64: 8, 32>}, {transform_indices = @transform_4, window_bounds = array<i64: 1, 1, 32>}, {transform_indices = @transform_5, window_bounds = array<i64: 1, 1, 32>}, {transform_indices = @transform_6, window_bounds = array<i64: 1, 32, 96>}, {transform_indices = @transform_7, window_bounds = array<i64: 1, 1, 96>}, {transform_indices = @transform_8, window_bounds = array<i64: 1, 32, 32>}, {transform_indices = @transform_9, window_bounds = array<i64: 1, 1, 32>}, {transform_indices = @transform_10, window_bounds = array<i64: 1, 1, 1>}, {transform_indices = @transform_11, window_bounds = array<i64: 1, 1, 32>}, {transform_indices = @transform_12, window_bounds = array<i64: 1, 1, 32>}, {transform_indices = @transform_13, window_bounds = array<i64: 1, 32, 64>}, {transform_indices = @transform_14, window_bounds = array<i64: 1, 1, 64>}, {transform_indices = @transform_15, window_bounds = array<i64: 1, 64, 32>}, {transform_indices = @transform_16, window_bounds = array<i64: 1, 1, 32>}, {transform_indices = @transform_17, window_bounds = array<i64: 1, 1, 1>}, {pipeline_mode = #tpu.pipeline_mode<synchronous>, transform_indices = @transform_18, window_bounds = array<i64: 32, 8>}, {pipeline_mode = #tpu.pipeline_mode<synchronous>, transform_indices = @transform_19, window_bounds = array<i64: 1, 8>}, {transform_indices = @transform_20, window_bounds = array<i64: 1, 2, 8>}]} {
    %c0_i32 = arith.constant 0 : i32
    %0 = arith.cmpi eq, %arg1, %c0_i32 : i32
    %1 = arith.extui %0 : i1 to i32
    %c0_i32_0 = arith.constant 0 : i32
    %2 = arith.cmpi ne, %1, %c0_i32_0 : i32
    scf.if %2 {
      %c0_99 = arith.constant 0 : index
      %c0_100 = arith.constant 0 : index
      %c0_101 = arith.constant 0 : index
      %233 = vector.load %arg2[%c0_99, %c0_100, %c0_101] : memref<2x8x4xf32, #tpu.memory_space<vmem>>, vector<2x8x4xf32>
      %234 = vector.shape_cast %233 : vector<2x8x4xf32> to vector<16x4xf32>
      %235 = arith.truncf %234 : vector<16x4xf32> to vector<16x4xbf16>
      %c0_102 = arith.constant 0 : index
      %c0_103 = arith.constant 0 : index
      %236 = vector.load %arg3[%c0_102, %c0_103] : memref<4x32xbf16, #tpu.memory_space<vmem>>, vector<4x32xbf16>
      %cst_104 = arith.constant dense<0.000000e+00> : vector<16x32xf32>
      %237 = tpu.matmul %235, %236, %cst_104 {dimension_numbers = #tpu.dot_dimension_numbers<[1], [0], [0], [1], [0, 0, 1, 1], [], []>} : vector<16x4xbf16>, vector<4x32xbf16>, vector<16x32xf32> -> vector<16x32xf32>
      %c0_105 = arith.constant 0 : index
      %c0_106 = arith.constant 0 : index
      %238 = vector.load %arg4[%c0_105, %c0_106] : memref<1x32xf32, #tpu.memory_space<vmem>>, vector<1x32xf32>
      %239 = vector.broadcast %238 : vector<1x32xf32> to vector<16x32xf32>
      %240 = arith.addf %237, %239 : vector<16x32xf32>
      %241 = vector.shape_cast %240 : vector<16x32xf32> to vector<2x8x32xf32>
      %c0_107 = arith.constant 0 : index
      %c0_108 = arith.constant 0 : index
      %242 = vector.load %arg5[%c0_107, %c0_108] : memref<8x32xf32, #tpu.memory_space<vmem>>, vector<8x32xf32>
      %243 = vector.shape_cast %242 : vector<8x32xf32> to vector<1x8x32xf32>
      %244 = vector.broadcast %243 : vector<1x8x32xf32> to vector<2x8x32xf32>
      %245 = arith.addf %241, %244 : vector<2x8x32xf32>
      %c0_109 = arith.constant 0 : index
      %c0_110 = arith.constant 0 : index
      %c0_111 = arith.constant 0 : index
      %246 = vector.load %arg23[%c0_109, %c0_110, %c0_111] : memref<2x8x32xf32, #tpu.memory_space<vmem>>, vector<2x8x32xf32>
      tpu.vector_store %arg23[%c0_109, %c0_110, %c0_111], %245 {strides = array<i32>} : memref<2x8x32xf32, #tpu.memory_space<vmem>>, vector<2x8x32xf32>,
    } else {
    }
    %c0 = arith.constant 0 : index
    %c0_1 = arith.constant 0 : index
    %c0_2 = arith.constant 0 : index
    %3 = vector.load %arg23[%c0, %c0_1, %c0_2] : memref<2x8x32xf32, #tpu.memory_space<vmem>>, vector<2x8x32xf32>
    %4 = vector.shape_cast %3 : vector<2x8x32xf32> to vector<16x32xf32>
    %c0_3 = arith.constant 0 : index
    %c0_4 = arith.constant 0 : index
    %c0_5 = arith.constant 0 : index
    %5 = vector.load %arg6[%c0_3, %c0_4, %c0_5] : memref<1x1x32xf32, #tpu.memory_space<vmem>>, vector<1x1x32xf32>
    %6 = vector.shape_cast %5 : vector<1x1x32xf32> to vector<1x32xf32>
    %c0_6 = arith.constant 0 : index
    %c0_7 = arith.constant 0 : index
    %c0_8 = arith.constant 0 : index
    %7 = vector.load %arg7[%c0_6, %c0_7, %c0_8] : memref<1x1x32xf32, #tpu.memory_space<vmem>>, vector<1x1x32xf32>
    %8 = vector.shape_cast %7 : vector<1x1x32xf32> to vector<1x32xf32>
    %cst = arith.constant dense<0.000000e+00> : vector<16xf32>
    %9 = vector.multi_reduction <add>, %4, %cst [1] : vector<16x32xf32> to vector<16xf32>
    %10 = vector.shape_cast %9 : vector<16xf32> to vector<16x1xf32>
    %cst_9 = arith.constant 3.200000e+01 : f32
    %11 = vector.broadcast %cst_9 : f32 to vector<16x1xf32>
    %12 = arith.divf %10, %11 : vector<16x1xf32>
    %13 = vector.broadcast %12 : vector<16x1xf32> to vector<16x32xf32>
    %14 = arith.subf %4, %13 : vector<16x32xf32>
    %15 = arith.mulf %14, %14 : vector<16x32xf32>
    %cst_10 = arith.constant dense<0.000000e+00> : vector<16xf32>
    %16 = vector.multi_reduction <add>, %15, %cst_10 [1] : vector<16x32xf32> to vector<16xf32>
    %17 = vector.shape_cast %16 : vector<16xf32> to vector<16x1xf32>
    %cst_11 = arith.constant 3.200000e+01 : f32
    %18 = vector.broadcast %cst_11 : f32 to vector<16x1xf32>
    %19 = arith.divf %17, %18 : vector<16x1xf32>
    %20 = vector.broadcast %12 : vector<16x1xf32> to vector<16x32xf32>
    %21 = arith.subf %4, %20 : vector<16x32xf32>
    %cst_12 = arith.constant 9.99999974E-6 : f32
    %22 = vector.broadcast %cst_12 : f32 to vector<16x1xf32>
    %23 = arith.addf %19, %22 : vector<16x1xf32>
    %24 = math.rsqrt %23 : vector<16x1xf32>
    %25 = vector.broadcast %24 : vector<16x1xf32> to vector<16x32xf32>
    %26 = arith.mulf %21, %25 : vector<16x32xf32>
    %27 = vector.broadcast %6 : vector<1x32xf32> to vector<16x32xf32>
    %28 = arith.mulf %26, %27 : vector<16x32xf32>
    %29 = vector.broadcast %8 : vector<1x32xf32> to vector<16x32xf32>
    %30 = arith.addf %28, %29 : vector<16x32xf32>
    %31 = arith.truncf %30 : vector<16x32xf32> to vector<16x32xbf16>
    %c0_13 = arith.constant 0 : index
    %c0_14 = arith.constant 0 : index
    %c0_15 = arith.constant 0 : index
    %32 = vector.load %arg8[%c0_13, %c0_14, %c0_15] : memref<1x32x96xbf16, #tpu.memory_space<vmem>>, vector<1x32x96xbf16>
    %33 = vector.shape_cast %32 : vector<1x32x96xbf16> to vector<32x96xbf16>
    %cst_16 = arith.constant dense<0.000000e+00> : vector<16x96xf32>
    %34 = tpu.matmul %31, %33, %cst_16 {dimension_numbers = #tpu.dot_dimension_numbers<[1], [0], [0], [1], [0, 0, 1, 1], [], []>} : vector<16x32xbf16>, vector<32x96xbf16>, vector<16x96xf32> -> vector<16x96xf32>
    %c0_17 = arith.constant 0 : index
    %c0_18 = arith.constant 0 : index
    %c0_19 = arith.constant 0 : index
    %35 = vector.load %arg9[%c0_17, %c0_18, %c0_19] : memref<1x1x96xf32, #tpu.memory_space<vmem>>, vector<1x1x96xf32>
    %36 = vector.shape_cast %35 : vector<1x1x96xf32> to vector<1x96xf32>
    %37 = vector.broadcast %36 : vector<1x96xf32> to vector<16x96xf32>
    %38 = arith.addf %34, %37 : vector<16x96xf32>
    %39 = vector.extract_strided_slice %38 {offsets = [0, 0], sizes = [16, 32], strides = [1, 1]} : vector<16x96xf32> to vector<16x32xf32>
    %cst_20 = arith.constant 0.353553385 : f32
    %40 = vector.broadcast %cst_20 : f32 to vector<16x32xf32>
    %41 = arith.mulf %39, %40 : vector<16x32xf32>
    %42 = vector.shape_cast %41 : vector<16x32xf32> to vector<2x8x32xf32>
    %43 = arith.truncf %42 : vector<2x8x32xf32> to vector<2x8x32xbf16>
    %44 = vector.extract_strided_slice %38 {offsets = [0, 32], sizes = [16, 32], strides = [1, 1]} : vector<16x96xf32> to vector<16x32xf32>
    %45 = vector.shape_cast %44 : vector<16x32xf32> to vector<2x8x32xf32>
    %46 = arith.truncf %45 : vector<2x8x32xf32> to vector<2x8x32xbf16>
    %47 = vector.extract_strided_slice %38 {offsets = [0, 64], sizes = [16, 32], strides = [1, 1]} : vector<16x96xf32> to vector<16x32xf32>
    %48 = vector.shape_cast %47 : vector<16x32xf32> to vector<2x8x32xf32>
    %49 = arith.truncf %48 : vector<2x8x32xf32> to vector<2x8x32xbf16>
    %50 = tpu.iota {dimensions = array<i32: 2>} : vector<2x8x8xi32>
    %c7_i32 = arith.constant 7 : i32
    %51 = vector.broadcast %c7_i32 : i32 to vector<2x8x8xi32>
    %52 = arith.cmpi slt, %50, %51 : vector<2x8x8xi32>
    %53 = vector.extract_strided_slice %43 {offsets = [0, 0, 0], sizes = [2, 8, 8], strides = [1, 1, 1]} : vector<2x8x32xbf16> to vector<2x8x8xbf16>
    %54 = vector.extract_strided_slice %46 {offsets = [0, 0, 0], sizes = [2, 8, 8], strides = [1, 1, 1]} : vector<2x8x32xbf16> to vector<2x8x8xbf16>
    %55 = vector.extract_strided_slice %49 {offsets = [0, 0, 0], sizes = [2, 8, 8], strides = [1, 1, 1]} : vector<2x8x32xbf16> to vector<2x8x8xbf16>
    "tpu.trace_start"() <{level = 10 : i32, message = "bqd,bkd->bqk"}> : () -> ()
    %cst_21 = arith.constant dense<0.000000e+00> : vector<2x8x8xf32>
    %56 = tpu.matmul %53, %54, %cst_21 {dimension_numbers = #tpu.dot_dimension_numbers<[2], [2], [1], [1], [0, 0, 0, 1, 1, 1], [0], [0]>} : vector<2x8x8xbf16>, vector<2x8x8xbf16>, vector<2x8x8xf32> -> vector<2x8x8xf32>
    %cst_22 = arith.constant -1.000000e+30 : f32
    "tpu.trace_stop"() : () -> ()
    %57 = vector.broadcast %cst_22 : f32 to vector<2x8x8xf32>
    %58 = arith.select %52, %56, %57 : vector<2x8x8xi1>, vector<2x8x8xf32>
    %cst_23 = arith.constant dense<0xFF800000> : vector<2x8xf32>
    %59 = vector.multi_reduction <maximumf>, %58, %cst_23 [2] : vector<2x8x8xf32> to vector<2x8xf32>
    %60 = vector.shape_cast %59 : vector<2x8xf32> to vector<2x8x1xf32>
    %61 = vector.broadcast %60 : vector<2x8x1xf32> to vector<2x8x8xf32>
    %62 = arith.subf %58, %61 : vector<2x8x8xf32>
    %63 = math.exp %62 : vector<2x8x8xf32>
    %cst_24 = arith.constant dense<0.000000e+00> : vector<2x8xf32>
    %64 = vector.multi_reduction <add>, %63, %cst_24 [2] : vector<2x8x8xf32> to vector<2x8xf32>
    %65 = vector.shape_cast %64 : vector<2x8xf32> to vector<2x8x1xf32>
    %66 = tpu.reciprocal %65 {approx = true} : vector<2x8x1xf32> -> vector<2x8x1xf32>
    %67 = vector.broadcast %66 : vector<2x8x1xf32> to vector<2x8x8xf32>
    %68 = arith.mulf %63, %67 : vector<2x8x8xf32>
    %69 = arith.truncf %68 : vector<2x8x8xf32> to vector<2x8x8xbf16>
    "tpu.trace_start"() <{level = 10 : i32, message = "bqk,bkd->bqd"}> : () -> ()
    %cst_25 = arith.constant dense<0.000000e+00> : vector<2x8x8xf32>
    %70 = tpu.matmul %69, %55, %cst_25 {dimension_numbers = #tpu.dot_dimension_numbers<[2], [1], [1], [2], [0, 0, 0, 1, 1, 2], [0], [0]>} : vector<2x8x8xbf16>, vector<2x8x8xbf16>, vector<2x8x8xf32> -> vector<2x8x8xf32>
    "tpu.trace_stop"() : () -> ()
    %71 = vector.extract_strided_slice %43 {offsets = [0, 0, 8], sizes = [2, 8, 8], strides = [1, 1, 1]} : vector<2x8x32xbf16> to vector<2x8x8xbf16>
    %72 = vector.extract_strided_slice %46 {offsets = [0, 0, 8], sizes = [2, 8, 8], strides = [1, 1, 1]} : vector<2x8x32xbf16> to vector<2x8x8xbf16>
    %73 = vector.extract_strided_slice %49 {offsets = [0, 0, 8], sizes = [2, 8, 8], strides = [1, 1, 1]} : vector<2x8x32xbf16> to vector<2x8x8xbf16>
    "tpu.trace_start"() <{level = 10 : i32, message = "bqd,bkd->bqk"}> : () -> ()
    %cst_26 = arith.constant dense<0.000000e+00> : vector<2x8x8xf32>
    %74 = tpu.matmul %71, %72, %cst_26 {dimension_numbers = #tpu.dot_dimension_numbers<[2], [2], [1], [1], [0, 0, 0, 1, 1, 1], [0], [0]>} : vector<2x8x8xbf16>, vector<2x8x8xbf16>, vector<2x8x8xf32> -> vector<2x8x8xf32>
    %cst_27 = arith.constant -1.000000e+30 : f32
    "tpu.trace_stop"() : () -> ()
    %75 = vector.broadcast %cst_27 : f32 to vector<2x8x8xf32>
    %76 = arith.select %52, %74, %75 : vector<2x8x8xi1>, vector<2x8x8xf32>
    %cst_28 = arith.constant dense<0xFF800000> : vector<2x8xf32>
    %77 = vector.multi_reduction <maximumf>, %76, %cst_28 [2] : vector<2x8x8xf32> to vector<2x8xf32>
    %78 = vector.shape_cast %77 : vector<2x8xf32> to vector<2x8x1xf32>
    %79 = vector.broadcast %78 : vector<2x8x1xf32> to vector<2x8x8xf32>
    %80 = arith.subf %76, %79 : vector<2x8x8xf32>
    %81 = math.exp %80 : vector<2x8x8xf32>
    %cst_29 = arith.constant dense<0.000000e+00> : vector<2x8xf32>
    %82 = vector.multi_reduction <add>, %81, %cst_29 [2] : vector<2x8x8xf32> to vector<2x8xf32>
    %83 = vector.shape_cast %82 : vector<2x8xf32> to vector<2x8x1xf32>
    %84 = tpu.reciprocal %83 {approx = true} : vector<2x8x1xf32> -> vector<2x8x1xf32>
    %85 = vector.broadcast %84 : vector<2x8x1xf32> to vector<2x8x8xf32>
    %86 = arith.mulf %81, %85 : vector<2x8x8xf32>
    %87 = arith.truncf %86 : vector<2x8x8xf32> to vector<2x8x8xbf16>
    "tpu.trace_start"() <{level = 10 : i32, message = "bqk,bkd->bqd"}> : () -> ()
    %cst_30 = arith.constant dense<0.000000e+00> : vector<2x8x8xf32>
    %88 = tpu.matmul %87, %73, %cst_30 {dimension_numbers = #tpu.dot_dimension_numbers<[2], [1], [1], [2], [0, 0, 0, 1, 1, 2], [0], [0]>} : vector<2x8x8xbf16>, vector<2x8x8xbf16>, vector<2x8x8xf32> -> vector<2x8x8xf32>
    "tpu.trace_stop"() : () -> ()
    %89 = vector.extract_strided_slice %43 {offsets = [0, 0, 16], sizes = [2, 8, 8], strides = [1, 1, 1]} : vector<2x8x32xbf16> to vector<2x8x8xbf16>
    %90 = vector.extract_strided_slice %46 {offsets = [0, 0, 16], sizes = [2, 8, 8], strides = [1, 1, 1]} : vector<2x8x32xbf16> to vector<2x8x8xbf16>
    %91 = vector.extract_strided_slice %49 {offsets = [0, 0, 16], sizes = [2, 8, 8], strides = [1, 1, 1]} : vector<2x8x32xbf16> to vector<2x8x8xbf16>
    "tpu.trace_start"() <{level = 10 : i32, message = "bqd,bkd->bqk"}> : () -> ()
    %cst_31 = arith.constant dense<0.000000e+00> : vector<2x8x8xf32>
    %92 = tpu.matmul %89, %90, %cst_31 {dimension_numbers = #tpu.dot_dimension_numbers<[2], [2], [1], [1], [0, 0, 0, 1, 1, 1], [0], [0]>} : vector<2x8x8xbf16>, vector<2x8x8xbf16>, vector<2x8x8xf32> -> vector<2x8x8xf32>
    %cst_32 = arith.constant -1.000000e+30 : f32
    "tpu.trace_stop"() : () -> ()
    %93 = vector.broadcast %cst_32 : f32 to vector<2x8x8xf32>
    %94 = arith.select %52, %92, %93 : vector<2x8x8xi1>, vector<2x8x8xf32>
    %cst_33 = arith.constant dense<0xFF800000> : vector<2x8xf32>
    %95 = vector.multi_reduction <maximumf>, %94, %cst_33 [2] : vector<2x8x8xf32> to vector<2x8xf32>
    %96 = vector.shape_cast %95 : vector<2x8xf32> to vector<2x8x1xf32>
    %97 = vector.broadcast %96 : vector<2x8x1xf32> to vector<2x8x8xf32>
    %98 = arith.subf %94, %97 : vector<2x8x8xf32>
    %99 = math.exp %98 : vector<2x8x8xf32>
    %cst_34 = arith.constant dense<0.000000e+00> : vector<2x8xf32>
    %100 = vector.multi_reduction <add>, %99, %cst_34 [2] : vector<2x8x8xf32> to vector<2x8xf32>
    %101 = vector.shape_cast %100 : vector<2x8xf32> to vector<2x8x1xf32>
    %102 = tpu.reciprocal %101 {approx = true} : vector<2x8x1xf32> -> vector<2x8x1xf32>
    %103 = vector.broadcast %102 : vector<2x8x1xf32> to vector<2x8x8xf32>
    %104 = arith.mulf %99, %103 : vector<2x8x8xf32>
    %105 = arith.truncf %104 : vector<2x8x8xf32> to vector<2x8x8xbf16>
    "tpu.trace_start"() <{level = 10 : i32, message = "bqk,bkd->bqd"}> : () -> ()
    %cst_35 = arith.constant dense<0.000000e+00> : vector<2x8x8xf32>
    %106 = tpu.matmul %105, %91, %cst_35 {dimension_numbers = #tpu.dot_dimension_numbers<[2], [1], [1], [2], [0, 0, 0, 1, 1, 2], [0], [0]>} : vector<2x8x8xbf16>, vector<2x8x8xbf16>, vector<2x8x8xf32> -> vector<2x8x8xf32>
    "tpu.trace_stop"() : () -> ()
    %107 = vector.extract_strided_slice %43 {offsets = [0, 0, 24], sizes = [2, 8, 8], strides = [1, 1, 1]} : vector<2x8x32xbf16> to vector<2x8x8xbf16>
    %108 = vector.extract_strided_slice %46 {offsets = [0, 0, 24], sizes = [2, 8, 8], strides = [1, 1, 1]} : vector<2x8x32xbf16> to vector<2x8x8xbf16>
    %109 = vector.extract_strided_slice %49 {offsets = [0, 0, 24], sizes = [2, 8, 8], strides = [1, 1, 1]} : vector<2x8x32xbf16> to vector<2x8x8xbf16>
    "tpu.trace_start"() <{level = 10 : i32, message = "bqd,bkd->bqk"}> : () -> ()
    %cst_36 = arith.constant dense<0.000000e+00> : vector<2x8x8xf32>
    %110 = tpu.matmul %107, %108, %cst_36 {dimension_numbers = #tpu.dot_dimension_numbers<[2], [2], [1], [1], [0, 0, 0, 1, 1, 1], [0], [0]>} : vector<2x8x8xbf16>, vector<2x8x8xbf16>, vector<2x8x8xf32> -> vector<2x8x8xf32>
    %cst_37 = arith.constant -1.000000e+30 : f32
    "tpu.trace_stop"() : () -> ()
    %111 = vector.broadcast %cst_37 : f32 to vector<2x8x8xf32>
    %112 = arith.select %52, %110, %111 : vector<2x8x8xi1>, vector<2x8x8xf32>
    %cst_38 = arith.constant dense<0xFF800000> : vector<2x8xf32>
    %113 = vector.multi_reduction <maximumf>, %112, %cst_38 [2] : vector<2x8x8xf32> to vector<2x8xf32>
    %114 = vector.shape_cast %113 : vector<2x8xf32> to vector<2x8x1xf32>
    %115 = vector.broadcast %114 : vector<2x8x1xf32> to vector<2x8x8xf32>
    %116 = arith.subf %112, %115 : vector<2x8x8xf32>
    %117 = math.exp %116 : vector<2x8x8xf32>
    %cst_39 = arith.constant dense<0.000000e+00> : vector<2x8xf32>
    %118 = vector.multi_reduction <add>, %117, %cst_39 [2] : vector<2x8x8xf32> to vector<2x8xf32>
    %119 = vector.shape_cast %118 : vector<2x8xf32> to vector<2x8x1xf32>
    %120 = tpu.reciprocal %119 {approx = true} : vector<2x8x1xf32> -> vector<2x8x1xf32>
    %121 = vector.broadcast %120 : vector<2x8x1xf32> to vector<2x8x8xf32>
    %122 = arith.mulf %117, %121 : vector<2x8x8xf32>
    %123 = arith.truncf %122 : vector<2x8x8xf32> to vector<2x8x8xbf16>
    "tpu.trace_start"() <{level = 10 : i32, message = "bqk,bkd->bqd"}> : () -> ()
    %cst_40 = arith.constant dense<0.000000e+00> : vector<2x8x8xf32>
    %124 = tpu.matmul %123, %109, %cst_40 {dimension_numbers = #tpu.dot_dimension_numbers<[2], [1], [1], [2], [0, 0, 0, 1, 1, 2], [0], [0]>} : vector<2x8x8xbf16>, vector<2x8x8xbf16>, vector<2x8x8xf32> -> vector<2x8x8xf32>
    "tpu.trace_stop"() : () -> ()
    %125 = tpu.concatenate %70, %88, %106, %124 in 2 : vector<2x8x8xf32>, vector<2x8x8xf32>, vector<2x8x8xf32>, vector<2x8x8xf32> -> vector<2x8x32xf32>
    %126 = vector.shape_cast %125 : vector<2x8x32xf32> to vector<16x32xf32>
    %127 = arith.truncf %126 : vector<16x32xf32> to vector<16x32xbf16>
    %c0_41 = arith.constant 0 : index
    %c0_42 = arith.constant 0 : index
    %c0_43 = arith.constant 0 : index
    %128 = vector.load %arg10[%c0_41, %c0_42, %c0_43] : memref<1x32x32xbf16, #tpu.memory_space<vmem>>, vector<1x32x32xbf16>
    %129 = vector.shape_cast %128 : vector<1x32x32xbf16> to vector<32x32xbf16>
    %cst_44 = arith.constant dense<0.000000e+00> : vector<16x32xf32>
    %130 = tpu.matmul %127, %129, %cst_44 {dimension_numbers = #tpu.dot_dimension_numbers<[1], [0], [0], [1], [0, 0, 1, 1], [], []>} : vector<16x32xbf16>, vector<32x32xbf16>, vector<16x32xf32> -> vector<16x32xf32>
    %c0_45 = arith.constant 0 : index
    %c0_46 = arith.constant 0 : index
    %c0_47 = arith.constant 0 : index
    %131 = vector.load %arg11[%c0_45, %c0_46, %c0_47] : memref<1x1x32xf32, #tpu.memory_space<vmem>>, vector<1x1x32xf32>
    %132 = vector.shape_cast %131 : vector<1x1x32xf32> to vector<1x32xf32>
    %133 = vector.broadcast %132 : vector<1x32xf32> to vector<16x32xf32>
    %134 = arith.addf %130, %133 : vector<16x32xf32>
    %c0_48 = arith.constant 0 : index
    %c0_49 = arith.constant 0 : index
    %c0_50 = arith.constant 0 : index
    %135 = vector.load %arg12[%c0_48, %c0_49, %c0_50] : memref<1x1x1xf32, #tpu.memory_space<vmem>>, vector<1x1x1xf32>
    %136 = vector.shape_cast %135 : vector<1x1x1xf32> to vector<1x1xf32>
    %137 = vector.broadcast %136 : vector<1x1xf32> to vector<16x32xf32>
    %138 = arith.mulf %137, %134 : vector<16x32xf32>
    %139 = arith.addf %4, %138 : vector<16x32xf32>
    %c0_51 = arith.constant 0 : index
    %c0_52 = arith.constant 0 : index
    %c0_53 = arith.constant 0 : index
    %140 = vector.load %arg13[%c0_51, %c0_52, %c0_53] : memref<1x1x32xf32, #tpu.memory_space<vmem>>, vector<1x1x32xf32>
    %141 = vector.shape_cast %140 : vector<1x1x32xf32> to vector<1x32xf32>
    %c0_54 = arith.constant 0 : index
    %c0_55 = arith.constant 0 : index
    %c0_56 = arith.constant 0 : index
    %142 = vector.load %arg14[%c0_54, %c0_55, %c0_56] : memref<1x1x32xf32, #tpu.memory_space<vmem>>, vector<1x1x32xf32>
    %143 = vector.shape_cast %142 : vector<1x1x32xf32> to vector<1x32xf32>
    %cst_57 = arith.constant dense<0.000000e+00> : vector<16xf32>
    %144 = vector.multi_reduction <add>, %139, %cst_57 [1] : vector<16x32xf32> to vector<16xf32>
    %145 = vector.shape_cast %144 : vector<16xf32> to vector<16x1xf32>
    %cst_58 = arith.constant 3.200000e+01 : f32
    %146 = vector.broadcast %cst_58 : f32 to vector<16x1xf32>
    %147 = arith.divf %145, %146 : vector<16x1xf32>
    %148 = vector.broadcast %147 : vector<16x1xf32> to vector<16x32xf32>
    %149 = arith.subf %139, %148 : vector<16x32xf32>
    %150 = arith.mulf %149, %149 : vector<16x32xf32>
    %cst_59 = arith.constant dense<0.000000e+00> : vector<16xf32>
    %151 = vector.multi_reduction <add>, %150, %cst_59 [1] : vector<16x32xf32> to vector<16xf32>
    %152 = vector.shape_cast %151 : vector<16xf32> to vector<16x1xf32>
    %cst_60 = arith.constant 3.200000e+01 : f32
    %153 = vector.broadcast %cst_60 : f32 to vector<16x1xf32>
    %154 = arith.divf %152, %153 : vector<16x1xf32>
    %155 = vector.broadcast %147 : vector<16x1xf32> to vector<16x32xf32>
    %156 = arith.subf %139, %155 : vector<16x32xf32>
    %cst_61 = arith.constant 9.99999974E-6 : f32
    %157 = vector.broadcast %cst_61 : f32 to vector<16x1xf32>
    %158 = arith.addf %154, %157 : vector<16x1xf32>
    %159 = math.rsqrt %158 : vector<16x1xf32>
    %160 = vector.broadcast %159 : vector<16x1xf32> to vector<16x32xf32>
    %161 = arith.mulf %156, %160 : vector<16x32xf32>
    %162 = vector.broadcast %141 : vector<1x32xf32> to vector<16x32xf32>
    %163 = arith.mulf %161, %162 : vector<16x32xf32>
    %164 = vector.broadcast %143 : vector<1x32xf32> to vector<16x32xf32>
    %165 = arith.addf %163, %164 : vector<16x32xf32>
    %166 = arith.truncf %165 : vector<16x32xf32> to vector<16x32xbf16>
    %c0_62 = arith.constant 0 : index
    %c0_63 = arith.constant 0 : index
    %c0_64 = arith.constant 0 : index
    %167 = vector.load %arg15[%c0_62, %c0_63, %c0_64] : memref<1x32x64xbf16, #tpu.memory_space<vmem>>, vector<1x32x64xbf16>
    %168 = vector.shape_cast %167 : vector<1x32x64xbf16> to vector<32x64xbf16>
    %cst_65 = arith.constant dense<0.000000e+00> : vector<16x64xf32>
    %169 = tpu.matmul %166, %168, %cst_65 {dimension_numbers = #tpu.dot_dimension_numbers<[1], [0], [0], [1], [0, 0, 1, 1], [], []>} : vector<16x32xbf16>, vector<32x64xbf16>, vector<16x64xf32> -> vector<16x64xf32>
    %c0_66 = arith.constant 0 : index
    %c0_67 = arith.constant 0 : index
    %c0_68 = arith.constant 0 : index
    %170 = vector.load %arg16[%c0_66, %c0_67, %c0_68] : memref<1x1x64xf32, #tpu.memory_space<vmem>>, vector<1x1x64xf32>
    %171 = vector.shape_cast %170 : vector<1x1x64xf32> to vector<1x64xf32>
    %172 = vector.broadcast %171 : vector<1x64xf32> to vector<16x64xf32>
    %173 = arith.addf %169, %172 : vector<16x64xf32>
    %cst_69 = arith.constant 5.000000e-01 : f32
    %174 = vector.broadcast %cst_69 : f32 to vector<16x64xf32>
    %175 = arith.mulf %174, %173 : vector<16x64xf32>
    %cst_70 = arith.constant 0.707106769 : f32
    %176 = vector.broadcast %cst_70 : f32 to vector<16x64xf32>
    %177 = arith.mulf %173, %176 : vector<16x64xf32>
    %cst_71 = arith.constant 0.000000e+00 : f32
    %178 = vector.broadcast %cst_71 : f32 to vector<16x64xf32>
    %179 = arith.cmpf olt, %177, %178 : vector<16x64xf32>
    %cst_72 = arith.constant -1.000000e+00 : f32
    %cst_73 = arith.constant 1.000000e+00 : f32
    %180 = vector.broadcast %cst_72 : f32 to vector<16x64xf32>
    %181 = vector.broadcast %cst_73 : f32 to vector<16x64xf32>
    %182 = arith.select %179, %180, %181 : vector<16x64xi1>, vector<16x64xf32>
    %183 = math.absf %177 : vector<16x64xf32>
    %cst_74 = arith.constant 0.327591091 : f32
    %184 = vector.broadcast %cst_74 : f32 to vector<16x64xf32>
    %185 = arith.mulf %184, %183 : vector<16x64xf32>
    %cst_75 = arith.constant 1.000000e+00 : f32
    %186 = vector.broadcast %cst_75 : f32 to vector<16x64xf32>
    %187 = arith.addf %186, %185 : vector<16x64xf32>
    %cst_76 = arith.constant 1.000000e+00 : f32
    %188 = vector.broadcast %cst_76 : f32 to vector<16x64xf32>
    %189 = arith.divf %188, %187 : vector<16x64xf32>
    %cst_77 = arith.constant 1.06140542 : f32
    %190 = vector.broadcast %cst_77 : f32 to vector<16x64xf32>
    %191 = arith.mulf %190, %189 : vector<16x64xf32>
    %cst_78 = arith.constant -1.45315206 : f32
    %192 = vector.broadcast %cst_78 : f32 to vector<16x64xf32>
    %193 = arith.addf %191, %192 : vector<16x64xf32>
    %194 = arith.mulf %193, %189 : vector<16x64xf32>
    %cst_79 = arith.constant 1.42141378 : f32
    %195 = vector.broadcast %cst_79 : f32 to vector<16x64xf32>
    %196 = arith.addf %194, %195 : vector<16x64xf32>
    %197 = arith.mulf %196, %189 : vector<16x64xf32>
    %cst_80 = arith.constant -0.284496725 : f32
    %198 = vector.broadcast %cst_80 : f32 to vector<16x64xf32>
    %199 = arith.addf %197, %198 : vector<16x64xf32>
    %200 = arith.mulf %199, %189 : vector<16x64xf32>
    %cst_81 = arith.constant 0.254829586 : f32
    %201 = vector.broadcast %cst_81 : f32 to vector<16x64xf32>
    %202 = arith.addf %200, %201 : vector<16x64xf32>
    %203 = arith.mulf %202, %189 : vector<16x64xf32>
    %cst_82 = arith.constant 0.000000e+00 : f32
    %204 = vector.broadcast %cst_82 : f32 to vector<16x64xf32>
    %205 = arith.subf %204, %183 : vector<16x64xf32>
    %206 = arith.mulf %205, %183 : vector<16x64xf32>
    %207 = math.exp %206 : vector<16x64xf32>
    %208 = arith.mulf %203, %207 : vector<16x64xf32>
    %cst_83 = arith.constant 1.000000e+00 : f32
    %209 = vector.broadcast %cst_83 : f32 to vector<16x64xf32>
    %210 = arith.subf %209, %208 : vector<16x64xf32>
    %211 = arith.mulf %182, %210 : vector<16x64xf32>
    %cst_84 = arith.constant 1.000000e+00 : f32
    %212 = vector.broadcast %cst_84 : f32 to vector<16x64xf32>
    %213 = arith.addf %212, %211 : vector<16x64xf32>
    %214 = arith.mulf %175, %213 : vector<16x64xf32>
    %215 = arith.truncf %214 : vector<16x64xf32> to vector<16x64xbf16>
    %c0_85 = arith.constant 0 : index
    %c0_86 = arith.constant 0 : index
    %c0_87 = arith.constant 0 : index
    %216 = vector.load %arg17[%c0_85, %c0_86, %c0_87] : memref<1x64x32xbf16, #tpu.memory_space<vmem>>, vector<1x64x32xbf16>
    %217 = vector.shape_cast %216 : vector<1x64x32xbf16> to vector<64x32xbf16>
    %cst_88 = arith.constant dense<0.000000e+00> : vector<16x32xf32>
    %218 = tpu.matmul %215, %217, %cst_88 {dimension_numbers = #tpu.dot_dimension_numbers<[1], [0], [0], [1], [0, 0, 1, 1], [], []>} : vector<16x64xbf16>, vector<64x32xbf16>, vector<16x32xf32> -> vector<16x32xf32>
    %c0_89 = arith.constant 0 : index
    %c0_90 = arith.constant 0 : index
    %c0_91 = arith.constant 0 : index
    %219 = vector.load %arg18[%c0_89, %c0_90, %c0_91] : memref<1x1x32xf32, #tpu.memory_space<vmem>>, vector<1x1x32xf32>
    %220 = vector.shape_cast %219 : vector<1x1x32xf32> to vector<1x32xf32>
    %221 = vector.broadcast %220 : vector<1x32xf32> to vector<16x32xf32>
    %222 = arith.addf %218, %221 : vector<16x32xf32>
    %c0_92 = arith.constant 0 : index
    %c0_93 = arith.constant 0 : index
    %c0_94 = arith.constant 0 : index
    %223 = vector.load %arg19[%c0_92, %c0_93, %c0_94] : memref<1x1x1xf32, #tpu.memory_space<vmem>>, vector<1x1x1xf32>
    %224 = vector.shape_cast %223 : vector<1x1x1xf32> to vector<1x1xf32>
    %225 = vector.broadcast %224 : vector<1x1xf32> to vector<16x32xf32>
    %226 = arith.mulf %225, %222 : vector<16x32xf32>
    %227 = arith.addf %139, %226 : vector<16x32xf32>
    %228 = vector.shape_cast %227 : vector<16x32xf32> to vector<2x8x32xf32>
    %c0_95 = arith.constant 0 : index
    %c0_96 = arith.constant 0 : index
    %c0_97 = arith.constant 0 : index
    %229 = vector.load %arg23[%c0_95, %c0_96, %c0_97] : memref<2x8x32xf32, #tpu.memory_space<vmem>>, vector<2x8x32xf32>
    tpu.vector_store %arg23[%c0_95, %c0_96, %c0_97], %228 {strides = array<i32>} : memref<2x8x32xf32, #tpu.memory_space<vmem>>, vector<2x8x32xf32>,
    %c1_i32 = arith.constant 1 : i32
    %230 = arith.cmpi eq, %arg1, %c1_i32 : i32
    %231 = arith.extui %230 : i1 to i32
    %c0_i32_98 = arith.constant 0 : i32
    %232 = arith.cmpi ne, %231, %c0_i32_98 : i32
    scf.if %232 {
      %233 = vector.shape_cast %227 : vector<16x32xf32> to vector<2x8x32xf32>
      %234 = tpu.iota {dimensions = array<i32: 1>} : vector<2x8x1xi32>
      %c7_i32_99 = arith.constant 7 : i32
      %235 = vector.broadcast %c7_i32_99 : i32 to vector<2x8x1xi32>
      %236 = arith.cmpi slt, %234, %235 : vector<2x8x1xi32>
      %237 = arith.extui %236 : vector<2x8x1xi1> to vector<2x8x1xi32>
      %238 = arith.sitofp %237 : vector<2x8x1xi32> to vector<2x8x1xf32>
      %239 = vector.broadcast %238 : vector<2x8x1xf32> to vector<2x8x32xf32>
      %240 = arith.mulf %233, %239 : vector<2x8x32xf32>
      %cst_100 = arith.constant dense<0.000000e+00> : vector<2x32xf32>
      %241 = vector.multi_reduction <add>, %240, %cst_100 [1] : vector<2x8x32xf32> to vector<2x32xf32>
      %cst_101 = arith.constant 0.142857149 : f32
      %242 = vector.broadcast %cst_101 : f32 to vector<2x32xf32>
      %243 = arith.mulf %241, %242 : vector<2x32xf32>
      %244 = arith.truncf %243 : vector<2x32xf32> to vector<2x32xbf16>
      %c0_102 = arith.constant 0 : index
      %c0_103 = arith.constant 0 : index
      %245 = vector.load %arg20[%c0_102, %c0_103] : memref<32x8xbf16, #tpu.memory_space<vmem>>, vector<32x8xbf16>
      %cst_104 = arith.constant dense<0.000000e+00> : vector<2x8xf32>
      %246 = tpu.matmul %244, %245, %cst_104 {dimension_numbers = #tpu.dot_dimension_numbers<[1], [0], [0], [1], [0, 0, 1, 1], [], []>} : vector<2x32xbf16>, vector<32x8xbf16>, vector<2x8xf32> -> vector<2x8xf32>
      %c0_105 = arith.constant 0 : index
      %c0_106 = arith.constant 0 : index
      %247 = vector.load %arg21[%c0_105, %c0_106] : memref<1x8xf32, #tpu.memory_space<vmem>>, vector<1x8xf32>
      %248 = vector.broadcast %247 : vector<1x8xf32> to vector<2x8xf32>
      %249 = arith.addf %246, %248 : vector<2x8xf32>
      %250 = vector.shape_cast %249 : vector<2x8xf32> to vector<1x2x8xf32>
      %c0_107 = arith.constant 0 : index
      %c0_108 = arith.constant 0 : index
      %c0_109 = arith.constant 0 : index
      %251 = vector.load %arg22[%c0_107, %c0_108, %c0_109] : memref<1x2x8xf32, #tpu.memory_space<vmem>>, vector<1x2x8xf32>
      tpu.vector_store %arg22[%c0_107, %c0_108, %c0_109], %250 {strides = array<i32>} : memref<1x2x8xf32, #tpu.memory_space<vmem>>, vector<1x2x8xf32>,
    } else {
    }
    return
  }
  func.func @transform_0(%arg0: i32, %arg1: i32) -> (i32, i32, i32) {
    %c0_i32 = arith.constant 0 : i32
    %c0_i32_0 = arith.constant 0 : i32
    %c0_i32_1 = arith.constant 0 : i32
    return %arg0, %c0_i32, %c0_i32_0 : i32, i32, i32
  }
  func.func @transform_1(%arg0: i32, %arg1: i32) -> (i32, i32) {
    %c0_i32 = arith.constant 0 : i32
    %c0_i32_0 = arith.constant 0 : i32
    %c0_i32_1 = arith.constant 0 : i32
    return %c0_i32, %c0_i32_0 : i32, i32
  }
  func.func @transform_2(%arg0: i32, %arg1: i32) -> (i32, i32) {
    %c0_i32 = arith.constant 0 : i32
    %c0_i32_0 = arith.constant 0 : i32
    %c0_i32_1 = arith.constant 0 : i32
    return %c0_i32, %c0_i32_0 : i32, i32
  }
  func.func @transform_3(%arg0: i32, %arg1: i32) -> (i32, i32) {
    %c0_i32 = arith.constant 0 : i32
    %c0_i32_0 = arith.constant 0 : i32
    %c0_i32_1 = arith.constant 0 : i32
    return %c0_i32, %c0_i32_0 : i32, i32
  }
  func.func @transform_4(%arg0: i32, %arg1: i32) -> (i32, i32, i32) {
    %c0_i32 = arith.constant 0 : i32
    %c0_i32_0 = arith.constant 0 : i32
    %c0_i32_1 = arith.constant 0 : i32
    return %arg1, %c0_i32, %c0_i32_0 : i32, i32, i32
  }
  func.func @transform_5(%arg0: i32, %arg1: i32) -> (i32, i32, i32) {
    %c0_i32 = arith.constant 0 : i32
    %c0_i32_0 = arith.constant 0 : i32
    %c0_i32_1 = arith.constant 0 : i32
    return %arg1, %c0_i32, %c0_i32_0 : i32, i32, i32
  }
  func.func @transform_6(%arg0: i32, %arg1: i32) -> (i32, i32, i32) {
    %c0_i32 = arith.constant 0 : i32
    %c0_i32_0 = arith.constant 0 : i32
    %c0_i32_1 = arith.constant 0 : i32
    return %arg1, %c0_i32, %c0_i32_0 : i32, i32, i32
  }
  func.func @transform_7(%arg0: i32, %arg1: i32) -> (i32, i32, i32) {
    %c0_i32 = arith.constant 0 : i32
    %c0_i32_0 = arith.constant 0 : i32
    %c0_i32_1 = arith.constant 0 : i32
    return %arg1, %c0_i32, %c0_i32_0 : i32, i32, i32
  }
  func.func @transform_8(%arg0: i32, %arg1: i32) -> (i32, i32, i32) {
    %c0_i32 = arith.constant 0 : i32
    %c0_i32_0 = arith.constant 0 : i32
    %c0_i32_1 = arith.constant 0 : i32
    return %arg1, %c0_i32, %c0_i32_0 : i32, i32, i32
  }
  func.func @transform_9(%arg0: i32, %arg1: i32) -> (i32, i32, i32) {
    %c0_i32 = arith.constant 0 : i32
    %c0_i32_0 = arith.constant 0 : i32
    %c0_i32_1 = arith.constant 0 : i32
    return %arg1, %c0_i32, %c0_i32_0 : i32, i32, i32
  }
  func.func @transform_10(%arg0: i32, %arg1: i32) -> (i32, i32, i32) {
    %c0_i32 = arith.constant 0 : i32
    %c0_i32_0 = arith.constant 0 : i32
    %c0_i32_1 = arith.constant 0 : i32
    return %arg1, %c0_i32, %c0_i32_0 : i32, i32, i32
  }
  func.func @transform_11(%arg0: i32, %arg1: i32) -> (i32, i32, i32) {
    %c0_i32 = arith.constant 0 : i32
    %c0_i32_0 = arith.constant 0 : i32
    %c0_i32_1 = arith.constant 0 : i32
    return %arg1, %c0_i32, %c0_i32_0 : i32, i32, i32
  }
  func.func @transform_12(%arg0: i32, %arg1: i32) -> (i32, i32, i32) {
    %c0_i32 = arith.constant 0 : i32
    %c0_i32_0 = arith.constant 0 : i32
    %c0_i32_1 = arith.constant 0 : i32
    return %arg1, %c0_i32, %c0_i32_0 : i32, i32, i32
  }
  func.func @transform_13(%arg0: i32, %arg1: i32) -> (i32, i32, i32) {
    %c0_i32 = arith.constant 0 : i32
    %c0_i32_0 = arith.constant 0 : i32
    %c0_i32_1 = arith.constant 0 : i32
    return %arg1, %c0_i32, %c0_i32_0 : i32, i32, i32
  }
  func.func @transform_14(%arg0: i32, %arg1: i32) -> (i32, i32, i32) {
    %c0_i32 = arith.constant 0 : i32
    %c0_i32_0 = arith.constant 0 : i32
    %c0_i32_1 = arith.constant 0 : i32
    return %arg1, %c0_i32, %c0_i32_0 : i32, i32, i32
  }
  func.func @transform_15(%arg0: i32, %arg1: i32) -> (i32, i32, i32) {
    %c0_i32 = arith.constant 0 : i32
    %c0_i32_0 = arith.constant 0 : i32
    %c0_i32_1 = arith.constant 0 : i32
    return %arg1, %c0_i32, %c0_i32_0 : i32, i32, i32
  }
  func.func @transform_16(%arg0: i32, %arg1: i32) -> (i32, i32, i32) {
    %c0_i32 = arith.constant 0 : i32
    %c0_i32_0 = arith.constant 0 : i32
    %c0_i32_1 = arith.constant 0 : i32
    return %arg1, %c0_i32, %c0_i32_0 : i32, i32, i32
  }
  func.func @transform_17(%arg0: i32, %arg1: i32) -> (i32, i32, i32) {
    %c0_i32 = arith.constant 0 : i32
    %c0_i32_0 = arith.constant 0 : i32
    %c0_i32_1 = arith.constant 0 : i32
    return %arg1, %c0_i32, %c0_i32_0 : i32, i32, i32
  }
  func.func @transform_18(%arg0: i32, %arg1: i32) -> (i32, i32) {
    %c0_i32 = arith.constant 0 : i32
    %c0_i32_0 = arith.constant 0 : i32
    %c0_i32_1 = arith.constant 0 : i32
    return %c0_i32, %c0_i32_0 : i32, i32
  }
  func.func @transform_19(%arg0: i32, %arg1: i32) -> (i32, i32) {
    %c0_i32 = arith.constant 0 : i32
    %c0_i32_0 = arith.constant 0 : i32
    %c0_i32_1 = arith.constant 0 : i32
    return %c0_i32, %c0_i32_0 : i32, i32
  }
  func.func @transform_20(%arg0: i32, %arg1: i32) -> (i32, i32, i32) {
    %c0_i32 = arith.constant 0 : i32
    %c0_i32_0 = arith.constant 0 : i32
    %c0_i32_1 = arith.constant 0 : i32
    return %arg0, %c0_i32, %c0_i32_0 : i32, i32, i32
  }
}

</mosaic_0001>

<llo_original>
// kernel: tpu_custom_call.1
$region0: #{tpu_custom_call.1}
  #allocation0 [shape = 'u32[]', space=smem, size = 0x4, offset = 0x4, fixed_abs, tag = 'smem constant byte address 0x4 - core index']
  #allocation1 [shape = 'u32[144,128]{1,0:T(1,128)}', space=vmem, size = 0x12000, scoped, tag = 'internal scratch']
  #allocation2 [shape = 'f32[2,8,32]{2,1,0:T(8,128)}', space=vmem, size = 0x2000, scoped, tag = 'scratch operand']
  %s0 = inlined_call_operand.vmem [shape: f32[4,8,4], index: 0, kind: input, shape index: {}]
  %s1 = inlined_call_operand.vmem [shape: bf16[4,32], index: 1, kind: input, shape index: {}]
  %s2 = inlined_call_operand.vmem [shape: f32[1,32], index: 2, kind: input, shape index: {}]
  %s3 = inlined_call_operand.vmem [shape: f32[8,32], index: 3, kind: input, shape index: {}]
  %s4 = inlined_call_operand.vmem [shape: f32[2,1,32], index: 4, kind: input, shape index: {}]
  %s5 = inlined_call_operand.vmem [shape: f32[2,1,32], index: 5, kind: input, shape index: {}]
  %s6 = inlined_call_operand.vmem [shape: bf16[2,32,96], index: 6, kind: input, shape index: {}]
  %s7 = inlined_call_operand.vmem [shape: f32[2,1,96], index: 7, kind: input, shape index: {}]
  %s8 = inlined_call_operand.vmem [shape: bf16[2,32,32], index: 8, kind: input, shape index: {}]
  %s9 = inlined_call_operand.vmem [shape: f32[2,1,32], index: 9, kind: input, shape index: {}]
  %s10 = inlined_call_operand.vmem [shape: f32[2,1,1], index: 10, kind: input, shape index: {}]
  %s11 = inlined_call_operand.vmem [shape: f32[2,1,32], index: 11, kind: input, shape index: {}]
  %s12 = inlined_call_operand.vmem [shape: f32[2,1,32], index: 12, kind: input, shape index: {}]
  %s13 = inlined_call_operand.vmem [shape: bf16[2,32,64], index: 13, kind: input, shape index: {}]
  %s14 = inlined_call_operand.vmem [shape: f32[2,1,64], index: 14, kind: input, shape index: {}]
  %s15 = inlined_call_operand.vmem [shape: bf16[2,64,32], index: 15, kind: input, shape index: {}]
  %s16 = inlined_call_operand.vmem [shape: f32[2,1,32], index: 16, kind: input, shape index: {}]
  %s17 = inlined_call_operand.vmem [shape: f32[2,1,1], index: 17, kind: input, shape index: {}]
  %s18 = inlined_call_operand.vmem [shape: bf16[32,8], index: 18, kind: input, shape index: {}]
  %s19 = inlined_call_operand.vmem [shape: f32[1,8], index: 19, kind: input, shape index: {}]
  %s20 = inlined_call_operand.hbm [shape: f32[2,2,8], index: 20, kind: output, shape index: {}]
  %s21 = sld [smem:[#allocation0]]
  $region121: #{tpu_custom_call.1} parent=0
    _
  %s23 = ssub.s32 1, %s21
  %s24 = scalar_select 0, %s23, %s21
  $region1: #{tpu_custom_call.1} parent=0
    #allocation3 [shape = 'u8[2048]{0}', space=vmem, size = 0x800, scoped, tag = 'output window, operand 0']
    #allocation4 [shape = 's32[2]{0}', space=sflag, size = 0x8, scoped, tag = 'scoped memory for tpu_custom_call.1']
    %25 = vsyncpa [#allocation4], 0
    %s26 = scalar_lea.sflag [#allocation4], 1
    %27 = vsyncpa %s26, 0
    loop: start=0, step=1, limit=6
    $region2: #{tpu_custom_call.1} parent=1 // loop_pre_header
      _
    $region3: #{tpu_custom_call.1} parent=1 // loop_header
      %s29 = sphi 0, %s33
      %p30 = scmp.ge.s32.totalorder %s29, 6
      %s36 = sphi 0, %s48
      %s37 = sphi 0, %s44
      %s38 = sphi 0, %s36
      %s39 = sphi 0, %s37
      %s40 = sphi 0, %s38
      %s41 = sphi 0, %s39
      %s51 = sphi 0, %s53
      %s54 = sphi 0, %s51
      %s55 = sphi 0, %s54
      %s71 = sphi 0, %s55
      %s75 = sphi 0, %s75
      %s77 = sphi 0, %s75
      %s78 = sphi 0, %s77
      %s92 = sphi 0, %s78
      %s96 = sphi 0, %s96
      %s98 = sphi 0, %s96
      %s99 = sphi 0, %s98
      %s113 = sphi 0, %s99
      %s117 = sphi 0, %s117
      %s119 = sphi 0, %s117
      %s120 = sphi 0, %s119
      %s134 = sphi 0, %s120
      %s140 = sphi 0, %s142
      %s143 = sphi 0, %s140
      %s144 = sphi 0, %s143
      %s160 = sphi 0, %s144
      %s166 = sphi 0, %s168
      %s169 = sphi 0, %s166
      %s170 = sphi 0, %s169
      %s186 = sphi 0, %s170
      %s192 = sphi 0, %s194
      %s195 = sphi 0, %s192
      %s196 = sphi 0, %s195
      %s212 = sphi 0, %s196
      %s218 = sphi 0, %s220
      %s221 = sphi 0, %s218
      %s222 = sphi 0, %s221
      %s238 = sphi 0, %s222
      %s244 = sphi 0, %s246
      %s247 = sphi 0, %s244
      %s248 = sphi 0, %s247
      %s264 = sphi 0, %s248
      %s270 = sphi 0, %s272
      %s273 = sphi 0, %s270
      %s274 = sphi 0, %s273
      %s290 = sphi 0, %s274
      %s296 = sphi 0, %s298
      %s299 = sphi 0, %s296
      %s300 = sphi 0, %s299
      %s316 = sphi 0, %s300
      %s322 = sphi 0, %s324
      %s325 = sphi 0, %s322
      %s326 = sphi 0, %s325
      %s342 = sphi 0, %s326
      %s348 = sphi 0, %s350
      %s351 = sphi 0, %s348
      %s352 = sphi 0, %s351
      %s368 = sphi 0, %s352
      %s374 = sphi 0, %s376
      %s377 = sphi 0, %s374
      %s378 = sphi 0, %s377
      %s394 = sphi 0, %s378
      %s400 = sphi 0, %s402
      %s403 = sphi 0, %s400
      %s404 = sphi 0, %s403
      %s420 = sphi 0, %s404
      %s426 = sphi 0, %s428
      %s429 = sphi 0, %s426
      %s430 = sphi 0, %s429
      %s446 = sphi 0, %s430
      %s452 = sphi 0, %s454
      %s455 = sphi 0, %s452
      %s456 = sphi 0, %s455
      %s472 = sphi 0, %s456
      %s478 = sphi 0, %s480
      %s481 = sphi 0, %s478
      %s482 = sphi 0, %s481
      %s498 = sphi 0, %s482
      %s502 = sphi 0, %s502
      %s504 = sphi 0, %s502
      %s505 = sphi 0, %s504
      %s519 = sphi 0, %s505
      %s523 = sphi 0, %s523
      %s525 = sphi 0, %s523
      %s526 = sphi 0, %s525
      %s540 = sphi 0, %s526
      %s546 = sphi 0, %s548
      %s549 = sphi 0, %s546
      %s550 = sphi 0, %s549
      %s566 = sphi 0, %s550
    $region4: #{tpu_custom_call.1} parent=1 // loop_header_branch
      %32 = sbr.rel (%p30) target = $region8
    $region5: #{tpu_custom_call.1} parent=1 // loop_body
      %s34 = ssub.s32 %s29, 1
      %s35 = ssub.s32 %s29, 2
      %s42 = sadd.s32 1, %s37
      %p43 = scmp.ge.s32.totalorder %s42, 2
      %s44 = scalar_select %p43, 0, %s42
      %s45 = sadd.s32 1, %s36
      %s46 = scalar_select %p43, %s45, %s36
      %p47 = scmp.ge.s32.totalorder %s46, 2
      %s48 = scalar_select %p47, 0, %s46
      %s49 = ssub.s32 %s36, %s48
      %p50 = scmp.eq.s32.totalorder %s49, 0
      %s52 = sadd.s32 %s51, 1
      %s53 = scalar_select %p50, %s51, %s52
      %p56 = pneg %p50
      %p57 = scmp.eq.s32.totalorder %s29, 3
      %p58 = por %p56, %p57
      %p59 = scmp.ne.s32.totalorder %s51, %s54
      %p60 = scmp.eq.s32.totalorder %s29, 0
      %p61 = por %p59, %p60
      %p62 = scmp.ne.s32.totalorder %s51, %s54
      %p63 = scmp.eq.s32.totalorder %s34, 3
      %p64 = por %p62, %p63
      %p65 = scmp.ne.s32.totalorder %s54, %s55
      %p66 = scmp.eq.s32.totalorder %s34, 0
      %p67 = por %p65, %p66
      %p68 = scmp.ne.s32.totalorder %s54, %s55
      %p69 = scmp.eq.s32.totalorder %s35, 3
      %p70 = por %p68, %p69
      %p72 = scmp.ne.s32.totalorder %s55, %s71
      %p73 = scmp.eq.s32.totalorder %s35, 0
      %p74 = por %p72, %p73
      %s76 = sadd.s32 %s75, 1
      %p79 = scmp.eq.s32.totalorder %s29, 3
      %p80 = scmp.ne.s32.totalorder %s75, %s77
      %p81 = scmp.eq.s32.totalorder %s29, 0
      %p82 = por %p80, %p81
      %p83 = scmp.ne.s32.totalorder %s75, %s77
      %p84 = scmp.eq.s32.totalorder %s34, 3
      %p85 = por %p83, %p84
      %p86 = scmp.ne.s32.totalorder %s77, %s78
      %p87 = scmp.eq.s32.totalorder %s34, 0
      %p88 = por %p86, %p87
      %p89 = scmp.ne.s32.totalorder %s77, %s78
      %p90 = scmp.eq.s32.totalorder %s35, 3
      %p91 = por %p89, %p90
      %p93 = scmp.ne.s32.totalorder %s78, %s92
      %p94 = scmp.eq.s32.totalorder %s35, 0
      %p95 = por %p93, %p94
      %s97 = sadd.s32 %s96, 1
      %p100 = scmp.eq.s32.totalorder %s29, 3
      %p101 = scmp.ne.s32.totalorder %s96, %s98
      %p102 = scmp.eq.s32.totalorder %s29, 0
      %p103 = por %p101, %p102
      %p104 = scmp.ne.s32.totalorder %s96, %s98
      %p105 = scmp.eq.s32.totalorder %s34, 3
      %p106 = por %p104, %p105
      %p107 = scmp.ne.s32.totalorder %s98, %s99
      %p108 = scmp.eq.s32.totalorder %s34, 0
      %p109 = por %p107, %p108
      %p110 = scmp.ne.s32.totalorder %s98, %s99
      %p111 = scmp.eq.s32.totalorder %s35, 3
      %p112 = por %p110, %p111
      %p114 = scmp.ne.s32.totalorder %s99, %s113
      %p115 = scmp.eq.s32.totalorder %s35, 0
      %p116 = por %p114, %p115
      %s118 = sadd.s32 %s117, 1
      %p121 = scmp.eq.s32.totalorder %s29, 3
      %p122 = scmp.ne.s32.totalorder %s117, %s119
      %p123 = scmp.eq.s32.totalorder %s29, 0
      %p124 = por %p122, %p123
      %p125 = scmp.ne.s32.totalorder %s117, %s119
      %p126 = scmp.eq.s32.totalorder %s34, 3
      %p127 = por %p125, %p126
      %p128 = scmp.ne.s32.totalorder %s119, %s120
      %p129 = scmp.eq.s32.totalorder %s34, 0
      %p130 = por %p128, %p129
      %p131 = scmp.ne.s32.totalorder %s119, %s120
      %p132 = scmp.eq.s32.totalorder %s35, 3
      %p133 = por %p131, %p132
      %p135 = scmp.ne.s32.totalorder %s120, %s134
      %p136 = scmp.eq.s32.totalorder %s35, 0
      %p137 = por %p135, %p136
      %s138 = ssub.s32 %s37, %s44
      %p139 = scmp.eq.s32.totalorder %s138, 0
      %s141 = sadd.s32 %s140, 1
      %s142 = scalar_select %p139, %s140, %s141
      %p145 = pneg %p139
      %p146 = scmp.eq.s32.totalorder %s29, 3
      %p147 = por %p145, %p146
      %p148 = scmp.ne.s32.totalorder %s140, %s143
      %p149 = scmp.eq.s32.totalorder %s29, 0
      %p150 = por %p148, %p149
      %p151 = scmp.ne.s32.totalorder %s140, %s143
      %p152 = scmp.eq.s32.totalorder %s34, 3
      %p153 = por %p151, %p152
      %p154 = scmp.ne.s32.totalorder %s143, %s144
      %p155 = scmp.eq.s32.totalorder %s34, 0
      %p156 = por %p154, %p155
      %p157 = scmp.ne.s32.totalorder %s143, %s144
      %p158 = scmp.eq.s32.totalorder %s35, 3
      %p159 = por %p157, %p158
      %p161 = scmp.ne.s32.totalorder %s144, %s160
      %p162 = scmp.eq.s32.totalorder %s35, 0
      %p163 = por %p161, %p162
      %s164 = ssub.s32 %s37, %s44
      %p165 = scmp.eq.s32.totalorder %s164, 0
      %s167 = sadd.s32 %s166, 1
      %s168 = scalar_select %p165, %s166, %s167
      %p171 = pneg %p165
      %p172 = scmp.eq.s32.totalorder %s29, 3
      %p173 = por %p171, %p172
      %p174 = scmp.ne.s32.totalorder %s166, %s169
      %p175 = scmp.eq.s32.totalorder %s29, 0
      %p176 = por %p174, %p175
      %p177 = scmp.ne.s32.totalorder %s166, %s169
      %p178 = scmp.eq.s32.totalorder %s34, 3
      %p179 = por %p177, %p178
      %p180 = scmp.ne.s32.totalorder %s169, %s170
      %p181 = scmp.eq.s32.totalorder %s34, 0
      %p182 = por %p180, %p181
      %p183 = scmp.ne.s32.totalorder %s169, %s170
      %p184 = scmp.eq.s32.totalorder %s35, 3
      %p185 = por %p183, %p184
      %p187 = scmp.ne.s32.totalorder %s170, %s186
      %p188 = scmp.eq.s32.totalorder %s35, 0
      %p189 = por %p187, %p188
      %s190 = ssub.s32 %s37, %s44
      %p191 = scmp.eq.s32.totalorder %s190, 0
      %s193 = sadd.s32 %s192, 1
      %s194 = scalar_select %p191, %s192, %s193
      %p197 = pneg %p191
      %p198 = scmp.eq.s32.totalorder %s29, 3
      %p199 = por %p197, %p198
      %p200 = scmp.ne.s32.totalorder %s192, %s195
      %p201 = scmp.eq.s32.totalorder %s29, 0
      %p202 = por %p200, %p201
      %p203 = scmp.ne.s32.totalorder %s192, %s195
      %p204 = scmp.eq.s32.totalorder %s34, 3
      %p205 = por %p203, %p204
      %p206 = scmp.ne.s32.totalorder %s195, %s196
      %p207 = scmp.eq.s32.totalorder %s34, 0
      %p208 = por %p206, %p207
      %p209 = scmp.ne.s32.totalorder %s195, %s196
      %p210 = scmp.eq.s32.totalorder %s35, 3
      %p211 = por %p209, %p210
      %p213 = scmp.ne.s32.totalorder %s196, %s212
      %p214 = scmp.eq.s32.totalorder %s35, 0
      %p215 = por %p213, %p214
      %s216 = ssub.s32 %s37, %s44
      %p217 = scmp.eq.s32.totalorder %s216, 0
      %s219 = sadd.s32 %s218, 1
      %s220 = scalar_select %p217, %s218, %s219
      %p223 = pneg %p217
      %p224 = scmp.eq.s32.totalorder %s29, 3
      %p225 = por %p223, %p224
      %p226 = scmp.ne.s32.totalorder %s218, %s221
      %p227 = scmp.eq.s32.totalorder %s29, 0
      %p228 = por %p226, %p227
      %p229 = scmp.ne.s32.totalorder %s218, %s221
      %p230 = scmp.eq.s32.totalorder %s34, 3
      %p231 = por %p229, %p230
      %p232 = scmp.ne.s32.totalorder %s221, %s222
      %p233 = scmp.eq.s32.totalorder %s34, 0
      %p234 = por %p232, %p233
      %p235 = scmp.ne.s32.totalorder %s221, %s222
      %p236 = scmp.eq.s32.totalorder %s35, 3
      %p237 = por %p235, %p236
      %p239 = scmp.ne.s32.totalorder %s222, %s238
      %p240 = scmp.eq.s32.totalorder %s35, 0
      %p241 = por %p239, %p240
      %s242 = ssub.s32 %s37, %s44
      %p243 = scmp.eq.s32.totalorder %s242, 0
      %s245 = sadd.s32 %s244, 1
      %s246 = scalar_select %p243, %s244, %s245
      %p249 = pneg %p243
      %p250 = scmp.eq.s32.totalorder %s29, 3
      %p251 = por %p249, %p250
      %p252 = scmp.ne.s32.totalorder %s244, %s247
      %p253 = scmp.eq.s32.totalorder %s29, 0
      %p254 = por %p252, %p253
      %p255 = scmp.ne.s32.totalorder %s244, %s247
      %p256 = scmp.eq.s32.totalorder %s34, 3
      %p257 = por %p255, %p256
      %p258 = scmp.ne.s32.totalorder %s247, %s248
      %p259 = scmp.eq.s32.totalorder %s34, 0
      %p260 = por %p258, %p259
      %p261 = scmp.ne.s32.totalorder %s247, %s248
      %p262 = scmp.eq.s32.totalorder %s35, 3
      %p263 = por %p261, %p262
      %p265 = scmp.ne.s32.totalorder %s248, %s264
      %p266 = scmp.eq.s32.totalorder %s35, 0
      %p267 = por %p265, %p266
      %s268 = ssub.s32 %s37, %s44
      %p269 = scmp.eq.s32.totalorder %s268, 0
      %s271 = sadd.s32 %s270, 1
      %s272 = scalar_select %p269, %s270, %s271
      %p275 = pneg %p269
      %p276 = scmp.eq.s32.totalorder %s29, 3
      %p277 = por %p275, %p276
      %p278 = scmp.ne.s32.totalorder %s270, %s273
      %p279 = scmp.eq.s32.totalorder %s29, 0
      %p280 = por %p278, %p279
      %p281 = scmp.ne.s32.totalorder %s270, %s273
      %p282 = scmp.eq.s32.totalorder %s34, 3
      %p283 = por %p281, %p282
      %p284 = scmp.ne.s32.totalorder %s273, %s274
      %p285 = scmp.eq.s32.totalorder %s34, 0
      %p286 = por %p284, %p285
      %p287 = scmp.ne.s32.totalorder %s273, %s274
      %p288 = scmp.eq.s32.totalorder %s35, 3
      %p289 = por %p287, %p288
      %p291 = scmp.ne.s32.totalorder %s274, %s290
      %p292 = scmp.eq.s32.totalorder %s35, 0
      %p293 = por %p291, %p292
      %s294 = ssub.s32 %s37, %s44
      %p295 = scmp.eq.s32.totalorder %s294, 0
      %s297 = sadd.s32 %s296, 1
      %s298 = scalar_select %p295, %s296, %s297
      %p301 = pneg %p295
      %p302 = scmp.eq.s32.totalorder %s29, 3
      %p303 = por %p301, %p302
      %p304 = scmp.ne.s32.totalorder %s296, %s299
      %p305 = scmp.eq.s32.totalorder %s29, 0
      %p306 = por %p304, %p305
      %p307 = scmp.ne.s32.totalorder %s296, %s299
      %p308 = scmp.eq.s32.totalorder %s34, 3
      %p309 = por %p307, %p308
      %p310 = scmp.ne.s32.totalorder %s299, %s300
      %p311 = scmp.eq.s32.totalorder %s34, 0
      %p312 = por %p310, %p311
      %p313 = scmp.ne.s32.totalorder %s299, %s300
      %p314 = scmp.eq.s32.totalorder %s35, 3
      %p315 = por %p313, %p314
      %p317 = scmp.ne.s32.totalorder %s300, %s316
      %p318 = scmp.eq.s32.totalorder %s35, 0
      %p319 = por %p317, %p318
      %s320 = ssub.s32 %s37, %s44
      %p321 = scmp.eq.s32.totalorder %s320, 0
      %s323 = sadd.s32 %s322, 1
      %s324 = scalar_select %p321, %s322, %s323
      %p327 = pneg %p321
      %p328 = scmp.eq.s32.totalorder %s29, 3
      %p329 = por %p327, %p328
      %p330 = scmp.ne.s32.totalorder %s322, %s325
      %p331 = scmp.eq.s32.totalorder %s29, 0
      %p332 = por %p330, %p331
      %p333 = scmp.ne.s32.totalorder %s322, %s325
      %p334 = scmp.eq.s32.totalorder %s34, 3
      %p335 = por %p333, %p334
      %p336 = scmp.ne.s32.totalorder %s325, %s326
      %p337 = scmp.eq.s32.totalorder %s34, 0
      %p338 = por %p336, %p337
      %p339 = scmp.ne.s32.totalorder %s325, %s326
      %p340 = scmp.eq.s32.totalorder %s35, 3
      %p341 = por %p339, %p340
      %p343 = scmp.ne.s32.totalorder %s326, %s342
      %p344 = scmp.eq.s32.totalorder %s35, 0
      %p345 = por %p343, %p344
      %s346 = ssub.s32 %s37, %s44
      %p347 = scmp.eq.s32.totalorder %s346, 0
      %s349 = sadd.s32 %s348, 1
      %s350 = scalar_select %p347, %s348, %s349
      %p353 = pneg %p347
      %p354 = scmp.eq.s32.totalorder %s29, 3
      %p355 = por %p353, %p354
      %p356 = scmp.ne.s32.totalorder %s348, %s351
      %p357 = scmp.eq.s32.totalorder %s29, 0
      %p358 = por %p356, %p357
      %p359 = scmp.ne.s32.totalorder %s348, %s351
      %p360 = scmp.eq.s32.totalorder %s34, 3
      %p361 = por %p359, %p360
      %p362 = scmp.ne.s32.totalorder %s351, %s352
      %p363 = scmp.eq.s32.totalorder %s34, 0
      %p364 = por %p362, %p363
      %p365 = scmp.ne.s32.totalorder %s351, %s352
      %p366 = scmp.eq.s32.totalorder %s35, 3
      %p367 = por %p365, %p366
      %p369 = scmp.ne.s32.totalorder %s352, %s368
      %p370 = scmp.eq.s32.totalorder %s35, 0
      %p371 = por %p369, %p370
      %s372 = ssub.s32 %s37, %s44
      %p373 = scmp.eq.s32.totalorder %s372, 0
      %s375 = sadd.s32 %s374, 1
      %s376 = scalar_select %p373, %s374, %s375
      %p379 = pneg %p373
      %p380 = scmp.eq.s32.totalorder %s29, 3
      %p381 = por %p379, %p380
      %p382 = scmp.ne.s32.totalorder %s374, %s377
      %p383 = scmp.eq.s32.totalorder %s29, 0
      %p384 = por %p382, %p383
      %p385 = scmp.ne.s32.totalorder %s374, %s377
      %p386 = scmp.eq.s32.totalorder %s34, 3
      %p387 = por %p385, %p386
      %p388 = scmp.ne.s32.totalorder %s377, %s378
      %p389 = scmp.eq.s32.totalorder %s34, 0
      %p390 = por %p388, %p389
      %p391 = scmp.ne.s32.totalorder %s377, %s378
      %p392 = scmp.eq.s32.totalorder %s35, 3
      %p393 = por %p391, %p392
      %p395 = scmp.ne.s32.totalorder %s378, %s394
      %p396 = scmp.eq.s32.totalorder %s35, 0
      %p397 = por %p395, %p396
      %s398 = ssub.s32 %s37, %s44
      %p399 = scmp.eq.s32.totalorder %s398, 0
      %s401 = sadd.s32 %s400, 1
      %s402 = scalar_select %p399, %s400, %s401
      %p405 = pneg %p399
      %p406 = scmp.eq.s32.totalorder %s29, 3
      %p407 = por %p405, %p406
      %p408 = scmp.ne.s32.totalorder %s400, %s403
      %p409 = scmp.eq.s32.totalorder %s29, 0
      %p410 = por %p408, %p409
      %p411 = scmp.ne.s32.totalorder %s400, %s403
      %p412 = scmp.eq.s32.totalorder %s34, 3
      %p413 = por %p411, %p412
      %p414 = scmp.ne.s32.totalorder %s403, %s404
      %p415 = scmp.eq.s32.totalorder %s34, 0
      %p416 = por %p414, %p415
      %p417 = scmp.ne.s32.totalorder %s403, %s404
      %p418 = scmp.eq.s32.totalorder %s35, 3
      %p419 = por %p417, %p418
      %p421 = scmp.ne.s32.totalorder %s404, %s420
      %p422 = scmp.eq.s32.totalorder %s35, 0
      %p423 = por %p421, %p422
      %s424 = ssub.s32 %s37, %s44
      %p425 = scmp.eq.s32.totalorder %s424, 0
      %s427 = sadd.s32 %s426, 1
      %s428 = scalar_select %p425, %s426, %s427
      %p431 = pneg %p425
      %p432 = scmp.eq.s32.totalorder %s29, 3
      %p433 = por %p431, %p432
      %p434 = scmp.ne.s32.totalorder %s426, %s429
      %p435 = scmp.eq.s32.totalorder %s29, 0
      %p436 = por %p434, %p435
      %p437 = scmp.ne.s32.totalorder %s426, %s429
      %p438 = scmp.eq.s32.totalorder %s34, 3
      %p439 = por %p437, %p438
      %p440 = scmp.ne.s32.totalorder %s429, %s430
      %p441 = scmp.eq.s32.totalorder %s34, 0
      %p442 = por %p440, %p441
      %p443 = scmp.ne.s32.totalorder %s429, %s430
      %p444 = scmp.eq.s32.totalorder %s35, 3
      %p445 = por %p443, %p444
      %p447 = scmp.ne.s32.totalorder %s430, %s446
      %p448 = scmp.eq.s32.totalorder %s35, 0
      %p449 = por %p447, %p448
      %s450 = ssub.s32 %s37, %s44
      %p451 = scmp.eq.s32.totalorder %s450, 0
      %s453 = sadd.s32 %s452, 1
      %s454 = scalar_select %p451, %s452, %s453
      %p457 = pneg %p451
      %p458 = scmp.eq.s32.totalorder %s29, 3
      %p459 = por %p457, %p458
      %p460 = scmp.ne.s32.totalorder %s452, %s455
      %p461 = scmp.eq.s32.totalorder %s29, 0
      %p462 = por %p460, %p461
      %p463 = scmp.ne.s32.totalorder %s452, %s455
      %p464 = scmp.eq.s32.totalorder %s34, 3
      %p465 = por %p463, %p464
      %p466 = scmp.ne.s32.totalorder %s455, %s456
      %p467 = scmp.eq.s32.totalorder %s34, 0
      %p468 = por %p466, %p467
      %p469 = scmp.ne.s32.totalorder %s455, %s456
      %p470 = scmp.eq.s32.totalorder %s35, 3
      %p471 = por %p469, %p470
      %p473 = scmp.ne.s32.totalorder %s456, %s472
      %p474 = scmp.eq.s32.totalorder %s35, 0
      %p475 = por %p473, %p474
      %s476 = ssub.s32 %s37, %s44
      %p477 = scmp.eq.s32.totalorder %s476, 0
      %s479 = sadd.s32 %s478, 1
      %s480 = scalar_select %p477, %s478, %s479
      %p483 = pneg %p477
      %p484 = scmp.eq.s32.totalorder %s29, 3
      %p485 = por %p483, %p484
      %p486 = scmp.ne.s32.totalorder %s478, %s481
      %p487 = scmp.eq.s32.totalorder %s29, 0
      %p488 = por %p486, %p487
      %p489 = scmp.ne.s32.totalorder %s478, %s481
      %p490 = scmp.eq.s32.totalorder %s34, 3
      %p491 = por %p489, %p490
      %p492 = scmp.ne.s32.totalorder %s481, %s482
      %p493 = scmp.eq.s32.totalorder %s34, 0
      %p494 = por %p492, %p493
      %p495 = scmp.ne.s32.totalorder %s481, %s482
      %p496 = scmp.eq.s32.totalorder %s35, 3
      %p497 = por %p495, %p496
      %p499 = scmp.ne.s32.totalorder %s482, %s498
      %p500 = scmp.eq.s32.totalorder %s35, 0
      %p501 = por %p499, %p500
      %s503 = sadd.s32 %s502, 1
      %p506 = scmp.eq.s32.totalorder %s29, 3
      %p507 = scmp.ne.s32.totalorder %s502, %s504
      %p508 = scmp.eq.s32.totalorder %s29, 0
      %p509 = por %p507, %p508
      %p510 = scmp.ne.s32.totalorder %s502, %s504
      %p511 = scmp.eq.s32.totalorder %s34, 3
      %p512 = por %p510, %p511
      %p513 = scmp.ne.s32.totalorder %s504, %s505
      %p514 = scmp.eq.s32.totalorder %s34, 0
      %p515 = por %p513, %p514
      %p516 = scmp.ne.s32.totalorder %s504, %s505
      %p517 = scmp.eq.s32.totalorder %s35, 3
      %p518 = por %p516, %p517
      %p520 = scmp.ne.s32.totalorder %s505, %s519
      %p521 = scmp.eq.s32.totalorder %s35, 0
      %p522 = por %p520, %p521
      %s524 = sadd.s32 %s523, 1
      %p527 = scmp.eq.s32.totalorder %s29, 3
      %p528 = scmp.ne.s32.totalorder %s523, %s525
      %p529 = scmp.eq.s32.totalorder %s29, 0
      %p530 = por %p528, %p529
      %p531 = scmp.ne.s32.totalorder %s523, %s525
      %p532 = scmp.eq.s32.totalorder %s34, 3
      %p533 = por %p531, %p532
      %p534 = scmp.ne.s32.totalorder %s525, %s526
      %p535 = scmp.eq.s32.totalorder %s34, 0
      %p536 = por %p534, %p535
      %p537 = scmp.ne.s32.totalorder %s525, %s526
      %p538 = scmp.eq.s32.totalorder %s35, 3
      %p539 = por %p537, %p538
      %p541 = scmp.ne.s32.totalorder %s526, %s540
      %p542 = scmp.eq.s32.totalorder %s35, 0
      %p543 = por %p541, %p542
      %s544 = ssub.s32 %s36, %s48
      %p545 = scmp.eq.s32.totalorder %s544, 0
      %s547 = sadd.s32 %s546, 1
      %s548 = scalar_select %p545, %s546, %s547
      %p551 = pneg %p545
      %p552 = scmp.eq.s32.totalorder %s29, 3
      %p553 = por %p551, %p552
      %p554 = scmp.ne.s32.totalorder %s546, %s549
      %p555 = scmp.eq.s32.totalorder %s29, 0
      %p556 = por %p554, %p555
      %p557 = scmp.ne.s32.totalorder %s546, %s549
      %p558 = scmp.eq.s32.totalorder %s34, 3
      %p559 = por %p557, %p558
      %p560 = scmp.ne.s32.totalorder %s549, %s550
      %p561 = scmp.eq.s32.totalorder %s34, 0
      %p562 = por %p560, %p561
      %p563 = scmp.ne.s32.totalorder %s549, %s550
      %p564 = scmp.eq.s32.totalorder %s35, 3
      %p565 = por %p563, %p564
      %p567 = scmp.ne.s32.totalorder %s550, %s566
      %p568 = scmp.eq.s32.totalorder %s35, 0
      %p569 = por %p567, %p568
      %p570 = scmp.le.s32.totalorder 1, %s29
      %p571 = scmp.lt.s32.totalorder %s29, 5
      %p572 = pnand %p570, %p571
      %p573 = pneg %p572
      // Predicated region
      $region9: #{tpu_custom_call.1} parent=5 // pred_check
        _
      $region10: #{tpu_custom_call.1} parent=5 // pred_check_branch
        %575 = sbr.rel (%p572) target = $region12
      $region11: #{tpu_custom_call.1} parent=5 // pred_region
        %s576 = ssub.s32 %s29, 1
        // Predicated region
        $region13: #{tpu_custom_call.1} parent=11 // pred_check
          %p577 = pneg %p88
        $region14: #{tpu_custom_call.1} parent=11 // pred_check_branch
          %579 = sbr.rel (%p577) target = $region16
        $region15: #{tpu_custom_call.1} parent=11 // pred_region
          _
        $region16: #{tpu_custom_call.1} parent=11 // pred_fallthru
          _
        // Predicated region
        $region17: #{tpu_custom_call.1} parent=11 // pred_check
          %p580 = pneg %p109
        $region18: #{tpu_custom_call.1} parent=11 // pred_check_branch
          %582 = sbr.rel (%p580) target = $region20
        $region19: #{tpu_custom_call.1} parent=11 // pred_region
          _
        $region20: #{tpu_custom_call.1} parent=11 // pred_fallthru
          _
        // Predicated region
        $region21: #{tpu_custom_call.1} parent=11 // pred_check
          %p583 = pneg %p130
        $region22: #{tpu_custom_call.1} parent=11 // pred_check_branch
          %585 = sbr.rel (%p583) target = $region24
        $region23: #{tpu_custom_call.1} parent=11 // pred_region
          _
        $region24: #{tpu_custom_call.1} parent=11 // pred_fallthru
          _
        // Predicated region
        $region25: #{tpu_custom_call.1} parent=11 // pred_check
          %p586 = pneg %p515
        $region26: #{tpu_custom_call.1} parent=11 // pred_check_branch
          %588 = sbr.rel (%p586) target = $region28
        $region27: #{tpu_custom_call.1} parent=11 // pred_region
          _
        $region28: #{tpu_custom_call.1} parent=11 // pred_fallthru
          _
        // Predicated region
        $region29: #{tpu_custom_call.1} parent=11 // pred_check
          %p589 = pneg %p536
        $region30: #{tpu_custom_call.1} parent=11 // pred_check_branch
          %591 = sbr.rel (%p589) target = $region32
        $region31: #{tpu_custom_call.1} parent=11 // pred_region
          _
        $region32: #{tpu_custom_call.1} parent=11 // pred_fallthru
          _
      $region12: #{tpu_custom_call.1} parent=5 // pred_fallthru
        _
      %p592 = scmp.lt.s32.totalorder %s29, 4
      // Predicated region
      $region33: #{tpu_custom_call.1} parent=5 // pred_check
        %p593 = pneg %p592
      $region34: #{tpu_custom_call.1} parent=5 // pred_check_branch
        %595 = sbr.rel (%p593) target = $region36
      $region35: #{tpu_custom_call.1} parent=5 // pred_region
        // Predicated region
        $region37: #{tpu_custom_call.1} parent=35 // pred_check
          %p596 = pneg %p61
        $region38: #{tpu_custom_call.1} parent=35 // pred_check_branch
          %598 = sbr.rel (%p596) target = $region40
        $region39: #{tpu_custom_call.1} parent=35 // pred_region
          %s599 = smul.u32 2, %s36
          %p600 = scmp.lt.s32.totalorder %s599, 3
          %s601 = scalar_select %p600, %s599, 3
          %s602 = smul.addr %s601, 8
          %s603 = scalar_lea.vmem %s0, %s602
          %s604 = smul.u32 2, %s36
        $region40: #{tpu_custom_call.1} parent=35 // pred_fallthru
          _
        // Predicated region
        $region41: #{tpu_custom_call.1} parent=35 // pred_check
          %p605 = pneg %p150
        $region42: #{tpu_custom_call.1} parent=35 // pred_check_branch
          %607 = sbr.rel (%p605) target = $region44
        $region43: #{tpu_custom_call.1} parent=35 // pred_region
          %p608 = scmp.lt.s32.totalorder %s37, 1
          %s609 = scalar_select %p608, %s37, 1
          %s610 = scalar_lea.vmem %s4, %s609
        $region44: #{tpu_custom_call.1} parent=35 // pred_fallthru
          _
        // Predicated region
        $region45: #{tpu_custom_call.1} parent=35 // pred_check
          %p611 = pneg %p176
        $region46: #{tpu_custom_call.1} parent=35 // pred_check_branch
          %613 = sbr.rel (%p611) target = $region48
        $region47: #{tpu_custom_call.1} parent=35 // pred_region
          %p614 = scmp.lt.s32.totalorder %s37, 1
          %s615 = scalar_select %p614, %s37, 1
          %s616 = scalar_lea.vmem %s5, %s615
        $region48: #{tpu_custom_call.1} parent=35 // pred_fallthru
          _
        // Predicated region
        $region49: #{tpu_custom_call.1} parent=35 // pred_check
          %p617 = pneg %p202
        $region50: #{tpu_custom_call.1} parent=35 // pred_check_branch
          %619 = sbr.rel (%p617) target = $region52
        $region51: #{tpu_custom_call.1} parent=35 // pred_region
          %p620 = scmp.lt.s32.totalorder %s37, 1
          %s621 = scalar_select %p620, %s37, 1
          %s622 = smul.addr %s621, 4
          %s623 = smul.addr %s622, 4
          %s624 = scalar_lea.vmem %s6, %s623
        $region52: #{tpu_custom_call.1} parent=35 // pred_fallthru
          _
        // Predicated region
        $region53: #{tpu_custom_call.1} parent=35 // pred_check
          %p625 = pneg %p228
        $region54: #{tpu_custom_call.1} parent=35 // pred_check_branch
          %627 = sbr.rel (%p625) target = $region56
        $region55: #{tpu_custom_call.1} parent=35 // pred_region
          %p628 = scmp.lt.s32.totalorder %s37, 1
          %s629 = scalar_select %p628, %s37, 1
          %s630 = scalar_lea.vmem %s7, %s629
        $region56: #{tpu_custom_call.1} parent=35 // pred_fallthru
          _
        // Predicated region
        $region57: #{tpu_custom_call.1} parent=35 // pred_check
          %p631 = pneg %p254
        $region58: #{tpu_custom_call.1} parent=35 // pred_check_branch
          %633 = sbr.rel (%p631) target = $region60
        $region59: #{tpu_custom_call.1} parent=35 // pred_region
          %p634 = scmp.lt.s32.totalorder %s37, 1
          %s635 = scalar_select %p634, %s37, 1
          %s636 = smul.addr %s635, 4
          %s637 = smul.addr %s636, 4
          %s638 = scalar_lea.vmem %s8, %s637
        $region60: #{tpu_custom_call.1} parent=35 // pred_fallthru
          _
        // Predicated region
        $region61: #{tpu_custom_call.1} parent=35 // pred_check
          %p639 = pneg %p280
        $region62: #{tpu_custom_call.1} parent=35 // pred_check_branch
          %641 = sbr.rel (%p639) target = $region64
        $region63: #{tpu_custom_call.1} parent=35 // pred_region
          %p642 = scmp.lt.s32.totalorder %s37, 1
          %s643 = scalar_select %p642, %s37, 1
          %s644 = scalar_lea.vmem %s9, %s643
        $region64: #{tpu_custom_call.1} parent=35 // pred_fallthru
          _
        // Predicated region
        $region65: #{tpu_custom_call.1} parent=35 // pred_check
          %p645 = pneg %p306
        $region66: #{tpu_custom_call.1} parent=35 // pred_check_branch
          %647 = sbr.rel (%p645) target = $region68
        $region67: #{tpu_custom_call.1} parent=35 // pred_region
          %p648 = scmp.lt.s32.totalorder %s37, 1
          %s649 = scalar_select %p648, %s37, 1
          %s650 = scalar_lea.vmem %s10, %s649
        $region68: #{tpu_custom_call.1} parent=35 // pred_fallthru
          _
        // Predicated region
        $region69: #{tpu_custom_call.1} parent=35 // pred_check
          %p651 = pneg %p332
        $region70: #{tpu_custom_call.1} parent=35 // pred_check_branch
          %653 = sbr.rel (%p651) target = $region72
        $region71: #{tpu_custom_call.1} parent=35 // pred_region
          %p654 = scmp.lt.s32.totalorder %s37, 1
          %s655 = scalar_select %p654, %s37, 1
          %s656 = scalar_lea.vmem %s11, %s655
        $region72: #{tpu_custom_call.1} parent=35 // pred_fallthru
          _
        // Predicated region
        $region73: #{tpu_custom_call.1} parent=35 // pred_check
          %p657 = pneg %p358
        $region74: #{tpu_custom_call.1} parent=35 // pred_check_branch
          %659 = sbr.rel (%p657) target = $region76
        $region75: #{tpu_custom_call.1} parent=35 // pred_region
          %p660 = scmp.lt.s32.totalorder %s37, 1
          %s661 = scalar_select %p660, %s37, 1
          %s662 = scalar_lea.vmem %s12, %s661
        $region76: #{tpu_custom_call.1} parent=35 // pred_fallthru
          _
        // Predicated region
        $region77: #{tpu_custom_call.1} parent=35 // pred_check
          %p663 = pneg %p384
        $region78: #{tpu_custom_call.1} parent=35 // pred_check_branch
          %665 = sbr.rel (%p663) target = $region80
        $region79: #{tpu_custom_call.1} parent=35 // pred_region
          %p666 = scmp.lt.s32.totalorder %s37, 1
          %s667 = scalar_select %p666, %s37, 1
          %s668 = smul.addr %s667, 4
          %s669 = smul.addr %s668, 4
          %s670 = scalar_lea.vmem %s13, %s669
        $region80: #{tpu_custom_call.1} parent=35 // pred_fallthru
          _
        // Predicated region
        $region81: #{tpu_custom_call.1} parent=35 // pred_check
          %p671 = pneg %p410
        $region82: #{tpu_custom_call.1} parent=35 // pred_check_branch
          %673 = sbr.rel (%p671) target = $region84
        $region83: #{tpu_custom_call.1} parent=35 // pred_region
          %p674 = scmp.lt.s32.totalorder %s37, 1
          %s675 = scalar_select %p674, %s37, 1
          %s676 = scalar_lea.vmem %s14, %s675
        $region84: #{tpu_custom_call.1} parent=35 // pred_fallthru
          _
        // Predicated region
        $region85: #{tpu_custom_call.1} parent=35 // pred_check
          %p677 = pneg %p436
        $region86: #{tpu_custom_call.1} parent=35 // pred_check_branch
          %679 = sbr.rel (%p677) target = $region88
        $region87: #{tpu_custom_call.1} parent=35 // pred_region
          %p680 = scmp.lt.s32.totalorder %s37, 1
          %s681 = scalar_select %p680, %s37, 1
          %s682 = smul.addr %s681, 8
          %s683 = smul.addr %s682, 4
          %s684 = scalar_lea.vmem %s15, %s683
        $region88: #{tpu_custom_call.1} parent=35 // pred_fallthru
          _
        // Predicated region
        $region89: #{tpu_custom_call.1} parent=35 // pred_check
          %p685 = pneg %p462
        $region90: #{tpu_custom_call.1} parent=35 // pred_check_branch
          %687 = sbr.rel (%p685) target = $region92
        $region91: #{tpu_custom_call.1} parent=35 // pred_region
          %p688 = scmp.lt.s32.totalorder %s37, 1
          %s689 = scalar_select %p688, %s37, 1
          %s690 = scalar_lea.vmem %s16, %s689
        $region92: #{tpu_custom_call.1} parent=35 // pred_fallthru
          _
        // Predicated region
        $region93: #{tpu_custom_call.1} parent=35 // pred_check
          %p691 = pneg %p488
        $region94: #{tpu_custom_call.1} parent=35 // pred_check_branch
          %693 = sbr.rel (%p691) target = $region96
        $region95: #{tpu_custom_call.1} parent=35 // pred_region
          %p694 = scmp.lt.s32.totalorder %s37, 1
          %s695 = scalar_select %p694, %s37, 1
          %s696 = scalar_lea.vmem %s17, %s695
        $region96: #{tpu_custom_call.1} parent=35 // pred_fallthru
          _
      $region36: #{tpu_custom_call.1} parent=5 // pred_fallthru
        _
      %p697 = scmp.le.s32.totalorder 1, %s29
      %p698 = scmp.lt.s32.totalorder %s29, 5
      %p699 = pnand %p697, %p698
      %p700 = pneg %p699
      // Predicated region
      $region97: #{tpu_custom_call.1} parent=5 // pred_check
        _
      $region98: #{tpu_custom_call.1} parent=5 // pred_check_branch
        %702 = sbr.rel (%p699) target = $region100
      $region99: #{tpu_custom_call.1} parent=5 // pred_region
        %s703 = ssub.s32 %s29, 1
        %s704 = smul.u32 2, %s38
        %p705 = scmp.lt.s32.totalorder %s704, 3
        %s706 = scalar_select %p705, %s704, 3
        %s707 = smul.addr %s706, 8
        %s708 = scalar_lea.vmem %s0, %s707
        %p709 = pneg %p67
        %p710 = pneg %p64
        %p711 = pneg %p88
        %p712 = pneg %p85
        %p713 = pneg %p109
        %p714 = pneg %p106
        %p715 = pneg %p130
        %p716 = pneg %p127
        %p717 = scmp.lt.s32.totalorder %s39, 1
        %s718 = scalar_select %p717, %s39, 1
        %s719 = scalar_lea.vmem %s4, %s718
        %p720 = pneg %p156
        %p721 = pneg %p153
        %p722 = scmp.lt.s32.totalorder %s39, 1
        %s723 = scalar_select %p722, %s39, 1
        %s724 = scalar_lea.vmem %s5, %s723
        %p725 = pneg %p182
        %p726 = pneg %p179
        %p727 = scmp.lt.s32.totalorder %s39, 1
        %s728 = scalar_select %p727, %s39, 1
        %s729 = smul.addr %s728, 4
        %s730 = smul.addr %s729, 4
        %s731 = scalar_lea.vmem %s6, %s730
        %p732 = pneg %p208
        %p733 = pneg %p205
        %p734 = scmp.lt.s32.totalorder %s39, 1
        %s735 = scalar_select %p734, %s39, 1
        %s736 = scalar_lea.vmem %s7, %s735
        %p737 = pneg %p234
        %p738 = pneg %p231
        %p739 = scmp.lt.s32.totalorder %s39, 1
        %s740 = scalar_select %p739, %s39, 1
        %s741 = smul.addr %s740, 4
        %s742 = smul.addr %s741, 4
        %s743 = scalar_lea.vmem %s8, %s742
        %p744 = pneg %p260
        %p745 = pneg %p257
        %p746 = scmp.lt.s32.totalorder %s39, 1
        %s747 = scalar_select %p746, %s39, 1
        %s748 = scalar_lea.vmem %s9, %s747
        %p749 = pneg %p286
        %p750 = pneg %p283
        %p751 = scmp.lt.s32.totalorder %s39, 1
        %s752 = scalar_select %p751, %s39, 1
        %s753 = scalar_lea.vmem %s10, %s752
        %p754 = pneg %p312
        %p755 = pneg %p309
        %p756 = scmp.lt.s32.totalorder %s39, 1
        %s757 = scalar_select %p756, %s39, 1
        %s758 = scalar_lea.vmem %s11, %s757
        %p759 = pneg %p338
        %p760 = pneg %p335
        %p761 = scmp.lt.s32.totalorder %s39, 1
        %s762 = scalar_select %p761, %s39, 1
        %s763 = scalar_lea.vmem %s12, %s762
        %p764 = pneg %p364
        %p765 = pneg %p361
        %p766 = scmp.lt.s32.totalorder %s39, 1
        %s767 = scalar_select %p766, %s39, 1
        %s768 = smul.addr %s767, 4
        %s769 = smul.addr %s768, 4
        %s770 = scalar_lea.vmem %s13, %s769
        %p771 = pneg %p390
        %p772 = pneg %p387
        %p773 = scmp.lt.s32.totalorder %s39, 1
        %s774 = scalar_select %p773, %s39, 1
        %s775 = scalar_lea.vmem %s14, %s774
        %p776 = pneg %p416
        %p777 = pneg %p413
        %p778 = scmp.lt.s32.totalorder %s39, 1
        %s779 = scalar_select %p778, %s39, 1
        %s780 = smul.addr %s779, 8
        %s781 = smul.addr %s780, 4
        %s782 = scalar_lea.vmem %s15, %s781
        %p783 = pneg %p442
        %p784 = pneg %p439
        %p785 = scmp.lt.s32.totalorder %s39, 1
        %s786 = scalar_select %p785, %s39, 1
        %s787 = scalar_lea.vmem %s16, %s786
        %p788 = pneg %p468
        %p789 = pneg %p465
        %p790 = scmp.lt.s32.totalorder %s39, 1
        %s791 = scalar_select %p790, %s39, 1
        %s792 = scalar_lea.vmem %s17, %s791
        %p793 = pneg %p494
        %p794 = pneg %p491
        %p795 = pneg %p515
        %p796 = pneg %p512
        %p797 = pneg %p536
        %p798 = pneg %p533
        %p799 = pneg %p562
        %p800 = pneg %p559
        %s801 = sand.u32 %s549, 1
        %s802 = scalar_lea.sflag [#allocation4], %s801
        %s803 = sand.u32 %s549, 1
        %s804 = smul.addr %s803, 2
        %s805 = scalar_lea.vmem [#allocation3], %s804
        %s806 = smul.u32 2, %s38
        %p807 = scmp.lt.s32.totalorder %s806, 3
        %s808 = scalar_select %p807, %s806, 3
        %s809 = smul.addr %s808, 8
        %s810 = scalar_lea.vmem %s0, %s809
        %s811 = smul.u32 2, %s38
        %p812 = scmp.lt.s32.totalorder %s39, 1
        %s813 = scalar_select %p812, %s39, 1
        %s814 = scalar_lea.vmem %s4, %s813
        %p815 = scmp.lt.s32.totalorder %s39, 1
        %s816 = scalar_select %p815, %s39, 1
        %s817 = scalar_lea.vmem %s5, %s816
        %p818 = scmp.lt.s32.totalorder %s39, 1
        %s819 = scalar_select %p818, %s39, 1
        %s820 = smul.addr %s819, 4
        %s821 = smul.addr %s820, 4
        %s822 = scalar_lea.vmem %s6, %s821
        %p823 = scmp.lt.s32.totalorder %s39, 1
        %s824 = scalar_select %p823, %s39, 1
        %s825 = scalar_lea.vmem %s7, %s824
        %p826 = scmp.lt.s32.totalorder %s39, 1
        %s827 = scalar_select %p826, %s39, 1
        %s828 = smul.addr %s827, 4
        %s829 = smul.addr %s828, 4
        %s830 = scalar_lea.vmem %s8, %s829
        %p831 = scmp.lt.s32.totalorder %s39, 1
        %s832 = scalar_select %p831, %s39, 1
        %s833 = scalar_lea.vmem %s9, %s832
        %p834 = scmp.lt.s32.totalorder %s39, 1
        %s835 = scalar_select %p834, %s39, 1
        %s836 = scalar_lea.vmem %s10, %s835
        %p837 = scmp.lt.s32.totalorder %s39, 1
        %s838 = scalar_select %p837, %s39, 1
        %s839 = scalar_lea.vmem %s11, %s838
        %p840 = scmp.lt.s32.totalorder %s39, 1
        %s841 = scalar_select %p840, %s39, 1
        %s842 = scalar_lea.vmem %s12, %s841
        %p843 = scmp.lt.s32.totalorder %s39, 1
        %s844 = scalar_select %p843, %s39, 1
        %s845 = smul.addr %s844, 4
        %s846 = smul.addr %s845, 4
        %s847 = scalar_lea.vmem %s13, %s846
        %p848 = scmp.lt.s32.totalorder %s39, 1
        %s849 = scalar_select %p848, %s39, 1
        %s850 = scalar_lea.vmem %s14, %s849
        %p851 = scmp.lt.s32.totalorder %s39, 1
        %s852 = scalar_select %p851, %s39, 1
        %s853 = smul.addr %s852, 8
        %s854 = smul.addr %s853, 4
        %s855 = scalar_lea.vmem %s15, %s854
        %p856 = scmp.lt.s32.totalorder %s39, 1
        %s857 = scalar_select %p856, %s39, 1
        %s858 = scalar_lea.vmem %s16, %s857
        %p859 = scmp.lt.s32.totalorder %s39, 1
        %s860 = scalar_select %p859, %s39, 1
        %s861 = scalar_lea.vmem %s17, %s860
        %p863 = scmp.eq.s32.totalorder %s39, 0
        // Predicated region
        $region101: #{tpu_custom_call.1} parent=99 // pred_check
          %p864 = pneg %p863
        $region102: #{tpu_custom_call.1} parent=99 // pred_check_branch
          %866 = sbr.rel (%p864) target = $region104
        $region103: #{tpu_custom_call.1} parent=99 // pred_region
          %v867 = vld [vmem:[%s810] sm:$0xff]
          %v868 = vld [vmem:[%s810 + $0x8] sm:$0xff]
          %v869 = vpack.c.bf16 %v868, %v867
          %v870 = vld [vmem:[%s1] sm:$0x3]
          %v871 = vld [vmem:[%s2] sm:$0x1]
          %v873 = vlaneseq
          %v874 = vshrl.u32 %v873, 7
          %v875 = vsub.s32 0, %v874
          %v876 = vrot.slane %v871, %v875
          %vm878 = vcmask 31744
          %v880 = vsel %vm878, %v869, 0
          %vm882 = vcmask 1041408
          %v884 = vsel %vm882, %v870, 0
          %886 = vmatprep.subr.bf16.mxu0 0
          %887 = vmatpush1.bf16.msra.mxu0 %v884
          %888 = vmatprep.subr.bf16.mxu0 0
          %889 = vmatpush1.bf16.msra.mxu0 0
          %890 = vmatprep.subr.bf16.mxu0 0
          %891 = vmatpush1.bf16.msra.mxu0 0
          %892 = vmatprep.subr.bf16.mxu0 0
          %893 = vmatpush1.bf16.msra.mxu0 0
          %894 = vmatprep.subr.bf16.mxu0 0
          %895 = vmatpush1.bf16.msra.mxu0 0
          %896 = vmatprep.subr.bf16.mxu0 0
          %897 = vmatpush1.bf16.msra.mxu0 0
          %898 = vmatprep.subr.bf16.mxu0 0
          %899 = vmatpush1.bf16.msra.mxu0 0
          %900 = vmatprep.subr.bf16.mxu0 0
          %901 = vmatpush1.bf16.msra.mxu0 0
          %902 = vmatprep.subr.bf16.mxu0 0
          %903 = vmatpush1.bf16.msra.mxu0 0
          %904 = vmatprep.subr.bf16.mxu0 0
          %905 = vmatpush1.bf16.msra.mxu0 0
          %906 = vmatprep.subr.bf16.mxu0 0
          %907 = vmatpush1.bf16.msra.mxu0 0
          %908 = vmatprep.subr.bf16.mxu0 0
          %909 = vmatpush1.bf16.msra.mxu0 0
          %910 = vmatprep.subr.bf16.mxu0 0
          %911 = vmatpush1.bf16.msra.mxu0 0
          %912 = vmatprep.subr.bf16.mxu0 0
          %913 = vmatpush1.bf16.msra.mxu0 0
          %914 = vmatprep.subr.bf16.mxu0 0
          %915 = vmatpush1.bf16.msra.mxu0 0
          %916 = vmatprep.subr.bf16.mxu0 0
          %917 = vmatpush1.bf16.msra.mxu0 0
          %918 = vmatprep.mubr.bf16.mxu0 0
          %919 = vmatmul.mubr.bf16.gmra.mrb[0].mxu0 %v880
          %v920 = vpop.f32.mrb[0].mxu0
          %v921 = vadd.f32 %v876, %v920
          %v922 = vpop.f32.mrb[0].mxu0
          %v923 = vpop.f32.mrb[0].mxu0
          %v924 = vadd.f32 %v876, %v923
          %v925 = vpop.f32.mrb[0].mxu0
          %926 = vdwg.mxu0
          %v927 = vld [vmem:[%s3] sm:$0xff]
          %v928 = vadd.f32 %v921, %v927
          %v929 = vadd.f32 %v924, %v927
          %vm930 = vcmask 261120
          %931 = vst.msk [vmem:[#allocation2] sm:$0xff] %vm930, %v928
          %932 = vst.msk [vmem:[#allocation2 + $0x8] sm:$0xff] %vm930, %v929
        $region104: #{tpu_custom_call.1} parent=99 // pred_fallthru
          _
        %v933 = vld [vmem:[#allocation2] sm:$0xff]
        %v934 = vld [vmem:[#allocation2 + $0x8] sm:$0xff]
        %v935 = vld [vmem:[%s814] sm:$0x1]
        %v936 = vld [vmem:[%s817] sm:$0x1]
        %vm937 = vcmask 261120
        %v938 = vsel %vm937, %v933, 0.0
        %939 = vadd.xlane.f32.xlu0 %v938
        %v940 = vpop.xlane.xlu0 %939
        %v941 = vsel %vm937, %v934, 0.0
        %942 = vadd.xlane.f32.xlu0 %v941
        %v943 = vpop.xlane.xlu0 %942
        %v944 = vrcp.pop 32.0
        %v945 = vmul.f32 %v940, %v944
        %v946 = vmul.f32 %v943, %v944
        %v947 = vsub.f32 %v933, %v945
        %v948 = vsub.f32 %v934, %v946
        %v949 = vmul.f32 %v947, %v947
        %v950 = vmul.f32 %v948, %v948
        %v951 = vsel %vm937, %v949, 0.0
        %952 = vadd.xlane.f32.xlu0 %v951
        %v953 = vpop.xlane.xlu0 %952
        %v954 = vsel %vm937, %v950, 0.0
        %955 = vadd.xlane.f32.xlu0 %v954
        %v956 = vpop.xlane.xlu0 %955
        %v957 = vmul.f32 %v953, %v944
        %v958 = vmul.f32 %v956, %v944
        %v959 = vadd.f32 %v957, 1e-05
        %v960 = vadd.f32 %v958, 1e-05
        %v961 = vrsqrt.pop %v959
        %v962 = vrsqrt.pop %v960
        %v963 = vmul.f32 %v947, %v961
        %v964 = vmul.f32 %v948, %v962
        %v966 = vlaneseq
        %v967 = vshrl.u32 %v966, 7
        %v968 = vsub.s32 0, %v967
        %v969 = vrot.slane %v935, %v968
        %v971 = vmul.f32 %v963, %v969
        %v972 = vmul.f32 %v964, %v969
        %v974 = vlaneseq
        %v975 = vshrl.u32 %v974, 7
        %v976 = vsub.s32 0, %v975
        %v977 = vrot.slane %v936, %v976
        %v979 = vadd.f32 %v971, %v977
        %v980 = vadd.f32 %v972, %v977
        %v981 = vpack.c.bf16 %v980, %v979
        %v982 = vld [vmem:[%s822] sm:$0xf]
        %v983 = vld [vmem:[%s822 + $0x4] sm:$0xf]
        %v984 = vld [vmem:[%s822 + $0x8] sm:$0xf]
        %v985 = vld [vmem:[%s822 + $0xc] sm:$0xf]
        %v986 = vld [vmem:[%s825] sm:$0x1]
        %v988 = vlaneseq
        %v989 = vshrl.u32 %v988, 7
        %v990 = vsub.s32 0, %v989
        %v991 = vrot.slane %v986, %v990
        %v997 = vunpack.c.l.b16 %v982
        %v998 = vunpack.c.l.b16 %v983
        %v999 = vunpack.c.l.b16 %v984
        %v1000 = vunpack.c.l.b16 %v985
        %v1001 = vpack.c.b16 %v998, %v997
        %v1002 = vpack.c.b16 %v1000, %v999
        %v1006 = vsel %vm937, %v981, 0
        %1008 = vmatprep.subr.bf16.mxu0 0
        %1009 = vmatpush1.bf16.msra.mxu0 %v1001
        %1010 = vmatprep.subr.bf16.mxu0 0
        %1011 = vmatpush1.bf16.msra.mxu0 %v1002
        %1012 = vmatprep.subr.bf16.mxu0 0
        %1013 = vmatpush1.bf16.msra.mxu0 0
        %1014 = vmatprep.subr.bf16.mxu0 0
        %1015 = vmatpush1.bf16.msra.mxu0 0
        %1016 = vmatprep.subr.bf16.mxu0 0
        %1017 = vmatpush1.bf16.msra.mxu0 0
        %1018 = vmatprep.subr.bf16.mxu0 0
        %1019 = vmatpush1.bf16.msra.mxu0 0
        %1020 = vmatprep.subr.bf16.mxu0 0
        %1021 = vmatpush1.bf16.msra.mxu0 0
        %1022 = vmatprep.subr.bf16.mxu0 0
        %1023 = vmatpush1.bf16.msra.mxu0 0
        %1024 = vmatprep.subr.bf16.mxu0 0
        %1025 = vmatpush1.bf16.msra.mxu0 0
        %1026 = vmatprep.subr.bf16.mxu0 0
        %1027 = vmatpush1.bf16.msra.mxu0 0
        %1028 = vmatprep.subr.bf16.mxu0 0
        %1029 = vmatpush1.bf16.msra.mxu0 0
        %1030 = vmatprep.subr.bf16.mxu0 0
        %1031 = vmatpush1.bf16.msra.mxu0 0
        %1032 = vmatprep.subr.bf16.mxu0 0
        %1033 = vmatpush1.bf16.msra.mxu0 0
        %1034 = vmatprep.subr.bf16.mxu0 0
        %1035 = vmatpush1.bf16.msra.mxu0 0
        %1036 = vmatprep.subr.bf16.mxu0 0
        %1037 = vmatpush1.bf16.msra.mxu0 0
        %1038 = vmatprep.subr.bf16.mxu0 0
        %1039 = vmatpush1.bf16.msra.mxu0 0
        %1040 = vmatprep.mubr.bf16.mxu0 0
        %1041 = vmatmul.mubr.bf16.gmra.mrb[0].mxu0 %v1006
        %v1042 = vpop.f32.mrb[0].mxu0
        %v1043 = vadd.f32 %v991, %v1042
        %v1044 = vpop.f32.mrb[0].mxu0
        %v1045 = vpop.f32.mrb[0].mxu0
        %v1046 = vadd.f32 %v991, %v1045
        %v1047 = vpop.f32.mrb[0].mxu0
        %1048 = vdwg.mxu0
        %v1049 = vmul.f32 %v1043, 0.35355338
        %v1050 = vmul.f32 %v1046, 0.35355338
        %v1051 = vpack.c.bf16 %v1049, %v1049
        %v1052 = vpack.c.bf16 %v1050, %v1050
        %v1053 = vpack.c.bf16 %v1043, %v1043
        %v1054 = vpack.c.bf16 %v1046, %v1046
        %v1055 = vlaneseq
        %v1056 = vand.u32 %v1055, 127
        %vm1057 = vcmp.lt.s32.totalorder %v1056, 7
        %1059 = vrot.lane.b32.xlu0 %v1053, 96
        %v1060 = vpop.permute.xlu0 %1059
        %vm1061 = vcmask 64512
        %v1063 = vsel %vm1061, %v1051, 0
        %v1066 = vsel %vm1061, %v1060, 0
        %1068 = vmatprep.subr.bf16.mxu0 0
        %1069 = vmatpush1.bf16.xpose.msra.mxu0 %v1066
        %1070 = vmatprep.subr.bf16.mxu0 0
        %1071 = vmatpush1.bf16.xpose.msra.mxu0 0
        %1072 = vmatprep.subr.bf16.mxu0 0
        %1073 = vmatpush1.bf16.xpose.msra.mxu0 0
        %1074 = vmatprep.subr.bf16.mxu0 0
        %1075 = vmatpush1.bf16.xpose.msra.mxu0 0
        %1076 = vmatprep.subr.bf16.mxu0 0
        %1077 = vmatpush1.bf16.xpose.msra.mxu0 0
        %1078 = vmatprep.subr.bf16.mxu0 0
        %1079 = vmatpush1.bf16.xpose.msra.mxu0 0
        %1080 = vmatprep.subr.bf16.mxu0 0
        %1081 = vmatpush1.bf16.xpose.msra.mxu0 0
        %1082 = vmatprep.subr.bf16.mxu0 0
        %1083 = vmatpush1.bf16.xpose.msra.mxu0 0
        %1084 = vmatprep.subr.bf16.mxu0 0
        %1085 = vmatpush1.bf16.xpose.msra.mxu0 0
        %1086 = vmatprep.subr.bf16.mxu0 0
        %1087 = vmatpush1.bf16.xpose.msra.mxu0 0
        %1088 = vmatprep.subr.bf16.mxu0 0
        %1089 = vmatpush1.bf16.xpose.msra.mxu0 0
        %1090 = vmatprep.subr.bf16.mxu0 0
        %1091 = vmatpush1.bf16.xpose.msra.mxu0 0
        %1092 = vmatprep.subr.bf16.mxu0 0
        %1093 = vmatpush1.bf16.xpose.msra.mxu0 0
        %1094 = vmatprep.subr.bf16.mxu0 0
        %1095 = vmatpush1.bf16.xpose.msra.mxu0 0
        %1096 = vmatprep.subr.bf16.mxu0 0
        %1097 = vmatpush1.bf16.xpose.msra.mxu0 0
        %1098 = vmatprep.subr.bf16.mxu0 0
        %1099 = vmatpush1.bf16.xpose.msra.mxu0 0
        %1100 = vmatprep.mubr.bf16.mxu0 0
        %1101 = vmatmul.mubr.bf16.gmra.mrb[0].mxu0 %v1063
        %v1102 = vpop.f32.mrb[0].mxu0
        %v1103 = vadd.f32 0.0, %v1102
        %v1104 = vpop.f32.mrb[0].mxu0
        %v1105 = vpop.f32.mrb[0].mxu0
        %v1106 = vpop.f32.mrb[0].mxu0
        %1107 = vdwg.mxu0
        %1109 = vrot.lane.b32.xlu0 %v1054, 96
        %v1110 = vpop.permute.xlu0 %1109
        %v1112 = vsel %vm1061, %v1052, 0
        %v1115 = vsel %vm1061, %v1110, 0
        %1117 = vmatprep.subr.bf16.mxu0 0
        %1118 = vmatpush1.bf16.xpose.msra.mxu0 %v1115
        %1119 = vmatprep.subr.bf16.mxu0 0
        %1120 = vmatpush1.bf16.xpose.msra.mxu0 0
        %1121 = vmatprep.subr.bf16.mxu0 0
        %1122 = vmatpush1.bf16.xpose.msra.mxu0 0
        %1123 = vmatprep.subr.bf16.mxu0 0
        %1124 = vmatpush1.bf16.xpose.msra.mxu0 0
        %1125 = vmatprep.subr.bf16.mxu0 0
        %1126 = vmatpush1.bf16.xpose.msra.mxu0 0
        %1127 = vmatprep.subr.bf16.mxu0 0
        %1128 = vmatpush1.bf16.xpose.msra.mxu0 0
        %1129 = vmatprep.subr.bf16.mxu0 0
        %1130 = vmatpush1.bf16.xpose.msra.mxu0 0
        %1131 = vmatprep.subr.bf16.mxu0 0
        %1132 = vmatpush1.bf16.xpose.msra.mxu0 0
        %1133 = vmatprep.subr.bf16.mxu0 0
        %1134 = vmatpush1.bf16.xpose.msra.mxu0 0
        %1135 = vmatprep.subr.bf16.mxu0 0
        %1136 = vmatpush1.bf16.xpose.msra.mxu0 0
        %1137 = vmatprep.subr.bf16.mxu0 0
        %1138 = vmatpush1.bf16.xpose.msra.mxu0 0
        %1139 = vmatprep.subr.bf16.mxu0 0
        %1140 = vmatpush1.bf16.xpose.msra.mxu0 0
        %1141 = vmatprep.subr.bf16.mxu0 0
        %1142 = vmatpush1.bf16.xpose.msra.mxu0 0
        %1143 = vmatprep.subr.bf16.mxu0 0
        %1144 = vmatpush1.bf16.xpose.msra.mxu0 0
        %1145 = vmatprep.subr.bf16.mxu0 0
        %1146 = vmatpush1.bf16.xpose.msra.mxu0 0
        %1147 = vmatprep.subr.bf16.mxu0 0
        %1148 = vmatpush1.bf16.xpose.msra.mxu0 0
        %1149 = vmatprep.mubr.bf16.mxu0 0
        %1150 = vmatmul.mubr.bf16.gmra.mrb[0].mxu0 %v1112
        %v1151 = vpop.f32.mrb[0].mxu0
        %v1152 = vadd.f32 0.0, %v1151
        %v1153 = vpop.f32.mrb[0].mxu0
        %v1154 = vpop.f32.mrb[0].mxu0
        %v1155 = vpop.f32.mrb[0].mxu0
        %1156 = vdwg.mxu0
        %v1157 = vsel %vm1057, %v1103, -1e+30
        %v1158 = vsel %vm1057, %v1152, -1e+30
        %v1159 = vsel %vm1061, %v1157, -inf
        %1160 = vmax.xlane.f32.xlu0 %v1159
        %v1161 = vpop.xlane.xlu0 %1160
        %v1162 = vsel %vm1061, %v1158, -inf
        %1163 = vmax.xlane.f32.xlu0 %v1162
        %v1164 = vpop.xlane.xlu0 %1163
        %v1165 = vsub.f32 %v1157, %v1161
        %v1166 = vsub.f32 %v1158, %v1164
        %v1167 = vmul.f32 %v1165, 1.442695
        %v1168 = vpow.pop %v1167
        %v1169 = vmul.f32 %v1166, 1.442695
        %v1170 = vpow.pop %v1169
        %v1171 = vsel %vm1061, %v1168, 0.0
        %1172 = vadd.xlane.f32.xlu0 %v1171
        %v1173 = vpop.xlane.xlu0 %1172
        %v1174 = vsel %vm1061, %v1170, 0.0
        %1175 = vadd.xlane.f32.xlu0 %v1174
        %v1176 = vpop.xlane.xlu0 %1175
        %v1177 = vrcp.pop %v1173
        %v1178 = vrcp.pop %v1176
        %v1179 = vmul.f32 %v1168, %v1177
        %v1180 = vmul.f32 %v1170, %v1178
        %v1181 = vpack.c.bf16 %v1179, %v1179
        %v1182 = vpack.c.bf16 %v1180, %v1180
        %1183 = vrot.lane.b32.xlu0 %v1053, 64
        %v1184 = vpop.permute.xlu0 %1183
        %v1186 = vsel %vm1061, %v1181, 0
        %vm1188 = vcmask 1043456
        %v1190 = vsel %vm1188, %v1184, 0
        %1192 = vmatprep.subr.bf16.mxu0 0
        %1193 = vmatpush1.bf16.msra.mxu0 %v1190
        %1194 = vmatprep.subr.bf16.mxu0 0
        %1195 = vmatpush1.bf16.msra.mxu0 0
        %1196 = vmatprep.subr.bf16.mxu0 0
        %1197 = vmatpush1.bf16.msra.mxu0 0
        %1198 = vmatprep.subr.bf16.mxu0 0
        %1199 = vmatpush1.bf16.msra.mxu0 0
        %1200 = vmatprep.subr.bf16.mxu0 0
        %1201 = vmatpush1.bf16.msra.mxu0 0
        %1202 = vmatprep.subr.bf16.mxu0 0
        %1203 = vmatpush1.bf16.msra.mxu0 0
        %1204 = vmatprep.subr.bf16.mxu0 0
        %1205 = vmatpush1.bf16.msra.mxu0 0
        %1206 = vmatprep.subr.bf16.mxu0 0
        %1207 = vmatpush1.bf16.msra.mxu0 0
        %1208 = vmatprep.subr.bf16.mxu0 0
        %1209 = vmatpush1.bf16.msra.mxu0 0
        %1210 = vmatprep.subr.bf16.mxu0 0
        %1211 = vmatpush1.bf16.msra.mxu0 0
        %1212 = vmatprep.subr.bf16.mxu0 0
        %1213 = vmatpush1.bf16.msra.mxu0 0
        %1214 = vmatprep.subr.bf16.mxu0 0
        %1215 = vmatpush1.bf16.msra.mxu0 0
        %1216 = vmatprep.subr.bf16.mxu0 0
        %1217 = vmatpush1.bf16.msra.mxu0 0
        %1218 = vmatprep.subr.bf16.mxu0 0
        %1219 = vmatpush1.bf16.msra.mxu0 0
        %1220 = vmatprep.subr.bf16.mxu0 0
        %1221 = vmatpush1.bf16.msra.mxu0 0
        %1222 = vmatprep.subr.bf16.mxu0 0
        %1223 = vmatpush1.bf16.msra.mxu0 0
        %1224 = vmatprep.mubr.bf16.mxu0 0
        %1225 = vmatmul.mubr.bf16.gmra.mrb[0].mxu0 %v1186
        %v1226 = vpop.f32.mrb[0].mxu0
        %v1227 = vadd.f32 0.0, %v1226
        %v1228 = vpop.f32.mrb[0].mxu0
        %v1229 = vpop.f32.mrb[0].mxu0
        %v1230 = vpop.f32.mrb[0].mxu0
        %1231 = vdwg.mxu0
        %1232 = vrot.lane.b32.xlu0 %v1054, 64
        %v1233 = vpop.permute.xlu0 %1232
        %v1235 = vsel %vm1061, %v1182, 0
        %v1238 = vsel %vm1188, %v1233, 0
        %1240 = vmatprep.subr.bf16.mxu0 0
        %1241 = vmatpush1.bf16.msra.mxu0 %v1238
        %1242 = vmatprep.subr.bf16.mxu0 0
        %1243 = vmatpush1.bf16.msra.mxu0 0
        %1244 = vmatprep.subr.bf16.mxu0 0
        %1245 = vmatpush1.bf16.msra.mxu0 0
        %1246 = vmatprep.subr.bf16.mxu0 0
        %1247 = vmatpush1.bf16.msra.mxu0 0
        %1248 = vmatprep.subr.bf16.mxu0 0
        %1249 = vmatpush1.bf16.msra.mxu0 0
        %1250 = vmatprep.subr.bf16.mxu0 0
        %1251 = vmatpush1.bf16.msra.mxu0 0
        %1252 = vmatprep.subr.bf16.mxu0 0
        %1253 = vmatpush1.bf16.msra.mxu0 0
        %1254 = vmatprep.subr.bf16.mxu0 0
        %1255 = vmatpush1.bf16.msra.mxu0 0
        %1256 = vmatprep.subr.bf16.mxu0 0
        %1257 = vmatpush1.bf16.msra.mxu0 0
        %1258 = vmatprep.subr.bf16.mxu0 0
        %1259 = vmatpush1.bf16.msra.mxu0 0
        %1260 = vmatprep.subr.bf16.mxu0 0
        %1261 = vmatpush1.bf16.msra.mxu0 0
        %1262 = vmatprep.subr.bf16.mxu0 0
        %1263 = vmatpush1.bf16.msra.mxu0 0
        %1264 = vmatprep.subr.bf16.mxu0 0
        %1265 = vmatpush1.bf16.msra.mxu0 0
        %1266 = vmatprep.subr.bf16.mxu0 0
        %1267 = vmatpush1.bf16.msra.mxu0 0
        %1268 = vmatprep.subr.bf16.mxu0 0
        %1269 = vmatpush1.bf16.msra.mxu0 0
        %1270 = vmatprep.subr.bf16.mxu0 0
        %1271 = vmatpush1.bf16.msra.mxu0 0
        %1272 = vmatprep.mubr.bf16.mxu0 0
        %1273 = vmatmul.mubr.bf16.gmra.mrb[0].mxu0 %v1235
        %v1274 = vpop.f32.mrb[0].mxu0
        %v1275 = vadd.f32 0.0, %v1274
        %v1276 = vpop.f32.mrb[0].mxu0
        %v1277 = vpop.f32.mrb[0].mxu0
        %v1278 = vpop.f32.mrb[0].mxu0
        %1279 = vdwg.mxu0
        %1281 = vrot.lane.b32.xlu0 %v1051, 120
        %v1282 = vpop.permute.xlu0 %1281
        %1283 = vrot.lane.b32.xlu0 %v1053, 88
        %v1284 = vpop.permute.xlu0 %1283
        %v1286 = vsel %vm1061, %v1282, 0
        %v1289 = vsel %vm1061, %v1284, 0
        %1291 = vmatprep.subr.bf16.mxu0 0
        %1292 = vmatpush1.bf16.xpose.msra.mxu0 %v1289
        %1293 = vmatprep.subr.bf16.mxu0 0
        %1294 = vmatpush1.bf16.xpose.msra.mxu0 0
        %1295 = vmatprep.subr.bf16.mxu0 0
        %1296 = vmatpush1.bf16.xpose.msra.mxu0 0
        %1297 = vmatprep.subr.bf16.mxu0 0
        %1298 = vmatpush1.bf16.xpose.msra.mxu0 0
        %1299 = vmatprep.subr.bf16.mxu0 0
        %1300 = vmatpush1.bf16.xpose.msra.mxu0 0
        %1301 = vmatprep.subr.bf16.mxu0 0
        %1302 = vmatpush1.bf16.xpose.msra.mxu0 0
        %1303 = vmatprep.subr.bf16.mxu0 0
        %1304 = vmatpush1.bf16.xpose.msra.mxu0 0
        %1305 = vmatprep.subr.bf16.mxu0 0
        %1306 = vmatpush1.bf16.xpose.msra.mxu0 0
        %1307 = vmatprep.subr.bf16.mxu0 0
        %1308 = vmatpush1.bf16.xpose.msra.mxu0 0
        %1309 = vmatprep.subr.bf16.mxu0 0
        %1310 = vmatpush1.bf16.xpose.msra.mxu0 0
        %1311 = vmatprep.subr.bf16.mxu0 0
        %1312 = vmatpush1.bf16.xpose.msra.mxu0 0
        %1313 = vmatprep.subr.bf16.mxu0 0
        %1314 = vmatpush1.bf16.xpose.msra.mxu0 0
        %1315 = vmatprep.subr.bf16.mxu0 0
        %1316 = vmatpush1.bf16.xpose.msra.mxu0 0
        %1317 = vmatprep.subr.bf16.mxu0 0
        %1318 = vmatpush1.bf16.xpose.msra.mxu0 0
        %1319 = vmatprep.subr.bf16.mxu0 0
        %1320 = vmatpush1.bf16.xpose.msra.mxu0 0
        %1321 = vmatprep.subr.bf16.mxu0 0
        %1322 = vmatpush1.bf16.xpose.msra.mxu0 0
        %1323 = vmatprep.mubr.bf16.mxu0 0
        %1324 = vmatmul.mubr.bf16.gmra.mrb[0].mxu0 %v1286
        %v1325 = vpop.f32.mrb[0].mxu0
        %v1326 = vadd.f32 0.0, %v1325
        %v1327 = vpop.f32.mrb[0].mxu0
        %v1328 = vpop.f32.mrb[0].mxu0
        %v1329 = vpop.f32.mrb[0].mxu0
        %1330 = vdwg.mxu0
        %1332 = vrot.lane.b32.xlu0 %v1052, 120
        %v1333 = vpop.permute.xlu0 %1332
        %1334 = vrot.lane.b32.xlu0 %v1054, 88
        %v1335 = vpop.permute.xlu0 %1334
        %v1337 = vsel %vm1061, %v1333, 0
        %v1340 = vsel %vm1061, %v1335, 0
        %1342 = vmatprep.subr.bf16.mxu0 0
        %1343 = vmatpush1.bf16.xpose.msra.mxu0 %v1340
        %1344 = vmatprep.subr.bf16.mxu0 0
        %1345 = vmatpush1.bf16.xpose.msra.mxu0 0
        %1346 = vmatprep.subr.bf16.mxu0 0
        %1347 = vmatpush1.bf16.xpose.msra.mxu0 0
        %1348 = vmatprep.subr.bf16.mxu0 0
        %1349 = vmatpush1.bf16.xpose.msra.mxu0 0
        %1350 = vmatprep.subr.bf16.mxu0 0
        %1351 = vmatpush1.bf16.xpose.msra.mxu0 0
        %1352 = vmatprep.subr.bf16.mxu0 0
        %1353 = vmatpush1.bf16.xpose.msra.mxu0 0
        %1354 = vmatprep.subr.bf16.mxu0 0
        %1355 = vmatpush1.bf16.xpose.msra.mxu0 0
        %1356 = vmatprep.subr.bf16.mxu0 0
        %1357 = vmatpush1.bf16.xpose.msra.mxu0 0
        %1358 = vmatprep.subr.bf16.mxu0 0
        %1359 = vmatpush1.bf16.xpose.msra.mxu0 0
        %1360 = vmatprep.subr.bf16.mxu0 0
        %1361 = vmatpush1.bf16.xpose.msra.mxu0 0
        %1362 = vmatprep.subr.bf16.mxu0 0
        %1363 = vmatpush1.bf16.xpose.msra.mxu0 0
        %1364 = vmatprep.subr.bf16.mxu0 0
        %1365 = vmatpush1.bf16.xpose.msra.mxu0 0
        %1366 = vmatprep.subr.bf16.mxu0 0
        %1367 = vmatpush1.bf16.xpose.msra.mxu0 0
        %1368 = vmatprep.subr.bf16.mxu0 0
        %1369 = vmatpush1.bf16.xpose.msra.mxu0 0
        %1370 = vmatprep.subr.bf16.mxu0 0
        %1371 = vmatpush1.bf16.xpose.msra.mxu0 0
        %1372 = vmatprep.subr.bf16.mxu0 0
        %1373 = vmatpush1.bf16.xpose.msra.mxu0 0
        %1374 = vmatprep.mubr.bf16.mxu0 0
        %1375 = vmatmul.mubr.bf16.gmra.mrb[0].mxu0 %v1337
        %v1376 = vpop.f32.mrb[0].mxu0
        %v1377 = vadd.f32 0.0, %v1376
        %v1378 = vpop.f32.mrb[0].mxu0
        %v1379 = vpop.f32.mrb[0].mxu0
        %v1380 = vpop.f32.mrb[0].mxu0
        %1381 = vdwg.mxu0
        %v1382 = vsel %vm1057, %v1326, -1e+30
        %v1383 = vsel %vm1057, %v1377, -1e+30
        %v1384 = vsel %vm1061, %v1382, -inf
        %1385 = vmax.xlane.f32.xlu0 %v1384
        %v1386 = vpop.xlane.xlu0 %1385
        %v1387 = vsel %vm1061, %v1383, -inf
        %1388 = vmax.xlane.f32.xlu0 %v1387
        %v1389 = vpop.xlane.xlu0 %1388
        %v1390 = vsub.f32 %v1382, %v1386
        %v1391 = vsub.f32 %v1383, %v1389
        %v1392 = vmul.f32 %v1390, 1.442695
        %v1393 = vpow.pop %v1392
        %v1394 = vmul.f32 %v1391, 1.442695
        %v1395 = vpow.pop %v1394
        %v1396 = vsel %vm1061, %v1393, 0.0
        %1397 = vadd.xlane.f32.xlu0 %v1396
        %v1398 = vpop.xlane.xlu0 %1397
        %v1399 = vsel %vm1061, %v1395, 0.0
        %1400 = vadd.xlane.f32.xlu0 %v1399
        %v1401 = vpop.xlane.xlu0 %1400
        %v1402 = vrcp.pop %v1398
        %v1403 = vrcp.pop %v1401
        %v1404 = vmul.f32 %v1393, %v1402
        %v1405 = vmul.f32 %v1395, %v1403
        %v1406 = vpack.c.bf16 %v1404, %v1404
        %v1407 = vpack.c.bf16 %v1405, %v1405
        %1408 = vrot.lane.b32.xlu0 %v1053, 56
        %v1409 = vpop.permute.xlu0 %1408
        %v1411 = vsel %vm1061, %v1406, 0
        %v1414 = vsel %vm1188, %v1409, 0
        %1416 = vmatprep.subr.bf16.mxu0 0
        %1417 = vmatpush1.bf16.msra.mxu0 %v1414
        %1418 = vmatprep.subr.bf16.mxu0 0
        %1419 = vmatpush1.bf16.msra.mxu0 0
        %1420 = vmatprep.subr.bf16.mxu0 0
        %1421 = vmatpush1.bf16.msra.mxu0 0
        %1422 = vmatprep.subr.bf16.mxu0 0
        %1423 = vmatpush1.bf16.msra.mxu0 0
        %1424 = vmatprep.subr.bf16.mxu0 0
        %1425 = vmatpush1.bf16.msra.mxu0 0
        %1426 = vmatprep.subr.bf16.mxu0 0
        %1427 = vmatpush1.bf16.msra.mxu0 0
        %1428 = vmatprep.subr.bf16.mxu0 0
        %1429 = vmatpush1.bf16.msra.mxu0 0
        %1430 = vmatprep.subr.bf16.mxu0 0
        %1431 = vmatpush1.bf16.msra.mxu0 0
        %1432 = vmatprep.subr.bf16.mxu0 0
        %1433 = vmatpush1.bf16.msra.mxu0 0
        %1434 = vmatprep.subr.bf16.mxu0 0
        %1435 = vmatpush1.bf16.msra.mxu0 0
        %1436 = vmatprep.subr.bf16.mxu0 0
        %1437 = vmatpush1.bf16.msra.mxu0 0
        %1438 = vmatprep.subr.bf16.mxu0 0
        %1439 = vmatpush1.bf16.msra.mxu0 0
        %1440 = vmatprep.subr.bf16.mxu0 0
        %1441 = vmatpush1.bf16.msra.mxu0 0
        %1442 = vmatprep.subr.bf16.mxu0 0
        %1443 = vmatpush1.bf16.msra.mxu0 0
        %1444 = vmatprep.subr.bf16.mxu0 0
        %1445 = vmatpush1.bf16.msra.mxu0 0
        %1446 = vmatprep.subr.bf16.mxu0 0
        %1447 = vmatpush1.bf16.msra.mxu0 0
        %1448 = vmatprep.mubr.bf16.mxu0 0
        %1449 = vmatmul.mubr.bf16.gmra.mrb[0].mxu0 %v1411
        %v1450 = vpop.f32.mrb[0].mxu0
        %v1451 = vadd.f32 0.0, %v1450
        %v1452 = vpop.f32.mrb[0].mxu0
        %v1453 = vpop.f32.mrb[0].mxu0
        %v1454 = vpop.f32.mrb[0].mxu0
        %1455 = vdwg.mxu0
        %1456 = vrot.lane.b32.xlu0 %v1054, 56
        %v1457 = vpop.permute.xlu0 %1456
        %v1459 = vsel %vm1061, %v1407, 0
        %v1462 = vsel %vm1188, %v1457, 0
        %1464 = vmatprep.subr.bf16.mxu0 0
        %1465 = vmatpush1.bf16.msra.mxu0 %v1462
        %1466 = vmatprep.subr.bf16.mxu0 0
        %1467 = vmatpush1.bf16.msra.mxu0 0
        %1468 = vmatprep.subr.bf16.mxu0 0
        %1469 = vmatpush1.bf16.msra.mxu0 0
        %1470 = vmatprep.subr.bf16.mxu0 0
        %1471 = vmatpush1.bf16.msra.mxu0 0
        %1472 = vmatprep.subr.bf16.mxu0 0
        %1473 = vmatpush1.bf16.msra.mxu0 0
        %1474 = vmatprep.subr.bf16.mxu0 0
        %1475 = vmatpush1.bf16.msra.mxu0 0
        %1476 = vmatprep.subr.bf16.mxu0 0
        %1477 = vmatpush1.bf16.msra.mxu0 0
        %1478 = vmatprep.subr.bf16.mxu0 0
        %1479 = vmatpush1.bf16.msra.mxu0 0
        %1480 = vmatprep.subr.bf16.mxu0 0
        %1481 = vmatpush1.bf16.msra.mxu0 0
        %1482 = vmatprep.subr.bf16.mxu0 0
        %1483 = vmatpush1.bf16.msra.mxu0 0
        %1484 = vmatprep.subr.bf16.mxu0 0
        %1485 = vmatpush1.bf16.msra.mxu0 0
        %1486 = vmatprep.subr.bf16.mxu0 0
        %1487 = vmatpush1.bf16.msra.mxu0 0
        %1488 = vmatprep.subr.bf16.mxu0 0
        %1489 = vmatpush1.bf16.msra.mxu0 0
        %1490 = vmatprep.subr.bf16.mxu0 0
        %1491 = vmatpush1.bf16.msra.mxu0 0
        %1492 = vmatprep.subr.bf16.mxu0 0
        %1493 = vmatpush1.bf16.msra.mxu0 0
        %1494 = vmatprep.subr.bf16.mxu0 0
        %1495 = vmatpush1.bf16.msra.mxu0 0
        %1496 = vmatprep.mubr.bf16.mxu0 0
        %1497 = vmatmul.mubr.bf16.gmra.mrb[0].mxu0 %v1459
        %v1498 = vpop.f32.mrb[0].mxu0
        %v1499 = vadd.f32 0.0, %v1498
        %v1500 = vpop.f32.mrb[0].mxu0
        %v1501 = vpop.f32.mrb[0].mxu0
        %v1502 = vpop.f32.mrb[0].mxu0
        %1503 = vdwg.mxu0
        %1504 = vrot.lane.b32.xlu0 %v1051, 112
        %v1505 = vpop.permute.xlu0 %1504
        %1506 = vrot.lane.b32.xlu0 %v1053, 80
        %v1507 = vpop.permute.xlu0 %1506
        %v1509 = vsel %vm1061, %v1505, 0
        %v1512 = vsel %vm1061, %v1507, 0
        %1514 = vmatprep.subr.bf16.mxu0 0
        %1515 = vmatpush1.bf16.xpose.msra.mxu0 %v1512
        %1516 = vmatprep.subr.bf16.mxu0 0
        %1517 = vmatpush1.bf16.xpose.msra.mxu0 0
        %1518 = vmatprep.subr.bf16.mxu0 0
        %1519 = vmatpush1.bf16.xpose.msra.mxu0 0
        %1520 = vmatprep.subr.bf16.mxu0 0
        %1521 = vmatpush1.bf16.xpose.msra.mxu0 0
        %1522 = vmatprep.subr.bf16.mxu0 0
        %1523 = vmatpush1.bf16.xpose.msra.mxu0 0
        %1524 = vmatprep.subr.bf16.mxu0 0
        %1525 = vmatpush1.bf16.xpose.msra.mxu0 0
        %1526 = vmatprep.subr.bf16.mxu0 0
        %1527 = vmatpush1.bf16.xpose.msra.mxu0 0
        %1528 = vmatprep.subr.bf16.mxu0 0
        %1529 = vmatpush1.bf16.xpose.msra.mxu0 0
        %1530 = vmatprep.subr.bf16.mxu0 0
        %1531 = vmatpush1.bf16.xpose.msra.mxu0 0
        %1532 = vmatprep.subr.bf16.mxu0 0
        %1533 = vmatpush1.bf16.xpose.msra.mxu0 0
        %1534 = vmatprep.subr.bf16.mxu0 0
        %1535 = vmatpush1.bf16.xpose.msra.mxu0 0
        %1536 = vmatprep.subr.bf16.mxu0 0
        %1537 = vmatpush1.bf16.xpose.msra.mxu0 0
        %1538 = vmatprep.subr.bf16.mxu0 0
        %1539 = vmatpush1.bf16.xpose.msra.mxu0 0
        %1540 = vmatprep.subr.bf16.mxu0 0
        %1541 = vmatpush1.bf16.xpose.msra.mxu0 0
        %1542 = vmatprep.subr.bf16.mxu0 0
        %1543 = vmatpush1.bf16.xpose.msra.mxu0 0
        %1544 = vmatprep.subr.bf16.mxu0 0
        %1545 = vmatpush1.bf16.xpose.msra.mxu0 0
        %1546 = vmatprep.mubr.bf16.mxu0 0
        %1547 = vmatmul.mubr.bf16.gmra.mrb[0].mxu0 %v1509
        %v1548 = vpop.f32.mrb[0].mxu0
        %v1549 = vadd.f32 0.0, %v1548
        %v1550 = vpop.f32.mrb[0].mxu0
        %v1551 = vpop.f32.mrb[0].mxu0
        %v1552 = vpop.f32.mrb[0].mxu0
        %1553 = vdwg.mxu0
        %1554 = vrot.lane.b32.xlu0 %v1052, 112
        %v1555 = vpop.permute.xlu0 %1554
        %1556 = vrot.lane.b32.xlu0 %v1054, 80
        %v1557 = vpop.permute.xlu0 %1556
        %v1559 = vsel %vm1061, %v1555, 0
        %v1562 = vsel %vm1061, %v1557, 0
        %1564 = vmatprep.subr.bf16.mxu0 0
        %1565 = vmatpush1.bf16.xpose.msra.mxu0 %v1562
        %1566 = vmatprep.subr.bf16.mxu0 0
        %1567 = vmatpush1.bf16.xpose.msra.mxu0 0
        %1568 = vmatprep.subr.bf16.mxu0 0
        %1569 = vmatpush1.bf16.xpose.msra.mxu0 0
        %1570 = vmatprep.subr.bf16.mxu0 0
        %1571 = vmatpush1.bf16.xpose.msra.mxu0 0
        %1572 = vmatprep.subr.bf16.mxu0 0
        %1573 = vmatpush1.bf16.xpose.msra.mxu0 0
        %1574 = vmatprep.subr.bf16.mxu0 0
        %1575 = vmatpush1.bf16.xpose.msra.mxu0 0
        %1576 = vmatprep.subr.bf16.mxu0 0
        %1577 = vmatpush1.bf16.xpose.msra.mxu0 0
        %1578 = vmatprep.subr.bf16.mxu0 0
        %1579 = vmatpush1.bf16.xpose.msra.mxu0 0
        %1580 = vmatprep.subr.bf16.mxu0 0
        %1581 = vmatpush1.bf16.xpose.msra.mxu0 0
        %1582 = vmatprep.subr.bf16.mxu0 0
        %1583 = vmatpush1.bf16.xpose.msra.mxu0 0
        %1584 = vmatprep.subr.bf16.mxu0 0
        %1585 = vmatpush1.bf16.xpose.msra.mxu0 0
        %1586 = vmatprep.subr.bf16.mxu0 0
        %1587 = vmatpush1.bf16.xpose.msra.mxu0 0
        %1588 = vmatprep.subr.bf16.mxu0 0
        %1589 = vmatpush1.bf16.xpose.msra.mxu0 0
        %1590 = vmatprep.subr.bf16.mxu0 0
        %1591 = vmatpush1.bf16.xpose.msra.mxu0 0
        %1592 = vmatprep.subr.bf16.mxu0 0
        %1593 = vmatpush1.bf16.xpose.msra.mxu0 0
        %1594 = vmatprep.subr.bf16.mxu0 0
        %1595 = vmatpush1.bf16.xpose.msra.mxu0 0
        %1596 = vmatprep.mubr.bf16.mxu0 0
        %1597 = vmatmul.mubr.bf16.gmra.mrb[0].mxu0 %v1559
        %v1598 = vpop.f32.mrb[0].mxu0
        %v1599 = vadd.f32 0.0, %v1598
        %v1600 = vpop.f32.mrb[0].mxu0
        %v1601 = vpop.f32.mrb[0].mxu0
        %v1602 = vpop.f32.mrb[0].mxu0
        %1603 = vdwg.mxu0
        %v1604 = vsel %vm1057, %v1549, -1e+30
        %v1605 = vsel %vm1057, %v1599, -1e+30
        %v1606 = vsel %vm1061, %v1604, -inf
        %1607 = vmax.xlane.f32.xlu0 %v1606
        %v1608 = vpop.xlane.xlu0 %1607
        %v1609 = vsel %vm1061, %v1605, -inf
        %1610 = vmax.xlane.f32.xlu0 %v1609
        %v1611 = vpop.xlane.xlu0 %1610
        %v1612 = vsub.f32 %v1604, %v1608
        %v1613 = vsub.f32 %v1605, %v1611
        %v1614 = vmul.f32 %v1612, 1.442695
        %v1615 = vpow.pop %v1614
        %v1616 = vmul.f32 %v1613, 1.442695
        %v1617 = vpow.pop %v1616
        %v1618 = vsel %vm1061, %v1615, 0.0
        %1619 = vadd.xlane.f32.xlu0 %v1618
        %v1620 = vpop.xlane.xlu0 %1619
        %v1621 = vsel %vm1061, %v1617, 0.0
        %1622 = vadd.xlane.f32.xlu0 %v1621
        %v1623 = vpop.xlane.xlu0 %1622
        %v1624 = vrcp.pop %v1620
        %v1625 = vrcp.pop %v1623
        %v1626 = vmul.f32 %v1615, %v1624
        %v1627 = vmul.f32 %v1617, %v1625
        %v1628 = vpack.c.bf16 %v1626, %v1626
        %v1629 = vpack.c.bf16 %v1627, %v1627
        %1630 = vrot.lane.b32.xlu0 %v1053, 48
        %v1631 = vpop.permute.xlu0 %1630
        %v1633 = vsel %vm1061, %v1628, 0
        %v1636 = vsel %vm1188, %v1631, 0
        %1638 = vmatprep.subr.bf16.mxu0 0
        %1639 = vmatpush1.bf16.msra.mxu0 %v1636
        %1640 = vmatprep.subr.bf16.mxu0 0
        %1641 = vmatpush1.bf16.msra.mxu0 0
        %1642 = vmatprep.subr.bf16.mxu0 0
        %1643 = vmatpush1.bf16.msra.mxu0 0
        %1644 = vmatprep.subr.bf16.mxu0 0
        %1645 = vmatpush1.bf16.msra.mxu0 0
        %1646 = vmatprep.subr.bf16.mxu0 0
        %1647 = vmatpush1.bf16.msra.mxu0 0
        %1648 = vmatprep.subr.bf16.mxu0 0
        %1649 = vmatpush1.bf16.msra.mxu0 0
        %1650 = vmatprep.subr.bf16.mxu0 0
        %1651 = vmatpush1.bf16.msra.mxu0 0
        %1652 = vmatprep.subr.bf16.mxu0 0
        %1653 = vmatpush1.bf16.msra.mxu0 0
        %1654 = vmatprep.subr.bf16.mxu0 0
        %1655 = vmatpush1.bf16.msra.mxu0 0
        %1656 = vmatprep.subr.bf16.mxu0 0
        %1657 = vmatpush1.bf16.msra.mxu0 0
        %1658 = vmatprep.subr.bf16.mxu0 0
        %1659 = vmatpush1.bf16.msra.mxu0 0
        %1660 = vmatprep.subr.bf16.mxu0 0
        %1661 = vmatpush1.bf16.msra.mxu0 0
        %1662 = vmatprep.subr.bf16.mxu0 0
        %1663 = vmatpush1.bf16.msra.mxu0 0
        %1664 = vmatprep.subr.bf16.mxu0 0
        %1665 = vmatpush1.bf16.msra.mxu0 0
        %1666 = vmatprep.subr.bf16.mxu0 0
        %1667 = vmatpush1.bf16.msra.mxu0 0
        %1668 = vmatprep.subr.bf16.mxu0 0
        %1669 = vmatpush1.bf16.msra.mxu0 0
        %1670 = vmatprep.mubr.bf16.mxu0 0
        %1671 = vmatmul.mubr.bf16.gmra.mrb[0].mxu0 %v1633
        %v1672 = vpop.f32.mrb[0].mxu0
        %v1673 = vadd.f32 0.0, %v1672
        %v1674 = vpop.f32.mrb[0].mxu0
        %v1675 = vpop.f32.mrb[0].mxu0
        %v1676 = vpop.f32.mrb[0].mxu0
        %1677 = vdwg.mxu0
        %1678 = vrot.lane.b32.xlu0 %v1054, 48
        %v1679 = vpop.permute.xlu0 %1678
        %v1681 = vsel %vm1061, %v1629, 0
        %v1684 = vsel %vm1188, %v1679, 0
        %1686 = vmatprep.subr.bf16.mxu0 0
        %1687 = vmatpush1.bf16.msra.mxu0 %v1684
        %1688 = vmatprep.subr.bf16.mxu0 0
        %1689 = vmatpush1.bf16.msra.mxu0 0
        %1690 = vmatprep.subr.bf16.mxu0 0
        %1691 = vmatpush1.bf16.msra.mxu0 0
        %1692 = vmatprep.subr.bf16.mxu0 0
        %1693 = vmatpush1.bf16.msra.mxu0 0
        %1694 = vmatprep.subr.bf16.mxu0 0
        %1695 = vmatpush1.bf16.msra.mxu0 0
        %1696 = vmatprep.subr.bf16.mxu0 0
        %1697 = vmatpush1.bf16.msra.mxu0 0
        %1698 = vmatprep.subr.bf16.mxu0 0
        %1699 = vmatpush1.bf16.msra.mxu0 0
        %1700 = vmatprep.subr.bf16.mxu0 0
        %1701 = vmatpush1.bf16.msra.mxu0 0
        %1702 = vmatprep.subr.bf16.mxu0 0
        %1703 = vmatpush1.bf16.msra.mxu0 0
        %1704 = vmatprep.subr.bf16.mxu0 0
        %1705 = vmatpush1.bf16.msra.mxu0 0
        %1706 = vmatprep.subr.bf16.mxu0 0
        %1707 = vmatpush1.bf16.msra.mxu0 0
        %1708 = vmatprep.subr.bf16.mxu0 0
        %1709 = vmatpush1.bf16.msra.mxu0 0
        %1710 = vmatprep.subr.bf16.mxu0 0
        %1711 = vmatpush1.bf16.msra.mxu0 0
        %1712 = vmatprep.subr.bf16.mxu0 0
        %1713 = vmatpush1.bf16.msra.mxu0 0
        %1714 = vmatprep.subr.bf16.mxu0 0
        %1715 = vmatpush1.bf16.msra.mxu0 0
        %1716 = vmatprep.subr.bf16.mxu0 0
        %1717 = vmatpush1.bf16.msra.mxu0 0
        %1718 = vmatprep.mubr.bf16.mxu0 0
        %1719 = vmatmul.mubr.bf16.gmra.mrb[0].mxu0 %v1681
        %v1720 = vpop.f32.mrb[0].mxu0
        %v1721 = vadd.f32 0.0, %v1720
        %v1722 = vpop.f32.mrb[0].mxu0
        %v1723 = vpop.f32.mrb[0].mxu0
        %v1724 = vpop.f32.mrb[0].mxu0
        %1725 = vdwg.mxu0
        %1726 = vrot.lane.b32.xlu0 %v1051, 104
        %v1727 = vpop.permute.xlu0 %1726
        %1728 = vrot.lane.b32.xlu0 %v1053, 72
        %v1729 = vpop.permute.xlu0 %1728
        %v1731 = vsel %vm1061, %v1727, 0
        %v1734 = vsel %vm1061, %v1729, 0
        %1736 = vmatprep.subr.bf16.mxu0 0
        %1737 = vmatpush1.bf16.xpose.msra.mxu0 %v1734
        %1738 = vmatprep.subr.bf16.mxu0 0
        %1739 = vmatpush1.bf16.xpose.msra.mxu0 0
        %1740 = vmatprep.subr.bf16.mxu0 0
        %1741 = vmatpush1.bf16.xpose.msra.mxu0 0
        %1742 = vmatprep.subr.bf16.mxu0 0
        %1743 = vmatpush1.bf16.xpose.msra.mxu0 0
        %1744 = vmatprep.subr.bf16.mxu0 0
        %1745 = vmatpush1.bf16.xpose.msra.mxu0 0
        %1746 = vmatprep.subr.bf16.mxu0 0
        %1747 = vmatpush1.bf16.xpose.msra.mxu0 0
        %1748 = vmatprep.subr.bf16.mxu0 0
        %1749 = vmatpush1.bf16.xpose.msra.mxu0 0
        %1750 = vmatprep.subr.bf16.mxu0 0
        %1751 = vmatpush1.bf16.xpose.msra.mxu0 0
        %1752 = vmatprep.subr.bf16.mxu0 0
        %1753 = vmatpush1.bf16.xpose.msra.mxu0 0
        %1754 = vmatprep.subr.bf16.mxu0 0
        %1755 = vmatpush1.bf16.xpose.msra.mxu0 0
        %1756 = vmatprep.subr.bf16.mxu0 0
        %1757 = vmatpush1.bf16.xpose.msra.mxu0 0
        %1758 = vmatprep.subr.bf16.mxu0 0
        %1759 = vmatpush1.bf16.xpose.msra.mxu0 0
        %1760 = vmatprep.subr.bf16.mxu0 0
        %1761 = vmatpush1.bf16.xpose.msra.mxu0 0
        %1762 = vmatprep.subr.bf16.mxu0 0
        %1763 = vmatpush1.bf16.xpose.msra.mxu0 0
        %1764 = vmatprep.subr.bf16.mxu0 0
        %1765 = vmatpush1.bf16.xpose.msra.mxu0 0
        %1766 = vmatprep.subr.bf16.mxu0 0
        %1767 = vmatpush1.bf16.xpose.msra.mxu0 0
        %1768 = vmatprep.mubr.bf16.mxu0 0
        %1769 = vmatmul.mubr.bf16.gmra.mrb[0].mxu0 %v1731
        %v1770 = vpop.f32.mrb[0].mxu0
        %v1771 = vadd.f32 0.0, %v1770
        %v1772 = vpop.f32.mrb[0].mxu0
        %v1773 = vpop.f32.mrb[0].mxu0
        %v1774 = vpop.f32.mrb[0].mxu0
        %1775 = vdwg.mxu0
        %1776 = vrot.lane.b32.xlu0 %v1052, 104
        %v1777 = vpop.permute.xlu0 %1776
        %1778 = vrot.lane.b32.xlu0 %v1054, 72
        %v1779 = vpop.permute.xlu0 %1778
        %v1781 = vsel %vm1061, %v1777, 0
        %v1784 = vsel %vm1061, %v1779, 0
        %1786 = vmatprep.subr.bf16.mxu0 0
        %1787 = vmatpush1.bf16.xpose.msra.mxu0 %v1784
        %1788 = vmatprep.subr.bf16.mxu0 0
        %1789 = vmatpush1.bf16.xpose.msra.mxu0 0
        %1790 = vmatprep.subr.bf16.mxu0 0
        %1791 = vmatpush1.bf16.xpose.msra.mxu0 0
        %1792 = vmatprep.subr.bf16.mxu0 0
        %1793 = vmatpush1.bf16.xpose.msra.mxu0 0
        %1794 = vmatprep.subr.bf16.mxu0 0
        %1795 = vmatpush1.bf16.xpose.msra.mxu0 0
        %1796 = vmatprep.subr.bf16.mxu0 0
        %1797 = vmatpush1.bf16.xpose.msra.mxu0 0
        %1798 = vmatprep.subr.bf16.mxu0 0
        %1799 = vmatpush1.bf16.xpose.msra.mxu0 0
        %1800 = vmatprep.subr.bf16.mxu0 0
        %1801 = vmatpush1.bf16.xpose.msra.mxu0 0
        %1802 = vmatprep.subr.bf16.mxu0 0
        %1803 = vmatpush1.bf16.xpose.msra.mxu0 0
        %1804 = vmatprep.subr.bf16.mxu0 0
        %1805 = vmatpush1.bf16.xpose.msra.mxu0 0
        %1806 = vmatprep.subr.bf16.mxu0 0
        %1807 = vmatpush1.bf16.xpose.msra.mxu0 0
        %1808 = vmatprep.subr.bf16.mxu0 0
        %1809 = vmatpush1.bf16.xpose.msra.mxu0 0
        %1810 = vmatprep.subr.bf16.mxu0 0
        %1811 = vmatpush1.bf16.xpose.msra.mxu0 0
        %1812 = vmatprep.subr.bf16.mxu0 0
        %1813 = vmatpush1.bf16.xpose.msra.mxu0 0
        %1814 = vmatprep.subr.bf16.mxu0 0
        %1815 = vmatpush1.bf16.xpose.msra.mxu0 0
        %1816 = vmatprep.subr.bf16.mxu0 0
        %1817 = vmatpush1.bf16.xpose.msra.mxu0 0
        %1818 = vmatprep.mubr.bf16.mxu0 0
        %1819 = vmatmul.mubr.bf16.gmra.mrb[0].mxu0 %v1781
        %v1820 = vpop.f32.mrb[0].mxu0
        %v1821 = vadd.f32 0.0, %v1820
        %v1822 = vpop.f32.mrb[0].mxu0
        %v1823 = vpop.f32.mrb[0].mxu0
        %v1824 = vpop.f32.mrb[0].mxu0
        %1825 = vdwg.mxu0
        %v1826 = vsel %vm1057, %v1771, -1e+30
        %v1827 = vsel %vm1057, %v1821, -1e+30
        %v1828 = vsel %vm1061, %v1826, -inf
        %1829 = vmax.xlane.f32.xlu0 %v1828
        %v1830 = vpop.xlane.xlu0 %1829
        %v1831 = vsel %vm1061, %v1827, -inf
        %1832 = vmax.xlane.f32.xlu0 %v1831
        %v1833 = vpop.xlane.xlu0 %1832
        %v1834 = vsub.f32 %v1826, %v1830
        %v1835 = vsub.f32 %v1827, %v1833
        %v1836 = vmul.f32 %v1834, 1.442695
        %v1837 = vpow.pop %v1836
        %v1838 = vmul.f32 %v1835, 1.442695
        %v1839 = vpow.pop %v1838
        %v1840 = vsel %vm1061, %v1837, 0.0
        %1841 = vadd.xlane.f32.xlu0 %v1840
        %v1842 = vpop.xlane.xlu0 %1841
        %v1843 = vsel %vm1061, %v1839, 0.0
        %1844 = vadd.xlane.f32.xlu0 %v1843
        %v1845 = vpop.xlane.xlu0 %1844
        %v1846 = vrcp.pop %v1842
        %v1847 = vrcp.pop %v1845
        %v1848 = vmul.f32 %v1837, %v1846
        %v1849 = vmul.f32 %v1839, %v1847
        %v1850 = vpack.c.bf16 %v1848, %v1848
        %v1851 = vpack.c.bf16 %v1849, %v1849
        %1852 = vrot.lane.b32.xlu0 %v1053, 40
        %v1853 = vpop.permute.xlu0 %1852
        %v1855 = vsel %vm1061, %v1850, 0
        %v1858 = vsel %vm1188, %v1853, 0
        %1860 = vmatprep.subr.bf16.mxu0 0
        %1861 = vmatpush1.bf16.msra.mxu0 %v1858
        %1862 = vmatprep.subr.bf16.mxu0 0
        %1863 = vmatpush1.bf16.msra.mxu0 0
        %1864 = vmatprep.subr.bf16.mxu0 0
        %1865 = vmatpush1.bf16.msra.mxu0 0
        %1866 = vmatprep.subr.bf16.mxu0 0
        %1867 = vmatpush1.bf16.msra.mxu0 0
        %1868 = vmatprep.subr.bf16.mxu0 0
        %1869 = vmatpush1.bf16.msra.mxu0 0
        %1870 = vmatprep.subr.bf16.mxu0 0
        %1871 = vmatpush1.bf16.msra.mxu0 0
        %1872 = vmatprep.subr.bf16.mxu0 0
        %1873 = vmatpush1.bf16.msra.mxu0 0
        %1874 = vmatprep.subr.bf16.mxu0 0
        %1875 = vmatpush1.bf16.msra.mxu0 0
        %1876 = vmatprep.subr.bf16.mxu0 0
        %1877 = vmatpush1.bf16.msra.mxu0 0
        %1878 = vmatprep.subr.bf16.mxu0 0
        %1879 = vmatpush1.bf16.msra.mxu0 0
        %1880 = vmatprep.subr.bf16.mxu0 0
        %1881 = vmatpush1.bf16.msra.mxu0 0
        %1882 = vmatprep.subr.bf16.mxu0 0
        %1883 = vmatpush1.bf16.msra.mxu0 0
        %1884 = vmatprep.subr.bf16.mxu0 0
        %1885 = vmatpush1.bf16.msra.mxu0 0
        %1886 = vmatprep.subr.bf16.mxu0 0
        %1887 = vmatpush1.bf16.msra.mxu0 0
        %1888 = vmatprep.subr.bf16.mxu0 0
        %1889 = vmatpush1.bf16.msra.mxu0 0
        %1890 = vmatprep.subr.bf16.mxu0 0
        %1891 = vmatpush1.bf16.msra.mxu0 0
        %1892 = vmatprep.mubr.bf16.mxu0 0
        %1893 = vmatmul.mubr.bf16.gmra.mrb[0].mxu0 %v1855
        %v1894 = vpop.f32.mrb[0].mxu0
        %v1895 = vadd.f32 0.0, %v1894
        %v1896 = vpop.f32.mrb[0].mxu0
        %v1897 = vpop.f32.mrb[0].mxu0
        %v1898 = vpop.f32.mrb[0].mxu0
        %1899 = vdwg.mxu0
        %1900 = vrot.lane.b32.xlu0 %v1054, 40
        %v1901 = vpop.permute.xlu0 %1900
        %v1903 = vsel %vm1061, %v1851, 0
        %v1906 = vsel %vm1188, %v1901, 0
        %1908 = vmatprep.subr.bf16.mxu0 0
        %1909 = vmatpush1.bf16.msra.mxu0 %v1906
        %1910 = vmatprep.subr.bf16.mxu0 0
        %1911 = vmatpush1.bf16.msra.mxu0 0
        %1912 = vmatprep.subr.bf16.mxu0 0
        %1913 = vmatpush1.bf16.msra.mxu0 0
        %1914 = vmatprep.subr.bf16.mxu0 0
        %1915 = vmatpush1.bf16.msra.mxu0 0
        %1916 = vmatprep.subr.bf16.mxu0 0
        %1917 = vmatpush1.bf16.msra.mxu0 0
        %1918 = vmatprep.subr.bf16.mxu0 0
        %1919 = vmatpush1.bf16.msra.mxu0 0
        %1920 = vmatprep.subr.bf16.mxu0 0
        %1921 = vmatpush1.bf16.msra.mxu0 0
        %1922 = vmatprep.subr.bf16.mxu0 0
        %1923 = vmatpush1.bf16.msra.mxu0 0
        %1924 = vmatprep.subr.bf16.mxu0 0
        %1925 = vmatpush1.bf16.msra.mxu0 0
        %1926 = vmatprep.subr.bf16.mxu0 0
        %1927 = vmatpush1.bf16.msra.mxu0 0
        %1928 = vmatprep.subr.bf16.mxu0 0
        %1929 = vmatpush1.bf16.msra.mxu0 0
        %1930 = vmatprep.subr.bf16.mxu0 0
        %1931 = vmatpush1.bf16.msra.mxu0 0
        %1932 = vmatprep.subr.bf16.mxu0 0
        %1933 = vmatpush1.bf16.msra.mxu0 0
        %1934 = vmatprep.subr.bf16.mxu0 0
        %1935 = vmatpush1.bf16.msra.mxu0 0
        %1936 = vmatprep.subr.bf16.mxu0 0
        %1937 = vmatpush1.bf16.msra.mxu0 0
        %1938 = vmatprep.subr.bf16.mxu0 0
        %1939 = vmatpush1.bf16.msra.mxu0 0
        %1940 = vmatprep.mubr.bf16.mxu0 0
        %1941 = vmatmul.mubr.bf16.gmra.mrb[0].mxu0 %v1903
        %v1942 = vpop.f32.mrb[0].mxu0
        %v1943 = vadd.f32 0.0, %v1942
        %v1944 = vpop.f32.mrb[0].mxu0
        %v1945 = vpop.f32.mrb[0].mxu0
        %v1946 = vpop.f32.mrb[0].mxu0
        %1947 = vdwg.mxu0
        %1950 = vrot.lane.b32.xlu0 %v1451, 8
        %v1951 = vpop.permute.xlu0 %1950
        %1952 = vrot.lane.b32.xlu0 %v1499, 8
        %v1953 = vpop.permute.xlu0 %1952
        %1958 = vrot.lane.b32.xlu0 %v1673, 16
        %v1959 = vpop.permute.xlu0 %1958
        %1960 = vrot.lane.b32.xlu0 %v1721, 16
        %v1961 = vpop.permute.xlu0 %1960
        %1966 = vrot.lane.b32.xlu0 %v1895, 24
        %v1967 = vpop.permute.xlu0 %1966
        %1968 = vrot.lane.b32.xlu0 %v1943, 24
        %v1969 = vpop.permute.xlu0 %1968
        %v1972 = vsel %vm1061, %v1227, %v1951
        %v1973 = vsel %vm1061, %v1275, %v1953
        %vm1974 = vcmask 130048
        %v1975 = vsel %vm1974, %v1972, %v1959
        %v1976 = vsel %vm1974, %v1973, %v1961
        %vm1977 = vcmask 195584
        %v1978 = vsel %vm1977, %v1975, %v1967
        %v1979 = vsel %vm1977, %v1976, %v1969
        %v1980 = vpack.c.bf16 %v1979, %v1978
        %v1981 = vld [vmem:[%s830] sm:$0xf]
        %v1982 = vld [vmem:[%s830 + $0x4] sm:$0xf]
        %v1983 = vld [vmem:[%s830 + $0x8] sm:$0xf]
        %v1984 = vld [vmem:[%s830 + $0xc] sm:$0xf]
        %v1985 = vld [vmem:[%s833] sm:$0x1]
        %v1987 = vlaneseq
        %v1988 = vshrl.u32 %v1987, 7
        %v1989 = vsub.s32 0, %v1988
        %v1990 = vrot.slane %v1985, %v1989
        %v1996 = vunpack.c.l.b16 %v1981
        %v1997 = vunpack.c.l.b16 %v1982
        %v1998 = vunpack.c.l.b16 %v1983
        %v1999 = vunpack.c.l.b16 %v1984
        %v2000 = vpack.c.b16 %v1997, %v1996
        %v2001 = vpack.c.b16 %v1999, %v1998
        %v2005 = vsel %vm937, %v1980, 0
        %2007 = vmatprep.subr.bf16.mxu0 0
        %2008 = vmatpush1.bf16.msra.mxu0 %v2000
        %2009 = vmatprep.subr.bf16.mxu0 0
        %2010 = vmatpush1.bf16.msra.mxu0 %v2001
        %2011 = vmatprep.subr.bf16.mxu0 0
        %2012 = vmatpush1.bf16.msra.mxu0 0
        %2013 = vmatprep.subr.bf16.mxu0 0
        %2014 = vmatpush1.bf16.msra.mxu0 0
        %2015 = vmatprep.subr.bf16.mxu0 0
        %2016 = vmatpush1.bf16.msra.mxu0 0
        %2017 = vmatprep.subr.bf16.mxu0 0
        %2018 = vmatpush1.bf16.msra.mxu0 0
        %2019 = vmatprep.subr.bf16.mxu0 0
        %2020 = vmatpush1.bf16.msra.mxu0 0
        %2021 = vmatprep.subr.bf16.mxu0 0
        %2022 = vmatpush1.bf16.msra.mxu0 0
        %2023 = vmatprep.subr.bf16.mxu0 0
        %2024 = vmatpush1.bf16.msra.mxu0 0
        %2025 = vmatprep.subr.bf16.mxu0 0
        %2026 = vmatpush1.bf16.msra.mxu0 0
        %2027 = vmatprep.subr.bf16.mxu0 0
        %2028 = vmatpush1.bf16.msra.mxu0 0
        %2029 = vmatprep.subr.bf16.mxu0 0
        %2030 = vmatpush1.bf16.msra.mxu0 0
        %2031 = vmatprep.subr.bf16.mxu0 0
        %2032 = vmatpush1.bf16.msra.mxu0 0
        %2033 = vmatprep.subr.bf16.mxu0 0
        %2034 = vmatpush1.bf16.msra.mxu0 0
        %2035 = vmatprep.subr.bf16.mxu0 0
        %2036 = vmatpush1.bf16.msra.mxu0 0
        %2037 = vmatprep.subr.bf16.mxu0 0
        %2038 = vmatpush1.bf16.msra.mxu0 0
        %2039 = vmatprep.mubr.bf16.mxu0 0
        %2040 = vmatmul.mubr.bf16.gmra.mrb[0].mxu0 %v2005
        %v2041 = vpop.f32.mrb[0].mxu0
        %v2042 = vadd.f32 %v1990, %v2041
        %v2043 = vpop.f32.mrb[0].mxu0
        %v2044 = vpop.f32.mrb[0].mxu0
        %v2045 = vadd.f32 %v1990, %v2044
        %v2046 = vpop.f32.mrb[0].mxu0
        %2047 = vdwg.mxu0
        %v2048 = vld [vmem:[%s836] sm:$0x1]
        %v2050 = vlaneseq
        %v2051 = vshrl.u32 %v2050, 7
        %v2052 = vsub.s32 0, %v2051
        %v2053 = vrot.slane %v2048, %v2052
        %2054 = vset.pattern.permute.xlu0 0
        %2055 = vperm.xlu0 %2054, %v2053
        %v2056 = vpop.permute.xlu0 %2055
        %v2058 = vmul.f32 %v2056, %v2042
        %v2059 = vmul.f32 %v2056, %v2045
        %v2060 = vadd.f32 %v933, %v2058
        %v2061 = vadd.f32 %v934, %v2059
        %v2062 = vld [vmem:[%s839] sm:$0x1]
        %v2063 = vld [vmem:[%s842] sm:$0x1]
        %v2064 = vsel %vm937, %v2060, 0.0
        %2065 = vadd.xlane.f32.xlu0 %v2064
        %v2066 = vpop.xlane.xlu0 %2065
        %v2067 = vsel %vm937, %v2061, 0.0
        %2068 = vadd.xlane.f32.xlu0 %v2067
        %v2069 = vpop.xlane.xlu0 %2068
        %v2070 = vmul.f32 %v2066, %v944
        %v2071 = vmul.f32 %v2069, %v944
        %v2072 = vsub.f32 %v2060, %v2070
        %v2073 = vsub.f32 %v2061, %v2071
        %v2074 = vmul.f32 %v2072, %v2072
        %v2075 = vmul.f32 %v2073, %v2073
        %v2076 = vsel %vm937, %v2074, 0.0
        %2077 = vadd.xlane.f32.xlu0 %v2076
        %v2078 = vpop.xlane.xlu0 %2077
        %v2079 = vsel %vm937, %v2075, 0.0
        %2080 = vadd.xlane.f32.xlu0 %v2079
        %v2081 = vpop.xlane.xlu0 %2080
        %v2082 = vmul.f32 %v2078, %v944
        %v2083 = vmul.f32 %v2081, %v944
        %v2084 = vadd.f32 %v2082, 1e-05
        %v2085 = vadd.f32 %v2083, 1e-05
        %v2086 = vrsqrt.pop %v2084
        %v2087 = vrsqrt.pop %v2085
        %v2088 = vmul.f32 %v2072, %v2086
        %v2089 = vmul.f32 %v2073, %v2087
        %v2091 = vlaneseq
        %v2092 = vshrl.u32 %v2091, 7
        %v2093 = vsub.s32 0, %v2092
        %v2094 = vrot.slane %v2062, %v2093
        %v2096 = vmul.f32 %v2088, %v2094
        %v2097 = vmul.f32 %v2089, %v2094
        %v2099 = vlaneseq
        %v2100 = vshrl.u32 %v2099, 7
        %v2101 = vsub.s32 0, %v2100
        %v2102 = vrot.slane %v2063, %v2101
        %v2104 = vadd.f32 %v2096, %v2102
        %v2105 = vadd.f32 %v2097, %v2102
        %v2106 = vpack.c.bf16 %v2105, %v2104
        %v2107 = vld [vmem:[%s847] sm:$0xf]
        %v2108 = vld [vmem:[%s847 + $0x4] sm:$0xf]
        %v2109 = vld [vmem:[%s847 + $0x8] sm:$0xf]
        %v2110 = vld [vmem:[%s847 + $0xc] sm:$0xf]
        %v2111 = vld [vmem:[%s850] sm:$0x1]
        %v2113 = vlaneseq
        %v2114 = vshrl.u32 %v2113, 7
        %v2115 = vsub.s32 0, %v2114
        %v2116 = vrot.slane %v2111, %v2115
        %v2122 = vunpack.c.l.b16 %v2107
        %v2123 = vunpack.c.l.b16 %v2108
        %v2124 = vunpack.c.l.b16 %v2109
        %v2125 = vunpack.c.l.b16 %v2110
        %v2126 = vpack.c.b16 %v2123, %v2122
        %v2127 = vpack.c.b16 %v2125, %v2124
        %v2131 = vsel %vm937, %v2106, 0
        %2133 = vmatprep.subr.bf16.mxu0 0
        %2134 = vmatpush1.bf16.msra.mxu0 %v2126
        %2135 = vmatprep.subr.bf16.mxu0 0
        %2136 = vmatpush1.bf16.msra.mxu0 %v2127
        %2137 = vmatprep.subr.bf16.mxu0 0
        %2138 = vmatpush1.bf16.msra.mxu0 0
        %2139 = vmatprep.subr.bf16.mxu0 0
        %2140 = vmatpush1.bf16.msra.mxu0 0
        %2141 = vmatprep.subr.bf16.mxu0 0
        %2142 = vmatpush1.bf16.msra.mxu0 0
        %2143 = vmatprep.subr.bf16.mxu0 0
        %2144 = vmatpush1.bf16.msra.mxu0 0
        %2145 = vmatprep.subr.bf16.mxu0 0
        %2146 = vmatpush1.bf16.msra.mxu0 0
        %2147 = vmatprep.subr.bf16.mxu0 0
        %2148 = vmatpush1.bf16.msra.mxu0 0
        %2149 = vmatprep.subr.bf16.mxu0 0
        %2150 = vmatpush1.bf16.msra.mxu0 0
        %2151 = vmatprep.subr.bf16.mxu0 0
        %2152 = vmatpush1.bf16.msra.mxu0 0
        %2153 = vmatprep.subr.bf16.mxu0 0
        %2154 = vmatpush1.bf16.msra.mxu0 0
        %2155 = vmatprep.subr.bf16.mxu0 0
        %2156 = vmatpush1.bf16.msra.mxu0 0
        %2157 = vmatprep.subr.bf16.mxu0 0
        %2158 = vmatpush1.bf16.msra.mxu0 0
        %2159 = vmatprep.subr.bf16.mxu0 0
        %2160 = vmatpush1.bf16.msra.mxu0 0
        %2161 = vmatprep.subr.bf16.mxu0 0
        %2162 = vmatpush1.bf16.msra.mxu0 0
        %2163 = vmatprep.subr.bf16.mxu0 0
        %2164 = vmatpush1.bf16.msra.mxu0 0
        %2165 = vmatprep.mubr.bf16.mxu0 0
        %2166 = vmatmul.mubr.bf16.gmra.mrb[0].mxu0 %v2131
        %v2167 = vpop.f32.mrb[0].mxu0
        %v2168 = vadd.f32 %v2116, %v2167
        %v2169 = vpop.f32.mrb[0].mxu0
        %v2170 = vpop.f32.mrb[0].mxu0
        %v2171 = vadd.f32 %v2116, %v2170
        %v2172 = vpop.f32.mrb[0].mxu0
        %2173 = vdwg.mxu0
        %v2174 = vmul.f32 %v2168, 0.5
        %v2175 = vmul.f32 %v2171, 0.5
        %v2176 = vmul.f32 %v2168, 0.70710677
        %v2177 = vmul.f32 %v2171, 0.70710677
        %vm2178 = vcmp.lt.f32.partialorder %v2176, 0.0
        %vm2179 = vcmp.lt.f32.partialorder %v2177, 0.0
        %v2180 = vsel %vm2178, -1.0, 1.0
        %v2181 = vsel %vm2179, -1.0, 1.0
        %v2182 = vand.u32 2147483647, %v2176
        %v2183 = vand.u32 2147483647, %v2177
        %v2184 = vmul.f32 %v2182, 0.3275911
        %v2185 = vmul.f32 %v2183, 0.3275911
        %v2186 = vadd.f32 %v2184, 1.0
        %v2187 = vadd.f32 %v2185, 1.0
        %v2188 = vrcp.pop %v2186
        %v2189 = vmul.f32 1.0, %v2188
        %v2190 = vrcp.pop %v2187
        %v2191 = vmul.f32 1.0, %v2190
        %v2192 = vmul.f32 %v2189, 1.0614054
        %v2193 = vmul.f32 %v2191, 1.0614054
        %v2194 = vadd.f32 %v2192, -1.4531521
        %v2195 = vadd.f32 %v2193, -1.4531521
        %v2196 = vmul.f32 %v2194, %v2189
        %v2197 = vmul.f32 %v2195, %v2191
        %v2198 = vadd.f32 %v2196, 1.4214138
        %v2199 = vadd.f32 %v2197, 1.4214138
        %v2200 = vmul.f32 %v2198, %v2189
        %v2201 = vmul.f32 %v2199, %v2191
        %v2202 = vadd.f32 %v2200, -0.28449672
        %v2203 = vadd.f32 %v2201, -0.28449672
        %v2204 = vmul.f32 %v2202, %v2189
        %v2205 = vmul.f32 %v2203, %v2191
        %v2206 = vadd.f32 %v2204, 0.2548296
        %v2207 = vadd.f32 %v2205, 0.2548296
        %v2208 = vmul.f32 %v2206, %v2189
        %v2209 = vmul.f32 %v2207, %v2191
        %v2210 = vsub.f32 0.0, %v2182
        %v2211 = vsub.f32 0.0, %v2183
        %v2212 = vmul.f32 %v2210, %v2182
        %v2213 = vmul.f32 %v2211, %v2183
        %v2214 = vmul.f32 %v2212, 1.442695
        %v2215 = vpow.pop %v2214
        %v2216 = vmul.f32 %v2213, 1.442695
        %v2217 = vpow.pop %v2216
        %v2218 = vmul.f32 %v2208, %v2215
        %v2219 = vmul.f32 %v2209, %v2217
        %v2220 = vsub.f32 1.0, %v2218
        %v2221 = vsub.f32 1.0, %v2219
        %v2222 = vmul.f32 %v2180, %v2220
        %v2223 = vmul.f32 %v2181, %v2221
        %v2224 = vadd.f32 %v2222, 1.0
        %v2225 = vadd.f32 %v2223, 1.0
        %v2226 = vmul.f32 %v2174, %v2224
        %v2227 = vmul.f32 %v2175, %v2225
        %v2228 = vpack.c.bf16 %v2227, %v2226
        %v2229 = vld [vmem:[%s855] sm:$0xf]
        %v2230 = vld [vmem:[%s855 + $0x4] sm:$0xf]
        %v2231 = vld [vmem:[%s855 + $0x8] sm:$0xf]
        %v2232 = vld [vmem:[%s855 + $0xc] sm:$0xf]
        %v2233 = vld [vmem:[%s855 + $0x10] sm:$0xf]
        %v2234 = vld [vmem:[%s855 + $0x14] sm:$0xf]
        %v2235 = vld [vmem:[%s855 + $0x18] sm:$0xf]
        %v2236 = vld [vmem:[%s855 + $0x1c] sm:$0xf]
        %v2237 = vld [vmem:[%s858] sm:$0x1]
        %v2239 = vlaneseq
        %v2240 = vshrl.u32 %v2239, 7
        %v2241 = vsub.s32 0, %v2240
        %v2242 = vrot.slane %v2237, %v2241
        %v2252 = vunpack.c.l.b16 %v2229
        %v2253 = vunpack.c.l.b16 %v2230
        %v2254 = vunpack.c.l.b16 %v2231
        %v2255 = vunpack.c.l.b16 %v2232
        %v2256 = vunpack.c.l.b16 %v2233
        %v2257 = vunpack.c.l.b16 %v2234
        %v2258 = vunpack.c.l.b16 %v2235
        %v2259 = vunpack.c.l.b16 %v2236
        %v2260 = vpack.c.b16 %v2253, %v2252
        %v2261 = vpack.c.b16 %v2255, %v2254
        %v2262 = vpack.c.b16 %v2257, %v2256
        %v2263 = vpack.c.b16 %v2259, %v2258
        %vm2268 = vcmask 523264
        %v2270 = vsel %vm2268, %v2228, 0
        %2272 = vmatprep.subr.bf16.mxu0 0
        %2273 = vmatpush1.bf16.msra.mxu0 %v2260
        %2274 = vmatprep.subr.bf16.mxu0 0
        %2275 = vmatpush1.bf16.msra.mxu0 %v2261
        %2276 = vmatprep.subr.bf16.mxu0 0
        %2277 = vmatpush1.bf16.msra.mxu0 %v2262
        %2278 = vmatprep.subr.bf16.mxu0 0
        %2279 = vmatpush1.bf16.msra.mxu0 %v2263
        %2280 = vmatprep.subr.bf16.mxu0 0
        %2281 = vmatpush1.bf16.msra.mxu0 0
        %2282 = vmatprep.subr.bf16.mxu0 0
        %2283 = vmatpush1.bf16.msra.mxu0 0
        %2284 = vmatprep.subr.bf16.mxu0 0
        %2285 = vmatpush1.bf16.msra.mxu0 0
        %2286 = vmatprep.subr.bf16.mxu0 0
        %2287 = vmatpush1.bf16.msra.mxu0 0
        %2288 = vmatprep.subr.bf16.mxu0 0
        %2289 = vmatpush1.bf16.msra.mxu0 0
        %2290 = vmatprep.subr.bf16.mxu0 0
        %2291 = vmatpush1.bf16.msra.mxu0 0
        %2292 = vmatprep.subr.bf16.mxu0 0
        %2293 = vmatpush1.bf16.msra.mxu0 0
        %2294 = vmatprep.subr.bf16.mxu0 0
        %2295 = vmatpush1.bf16.msra.mxu0 0
        %2296 = vmatprep.subr.bf16.mxu0 0
        %2297 = vmatpush1.bf16.msra.mxu0 0
        %2298 = vmatprep.subr.bf16.mxu0 0
        %2299 = vmatpush1.bf16.msra.mxu0 0
        %2300 = vmatprep.subr.bf16.mxu0 0
        %2301 = vmatpush1.bf16.msra.mxu0 0
        %2302 = vmatprep.subr.bf16.mxu0 0
        %2303 = vmatpush1.bf16.msra.mxu0 0
        %2304 = vmatprep.mubr.bf16.mxu0 0
        %2305 = vmatmul.mubr.bf16.gmra.mrb[0].mxu0 %v2270
        %v2306 = vpop.f32.mrb[0].mxu0
        %v2307 = vadd.f32 %v2242, %v2306
        %v2308 = vpop.f32.mrb[0].mxu0
        %v2309 = vpop.f32.mrb[0].mxu0
        %v2310 = vadd.f32 %v2242, %v2309
        %v2311 = vpop.f32.mrb[0].mxu0
        %2312 = vdwg.mxu0
        %v2313 = vld [vmem:[%s861] sm:$0x1]
        %v2315 = vlaneseq
        %v2316 = vshrl.u32 %v2315, 7
        %v2317 = vsub.s32 0, %v2316
        %v2318 = vrot.slane %v2313, %v2317
        %2319 = vset.pattern.permute.xlu0 0
        %2320 = vperm.xlu0 %2319, %v2318
        %v2321 = vpop.permute.xlu0 %2320
        %v2323 = vmul.f32 %v2321, %v2307
        %v2324 = vmul.f32 %v2321, %v2310
        %v2325 = vadd.f32 %v2060, %v2323
        %v2326 = vadd.f32 %v2061, %v2324
        %2327 = vst.msk [vmem:[#allocation2] sm:$0xff] %vm937, %v2325
        %2328 = vst.msk [vmem:[#allocation2 + $0x8] sm:$0xff] %vm937, %v2326
        %p2329 = scmp.eq.s32.totalorder %s39, 1
        // Predicated region
        $region105: #{tpu_custom_call.1} parent=99 // pred_check
          %p2330 = pneg %p2329
        $region106: #{tpu_custom_call.1} parent=99 // pred_check_branch
          %2332 = sbr.rel (%p2330) target = $region108
        $region107: #{tpu_custom_call.1} parent=99 // pred_region
          %v2333 = vlaneseq
          %v2334 = vshrl.u32 %v2333, 7
          %vm2335 = vcmp.lt.s32.totalorder %v2334, 7
          %v2336 = vsel %vm2335, 1, 0
          %v2337 = vcvt.s32.f32 %v2336
          %v2338 = vmul.f32 %v2325, %v2337
          %v2339 = vmul.f32 %v2326, %v2337
          %v2340 = vsel %vm937, %v2338, 0.0
          %v2341 = vrot.slane %v2340, 4
          %v2342 = vadd.f32 %v2340, %v2341
          %v2343 = vrot.slane %v2342, 2
          %v2344 = vadd.f32 %v2342, %v2343
          %v2345 = vrot.slane %v2344, 1
          %v2346 = vadd.f32 %v2344, %v2345
          %v2347 = vsel %vm937, %v2339, 0.0
          %v2348 = vrot.slane %v2347, 4
          %v2349 = vadd.f32 %v2347, %v2348
          %v2350 = vrot.slane %v2349, 2
          %v2351 = vadd.f32 %v2349, %v2350
          %v2352 = vrot.slane %v2351, 1
          %v2353 = vadd.f32 %v2351, %v2352
          %v2354 = vmul.f32 %v2346, 0.14285715
          %v2355 = vmul.f32 %v2353, 0.14285715
          %v2356 = vpack.c.bf16 %v2354, %v2354
          %v2357 = vpack.c.bf16 %v2355, %v2355
          %v2358 = vld [vmem:[%s18] sm:$0xf]
          %v2359 = vld [vmem:[%s18 + $0x4] sm:$0xf]
          %v2360 = vld [vmem:[%s18 + $0x8] sm:$0xf]
          %v2361 = vld [vmem:[%s18 + $0xc] sm:$0xf]
          %v2362 = vld [vmem:[%s19] sm:$0x1]
          %v2364 = vlaneseq
          %v2365 = vshrl.u32 %v2364, 7
          %v2366 = vsub.s32 0, %v2365
          %v2367 = vrot.slane %v2362, %v2366
          %v2371 = vunpack.c.l.b16 %v2356
          %v2372 = vunpack.c.l.b16 %v2357
          %vm2373 = vcmask 1041409
          %v2374 = vsel %vm2373, %v2372, %v2371
          %v2375 = vpack.c.b16 %v2374, %v2374
          %v2380 = vunpack.c.l.b16 %v2358
          %v2381 = vunpack.c.l.b16 %v2359
          %v2382 = vunpack.c.l.b16 %v2360
          %v2383 = vunpack.c.l.b16 %v2361
          %v2384 = vpack.c.b16 %v2381, %v2380
          %v2385 = vpack.c.b16 %v2383, %v2382
          %v2389 = vsel %vm937, %v2375, 0
          %2391 = vmatprep.subr.bf16.mxu0 0
          %2392 = vmatpush1.bf16.msra.mxu0 %v2384
          %2393 = vmatprep.subr.bf16.mxu0 0
          %2394 = vmatpush1.bf16.msra.mxu0 %v2385
          %2395 = vmatprep.subr.bf16.mxu0 0
          %2396 = vmatpush1.bf16.msra.mxu0 0
          %2397 = vmatprep.subr.bf16.mxu0 0
          %2398 = vmatpush1.bf16.msra.mxu0 0
          %2399 = vmatprep.subr.bf16.mxu0 0
          %2400 = vmatpush1.bf16.msra.mxu0 0
          %2401 = vmatprep.subr.bf16.mxu0 0
          %2402 = vmatpush1.bf16.msra.mxu0 0
          %2403 = vmatprep.subr.bf16.mxu0 0
          %2404 = vmatpush1.bf16.msra.mxu0 0
          %2405 = vmatprep.subr.bf16.mxu0 0
          %2406 = vmatpush1.bf16.msra.mxu0 0
          %2407 = vmatprep.subr.bf16.mxu0 0
          %2408 = vmatpush1.bf16.msra.mxu0 0
          %2409 = vmatprep.subr.bf16.mxu0 0
          %2410 = vmatpush1.bf16.msra.mxu0 0
          %2411 = vmatprep.subr.bf16.mxu0 0
          %2412 = vmatpush1.bf16.msra.mxu0 0
          %2413 = vmatprep.subr.bf16.mxu0 0
          %2414 = vmatpush1.bf16.msra.mxu0 0
          %2415 = vmatprep.subr.bf16.mxu0 0
          %2416 = vmatpush1.bf16.msra.mxu0 0
          %2417 = vmatprep.subr.bf16.mxu0 0
          %2418 = vmatpush1.bf16.msra.mxu0 0
          %2419 = vmatprep.subr.bf16.mxu0 0
          %2420 = vmatpush1.bf16.msra.mxu0 0
          %2421 = vmatprep.subr.bf16.mxu0 0
          %2422 = vmatpush1.bf16.msra.mxu0 0
          %2423 = vmatprep.mubr.bf16.mxu0 0
          %2424 = vmatmul.mubr.bf16.gmra.mrb[0].mxu0 %v2389
          %v2425 = vpop.f32.mrb[0].mxu0
          %v2426 = vadd.f32 %v2367, %v2425
          %v2427 = vpop.f32.mrb[0].mxu0
          %v2428 = vpop.f32.mrb[0].mxu0
          %v2429 = vpop.f32.mrb[0].mxu0
          %2430 = vdwg.mxu0
          %vm2431 = vcmask 58368
          %2432 = vst.msk [vmem:[%s805] sm:$0x3] %vm2431, %v2426
        $region108: #{tpu_custom_call.1} parent=99 // pred_fallthru
          _
        %s2433 = sand.u32 %s549, 1
        %s2434 = scalar_lea.sflag [#allocation4], %s2433
        %s2435 = sand.u32 %s549, 1
        %s2436 = smul.addr %s2435, 2
        %s2437 = scalar_lea.vmem [#allocation3], %s2436
        // Predicated region
        $region109: #{tpu_custom_call.1} parent=99 // pred_check
          %p2438 = pneg %p559
        $region110: #{tpu_custom_call.1} parent=99 // pred_check_branch
          %2440 = sbr.rel (%p2438) target = $region112
        $region111: #{tpu_custom_call.1} parent=99 // pred_region
          %s2442 = ssub.s32 32, 32
          %2443 = vsyncadd %s2434, %s2442
          %s2444 = smul.addr %s38, 32
          %s2445 = scalar_lea.hbm %s20, %s2444
          %s2447 = sshll.u32 %s2437, 4
          %s2448 = int_to_ptr.vmem [resolvable:$true] %s2447
          %2450 = dma.vmem_to_hbm [thread:$0]  %s2448, 32, %s2445, %s2434
        $region112: #{tpu_custom_call.1} parent=99 // pred_fallthru
          _
      $region100: #{tpu_custom_call.1} parent=5 // pred_fallthru
        _
      %p2451 = scmp.le.s32.totalorder 2, %s29
      // Predicated region
      $region113: #{tpu_custom_call.1} parent=5 // pred_check
        %p2452 = pneg %p2451
      $region114: #{tpu_custom_call.1} parent=5 // pred_check_branch
        %2454 = sbr.rel (%p2452) target = $region116
      $region115: #{tpu_custom_call.1} parent=5 // pred_region
        %s2455 = ssub.s32 %s29, 2
        // Predicated region
        $region117: #{tpu_custom_call.1} parent=115 // pred_check
          %p2456 = pneg %p565
        $region118: #{tpu_custom_call.1} parent=115 // pred_check_branch
          %2458 = sbr.rel (%p2456) target = $region120
        $region119: #{tpu_custom_call.1} parent=115 // pred_region
          %s2459 = sand.u32 %s550, 1
          %s2460 = scalar_lea.sflag [#allocation4], %s2459
          %s2461 = sand.u32 %s550, 1
          %s2462 = smul.addr %s2461, 2
          %s2463 = scalar_lea.vmem [#allocation3], %s2462
          %2464 = dma.done %s2460, 32
        $region120: #{tpu_custom_call.1} parent=115 // pred_fallthru
          _
      $region116: #{tpu_custom_call.1} parent=5 // pred_fallthru
        _
    $region6: #{tpu_custom_call.1} parent=1 // loop_footer
      %s33 = sadd.s32 1, %s29
    $region7: #{tpu_custom_call.1} parent=1 // loop_footer_branch
      %28 = sbr.rel target = $region3
    $region8: #{tpu_custom_call.1} parent=1 // loop_exit
      _
    %2465 = vsyncpa [#allocation4], 1
    %s2466 = scalar_lea.sflag [#allocation4], 1
    %2467 = vsyncpa %s2466, 1

</llo_original>
